<compile_context>
chip_gen: v6e
topology: v6e:2x2x1
jax: 0.10.0
libtpu: 0.0.40
codegen_flags: <defaults>
</compile_context>

<pallas_src>
import functools
import math

import jax
import jax.numpy as jnp
from jax.experimental import pallas as pl
from jax.experimental.pallas import tpu as pltpu


# ------------------------- in-kernel helpers -------------------------

def _mha_heads(q, k, v, mask_add, nhead, scale):
    """q: [Nq, D], k/v: [Nk, D] (already projected). Returns concat of heads [Nq, D]."""
    D = q.shape[-1]
    dh = D // nhead
    q = q * scale                              # scale once for all heads
    outs = []
    for h in range(nhead):                     # static unrolled loop (nhead small)
        lo = h * dh
        qh = q[:, lo:lo + dh]
        kh = k[:, lo:lo + dh]
        vh = v[:, lo:lo + dh]
        # q @ k^T via dot_general contracting the dh axes: MXU consumes the
        # transposed operand directly (no per-step XLU transpose).
        s = jax.lax.dot_general(qh, kh, (((1,), (1,)), ((), ())),
                                preferred_element_type=jnp.float32)   # [Nq, Nk]
        if mask_add is not None:
            s = s + mask_add
        s = s - jnp.max(s, axis=-1, keepdims=True)
        p = jnp.exp(s)
        p = p * pl.reciprocal(jnp.sum(p, axis=-1, keepdims=True), approx=True)
        outs.append(jnp.dot(p, vh, preferred_element_type=jnp.float32))
    return jnp.concatenate(outs, axis=-1)       # [Nq, D]


def _add_layernorm(x, y, g, b):
    # LayerNorm(x + y), eps = 1e-5 (PyTorch default), f32 math.
    z = x + y
    mu = jnp.mean(z, axis=-1, keepdims=True)
    var = jnp.mean(jnp.square(z - mu), axis=-1, keepdims=True)
    return (z - mu) * jax.lax.rsqrt(var + 1e-5) * g + b


# ------------------------- fused decoder-layer kernel -------------------------

def _decoder_layer_kernel(*refs, nhead, scale, has_mask):
    refs = list(refs)
    tgt_ref, mem_ref, qpos_ref, pos_ref = refs[:4]
    idx = 4
    mask_ref = None
    if has_mask:
        mask_ref = refs[idx]
        idx += 1
    (wqk_s_ref, bqk_s_ref, wv_s_ref, bv_s_ref, wo_s_ref, bo_s_ref,
     wq_c_ref, bq_c_ref, wk_c_ref, bk_c_ref, wv_c_ref, bv_c_ref,
     wo_c_ref, bo_c_ref,
     w1_ref, b1_ref, w2_ref, b2_ref,
     g1_ref, be1_ref, g2_ref, be2_ref, g3_ref, be3_ref,
     out_ref) = refs[idx:]

    D = tgt_ref.shape[-1]

    tgt = tgt_ref[0]            # [N, D]
    mem = mem_ref[0]            # [HW, D]
    qpos = qpos_ref[0]          # [N, D]
    pos = pos_ref[0]            # [HW, D]
    mask_add = mask_ref[0] if has_mask else None     # [1, HW] or skipped

    # ---- self-attention: query == key == tgt + qpos, value == tgt (no mask) ----
    q_in = tgt + qpos
    qk = jnp.dot(q_in, wqk_s_ref[...],
                 preferred_element_type=jnp.float32) + bqk_s_ref[...]   # [N, 2D]
    v_s = jnp.dot(tgt, wv_s_ref[...],
                  preferred_element_type=jnp.float32) + bv_s_ref[...]   # [N, D]
    sa = _mha_heads(qk[:, :D], qk[:, D:], v_s, None, nhead, scale)
    sa = jnp.dot(sa, wo_s_ref[...],
                 preferred_element_type=jnp.float32) + bo_s_ref[...]
    t1 = _add_layernorm(tgt, sa, g1_ref[...], be1_ref[...])

    # ---- cross-attention: key-padding mask on memory ----
    qc = jnp.dot(t1 + qpos, wq_c_ref[...],
                 preferred_element_type=jnp.float32) + bq_c_ref[...]
    kc = jnp.dot(mem + pos, wk_c_ref[...],
                 preferred_element_type=jnp.float32) + bk_c_ref[...]
    vc = jnp.dot(mem, wv_c_ref[...],
                 preferred_element_type=jnp.float32) + bv_c_ref[...]
    ca = _mha_heads(qc, kc, vc, mask_add, nhead, scale)
    ca = jnp.dot(ca, wo_c_ref[...],
                 preferred_element_type=jnp.float32) + bo_c_ref[...]
    t2 = _add_layernorm(t1, ca, g2_ref[...], be2_ref[...])

    # ---- FFN: Linear -> ReLU -> (Dropout=id) -> Linear ----
    h = jnp.maximum(jnp.dot(t2, w1_ref[...],
                            preferred_element_type=jnp.float32) + b1_ref[...], 0.0)
    f = jnp.dot(h, w2_ref[...],
                preferred_element_type=jnp.float32) + b2_ref[...]
    out_ref[0] = _add_layernorm(t2, f, g3_ref[...], be3_ref[...]).astype(out_ref.dtype)


# ------------------------- wrapper -------------------------

def transformer_decoder_layer(tgt, memory, query_pos, pos, params, nhead,
                              padding_mask=None):
    """tgt/query_pos: [N,B,D]; memory/pos: [HW,B,D]; padding_mask: [B,HW] (True=pad)."""
    N, B, D = tgt.shape
    HW = memory.shape[0]
    scale = 1.0 / math.sqrt(D // nhead)

    # One-time batch-first layout for the per-batch grid (tiny copies).
    tgt_b = jnp.transpose(tgt, (1, 0, 2))
    mem_b = jnp.transpose(memory, (1, 0, 2))
    qpos_b = jnp.transpose(query_pos, (1, 0, 2))
    pos_b = jnp.transpose(pos, (1, 0, 2))

    has_mask = padding_mask is not None

    def batch_spec(seq, d):
        return pl.BlockSpec((1, seq, d), lambda b: (b, 0, 0))

    def full_spec(a):
        nd = a.ndim
        return pl.BlockSpec(a.shape, lambda b, _nd=nd: (0,) * _nd)

    data_inputs = [tgt_b, mem_b, qpos_b, pos_b]
    data_specs = [batch_spec(N, D), batch_spec(HW, D),
                  batch_spec(N, D), batch_spec(HW, D)]
    if has_mask:
        mask_add = jnp.where(padding_mask, -1e9, 0.0).astype(jnp.float32)
        data_inputs.append(mask_add.reshape(B, 1, HW))
        data_specs.append(batch_spec(1, HW))

    weights = [
        params["self_wqk"], params["self_bqk"], params["self_wv"], params["self_bv"],
        params["self_wo"], params["self_bo"],
        params["cross_wq"], params["cross_bq"], params["cross_wk"], params["cross_bk"],
        params["cross_wv"], params["cross_bv"], params["cross_wo"], params["cross_bo"],
        params["ffn_w1"], params["ffn_b1"], params["ffn_w2"], params["ffn_b2"],
        params["norm1_g"], params["norm1_b"], params["norm2_g"], params["norm2_b"],
        params["norm3_g"], params["norm3_b"],
    ]

    out = pl.pallas_call(
        functools.partial(_decoder_layer_kernel, nhead=nhead, scale=scale,
                          has_mask=has_mask),
        grid=(B,),
        in_specs=data_specs + [full_spec(w) for w in weights],
        out_specs=batch_spec(N, D),
        out_shape=jax.ShapeDtypeStruct((B, N, D), jnp.float32),
        compiler_params=pltpu.CompilerParams(
            dimension_semantics=("parallel",)),
    )(*data_inputs, *weights)

    return jnp.transpose(out, (1, 0, 2))    # back to [N, B, D]


# ------------------------- params -------------------------

def init_params(key, d_model, dim_ff):
    """All weights stored pre-transposed as [Din, Dout] (== PyTorch weight.T);
    biases / LN params stored as [1, Dout] so they are kernel-ready."""
    D, F = d_model, dim_ff
    k_sqk, k_sv, k_so, k_cq, k_ck, k_cv, k_co, k_f = jax.random.split(key, 8)
    k_f1, k_f2 = jax.random.split(k_f)

    def w(k, din, dout):
        return 0.02 * jax.random.normal(k, (din, dout), jnp.float32)

    zeros = lambda n: jnp.zeros((1, n), jnp.float32)
    ones = lambda n: jnp.ones((1, n), jnp.float32)

    return {
        # self-attention: fused Q/K projection (query == key) + separate V
        "self_wqk": w(k_sqk, D, 2 * D), "self_bqk": zeros(2 * D),
        "self_wv": w(k_sv, D, D),       "self_bv": zeros(D),
        "self_wo": w(k_so, D, D),       "self_bo": zeros(D),
        # cross-attention
        "cross_wq": w(k_cq, D, D), "cross_bq": zeros(D),
        "cross_wk": w(k_ck, D, D), "cross_bk": zeros(D),
        "cross_wv": w(k_cv, D, D), "cross_bv": zeros(D),
        "cross_wo": w(k_co, D, D), "cross_bo": zeros(D),
        # FFN
        "ffn_w1": w(k_f1, D, F), "ffn_b1": zeros(F),
        "ffn_w2": w(k_f2, F, D), "ffn_b2": zeros(D),
        # LayerNorms
        "norm1_g": ones(D), "norm1_b": zeros(D),
        "norm2_g": ones(D), "norm2_b": zeros(D),
        "norm3_g": ones(D), "norm3_b": zeros(D),
    }


if __name__ == "__main__":
    d_model, nhead, dim_ff = 32, 4, 64
    N, HW, B = 8, 16, 2          # queries, flattened spatial, batch

    key = jax.random.PRNGKey(0)
    kp, k0, k1, k2, k3 = jax.random.split(key, 5)
    params = init_params(kp, d_model, dim_ff)

    tgt = jax.random.normal(k0, (N, B, d_model), jnp.float32)
    memory = jax.random.normal(k1, (HW, B, d_model), jnp.float32)
    query_pos = jax.random.normal(k2, (N, B, d_model), jnp.float32)
    pos = jax.random.normal(k3, (HW, B, d_model), jnp.float32)
    # last 3 spatial positions are padding for every batch element
    padding_mask = jnp.zeros((B, HW), dtype=bool).at[:, HW - 3:].set(True)

    fwd = jax.jit(functools.partial(transformer_decoder_layer, nhead=nhead))
    out = fwd(tgt, memory, query_pos, pos, params, padding_mask=padding_mask)
    out = jax.block_until_ready(out)
    assert out.shape == (N, B, d_model)
    assert bool(jnp.all(jnp.isfinite(out)))
    print("KERNEL_OK")
</pallas_src>

<mosaic_0001>
module attributes {stable_mosaic.version = 11 : i64} {
  func.func @_decoder_layer_kernel(%arg0: i32, %arg1: memref<1x8x32xf32, #tpu.memory_space<vmem>>, %arg2: memref<1x16x32xf32, #tpu.memory_space<vmem>>, %arg3: memref<1x8x32xf32, #tpu.memory_space<vmem>>, %arg4: memref<1x16x32xf32, #tpu.memory_space<vmem>>, %arg5: memref<1x1x16xf32, #tpu.memory_space<vmem>>, %arg6: memref<32x64xf32, #tpu.memory_space<vmem>>, %arg7: memref<1x64xf32, #tpu.memory_space<vmem>>, %arg8: memref<32x32xf32, #tpu.memory_space<vmem>>, %arg9: memref<1x32xf32, #tpu.memory_space<vmem>>, %arg10: memref<32x32xf32, #tpu.memory_space<vmem>>, %arg11: memref<1x32xf32, #tpu.memory_space<vmem>>, %arg12: memref<32x32xf32, #tpu.memory_space<vmem>>, %arg13: memref<1x32xf32, #tpu.memory_space<vmem>>, %arg14: memref<32x32xf32, #tpu.memory_space<vmem>>, %arg15: memref<1x32xf32, #tpu.memory_space<vmem>>, %arg16: memref<32x32xf32, #tpu.memory_space<vmem>>, %arg17: memref<1x32xf32, #tpu.memory_space<vmem>>, %arg18: memref<32x32xf32, #tpu.memory_space<vmem>>, %arg19: memref<1x32xf32, #tpu.memory_space<vmem>>, %arg20: memref<32x64xf32, #tpu.memory_space<vmem>>, %arg21: memref<1x64xf32, #tpu.memory_space<vmem>>, %arg22: memref<64x32xf32, #tpu.memory_space<vmem>>, %arg23: memref<1x32xf32, #tpu.memory_space<vmem>>, %arg24: memref<1x32xf32, #tpu.memory_space<vmem>>, %arg25: memref<1x32xf32, #tpu.memory_space<vmem>>, %arg26: memref<1x32xf32, #tpu.memory_space<vmem>>, %arg27: memref<1x32xf32, #tpu.memory_space<vmem>>, %arg28: memref<1x32xf32, #tpu.memory_space<vmem>>, %arg29: memref<1x32xf32, #tpu.memory_space<vmem>>, %arg30: memref<1x8x32xf32, #tpu.memory_space<vmem>>) attributes {dimension_semantics = [#tpu.dimension_semantics<parallel>], iteration_bounds = array<i64: 2>, scalar_prefetch = 0 : i64, scratch_operands = 0 : i64, tpu.core_type = #tpu.core_type<tc>, window_params = [{transform_indices = @transform_0, window_bounds = array<i64: 1, 8, 32>}, {transform_indices = @transform_1, window_bounds = array<i64: 1, 16, 32>}, {transform_indices = @transform_2, window_bounds = array<i64: 1, 8, 32>}, {transform_indices = @transform_3, window_bounds = array<i64: 1, 16, 32>}, {transform_indices = @transform_4, window_bounds = array<i64: 1, 1, 16>}, {pipeline_mode = #tpu.pipeline_mode<synchronous>, transform_indices = @transform_5, window_bounds = array<i64: 32, 64>}, {pipeline_mode = #tpu.pipeline_mode<synchronous>, transform_indices = @transform_6, window_bounds = array<i64: 1, 64>}, {pipeline_mode = #tpu.pipeline_mode<synchronous>, transform_indices = @transform_7, window_bounds = array<i64: 32, 32>}, {pipeline_mode = #tpu.pipeline_mode<synchronous>, transform_indices = @transform_8, window_bounds = array<i64: 1, 32>}, {pipeline_mode = #tpu.pipeline_mode<synchronous>, transform_indices = @transform_9, window_bounds = array<i64: 32, 32>}, {pipeline_mode = #tpu.pipeline_mode<synchronous>, transform_indices = @transform_10, window_bounds = array<i64: 1, 32>}, {pipeline_mode = #tpu.pipeline_mode<synchronous>, transform_indices = @transform_11, window_bounds = array<i64: 32, 32>}, {pipeline_mode = #tpu.pipeline_mode<synchronous>, transform_indices = @transform_12, window_bounds = array<i64: 1, 32>}, {pipeline_mode = #tpu.pipeline_mode<synchronous>, transform_indices = @transform_13, window_bounds = array<i64: 32, 32>}, {pipeline_mode = #tpu.pipeline_mode<synchronous>, transform_indices = @transform_14, window_bounds = array<i64: 1, 32>}, {pipeline_mode = #tpu.pipeline_mode<synchronous>, transform_indices = @transform_15, window_bounds = array<i64: 32, 32>}, {pipeline_mode = #tpu.pipeline_mode<synchronous>, transform_indices = @transform_16, window_bounds = array<i64: 1, 32>}, {pipeline_mode = #tpu.pipeline_mode<synchronous>, transform_indices = @transform_17, window_bounds = array<i64: 32, 32>}, {pipeline_mode = #tpu.pipeline_mode<synchronous>, transform_indices = @transform_18, window_bounds = array<i64: 1, 32>}, {pipeline_mode = #tpu.pipeline_mode<synchronous>, transform_indices = @transform_19, window_bounds = array<i64: 32, 64>}, {pipeline_mode = #tpu.pipeline_mode<synchronous>, transform_indices = @transform_20, window_bounds = array<i64: 1, 64>}, {pipeline_mode = #tpu.pipeline_mode<synchronous>, transform_indices = @transform_21, window_bounds = array<i64: 64, 32>}, {pipeline_mode = #tpu.pipeline_mode<synchronous>, transform_indices = @transform_22, window_bounds = array<i64: 1, 32>}, {pipeline_mode = #tpu.pipeline_mode<synchronous>, transform_indices = @transform_23, window_bounds = array<i64: 1, 32>}, {pipeline_mode = #tpu.pipeline_mode<synchronous>, transform_indices = @transform_24, window_bounds = array<i64: 1, 32>}, {pipeline_mode = #tpu.pipeline_mode<synchronous>, transform_indices = @transform_25, window_bounds = array<i64: 1, 32>}, {pipeline_mode = #tpu.pipeline_mode<synchronous>, transform_indices = @transform_26, window_bounds = array<i64: 1, 32>}, {pipeline_mode = #tpu.pipeline_mode<synchronous>, transform_indices = @transform_27, window_bounds = array<i64: 1, 32>}, {pipeline_mode = #tpu.pipeline_mode<synchronous>, transform_indices = @transform_28, window_bounds = array<i64: 1, 32>}, {transform_indices = @transform_29, window_bounds = array<i64: 1, 8, 32>}]} {
    %c0 = arith.constant 0 : index
    %c0_0 = arith.constant 0 : index
    %c0_1 = arith.constant 0 : index
    %0 = vector.load %arg1[%c0, %c0_0, %c0_1] : memref<1x8x32xf32, #tpu.memory_space<vmem>>, vector<1x8x32xf32>
    %1 = vector.shape_cast %0 : vector<1x8x32xf32> to vector<8x32xf32>
    %c0_2 = arith.constant 0 : index
    %c0_3 = arith.constant 0 : index
    %c0_4 = arith.constant 0 : index
    %2 = vector.load %arg2[%c0_2, %c0_3, %c0_4] : memref<1x16x32xf32, #tpu.memory_space<vmem>>, vector<1x16x32xf32>
    %3 = vector.shape_cast %2 : vector<1x16x32xf32> to vector<16x32xf32>
    %c0_5 = arith.constant 0 : index
    %c0_6 = arith.constant 0 : index
    %c0_7 = arith.constant 0 : index
    %4 = vector.load %arg3[%c0_5, %c0_6, %c0_7] : memref<1x8x32xf32, #tpu.memory_space<vmem>>, vector<1x8x32xf32>
    %5 = vector.shape_cast %4 : vector<1x8x32xf32> to vector<8x32xf32>
    %c0_8 = arith.constant 0 : index
    %c0_9 = arith.constant 0 : index
    %c0_10 = arith.constant 0 : index
    %6 = vector.load %arg4[%c0_8, %c0_9, %c0_10] : memref<1x16x32xf32, #tpu.memory_space<vmem>>, vector<1x16x32xf32>
    %7 = vector.shape_cast %6 : vector<1x16x32xf32> to vector<16x32xf32>
    %c0_11 = arith.constant 0 : index
    %c0_12 = arith.constant 0 : index
    %c0_13 = arith.constant 0 : index
    %8 = vector.load %arg5[%c0_11, %c0_12, %c0_13] : memref<1x1x16xf32, #tpu.memory_space<vmem>>, vector<1x1x16xf32>
    %9 = vector.shape_cast %8 : vector<1x1x16xf32> to vector<1x16xf32>
    %10 = arith.addf %1, %5 : vector<8x32xf32>
    %c0_14 = arith.constant 0 : index
    %c0_15 = arith.constant 0 : index
    %11 = vector.load %arg6[%c0_14, %c0_15] : memref<32x64xf32, #tpu.memory_space<vmem>>, vector<32x64xf32>
    %cst = arith.constant dense<0.000000e+00> : vector<8x64xf32>
    %12 = tpu.matmul %10, %11, %cst {dimension_numbers = #tpu.dot_dimension_numbers<[1], [0], [0], [1], [0, 0, 1, 1], [], []>} : vector<8x32xf32>, vector<32x64xf32>, vector<8x64xf32> -> vector<8x64xf32>
    %c0_16 = arith.constant 0 : index
    %c0_17 = arith.constant 0 : index
    %13 = vector.load %arg7[%c0_16, %c0_17] : memref<1x64xf32, #tpu.memory_space<vmem>>, vector<1x64xf32>
    %14 = vector.broadcast %13 : vector<1x64xf32> to vector<8x64xf32>
    %15 = arith.addf %12, %14 : vector<8x64xf32>
    %c0_18 = arith.constant 0 : index
    %c0_19 = arith.constant 0 : index
    %16 = vector.load %arg8[%c0_18, %c0_19] : memref<32x32xf32, #tpu.memory_space<vmem>>, vector<32x32xf32>
    %cst_20 = arith.constant dense<0.000000e+00> : vector<8x32xf32>
    %17 = tpu.matmul %1, %16, %cst_20 {dimension_numbers = #tpu.dot_dimension_numbers<[1], [0], [0], [1], [0, 0, 1, 1], [], []>} : vector<8x32xf32>, vector<32x32xf32>, vector<8x32xf32> -> vector<8x32xf32>
    %c0_21 = arith.constant 0 : index
    %c0_22 = arith.constant 0 : index
    %18 = vector.load %arg9[%c0_21, %c0_22] : memref<1x32xf32, #tpu.memory_space<vmem>>, vector<1x32xf32>
    %19 = vector.broadcast %18 : vector<1x32xf32> to vector<8x32xf32>
    %20 = arith.addf %17, %19 : vector<8x32xf32>
    %21 = vector.extract_strided_slice %15 {offsets = [0, 0], sizes = [8, 32], strides = [1, 1]} : vector<8x64xf32> to vector<8x32xf32>
    %22 = vector.extract_strided_slice %15 {offsets = [0, 32], sizes = [8, 32], strides = [1, 1]} : vector<8x64xf32> to vector<8x32xf32>
    %cst_23 = arith.constant 0.353553385 : f32
    %23 = vector.broadcast %cst_23 : f32 to vector<8x32xf32>
    %24 = arith.mulf %21, %23 : vector<8x32xf32>
    %25 = vector.extract_strided_slice %24 {offsets = [0, 0], sizes = [8, 8], strides = [1, 1]} : vector<8x32xf32> to vector<8x8xf32>
    %26 = vector.extract_strided_slice %22 {offsets = [0, 0], sizes = [8, 8], strides = [1, 1]} : vector<8x32xf32> to vector<8x8xf32>
    %27 = vector.extract_strided_slice %20 {offsets = [0, 0], sizes = [8, 8], strides = [1, 1]} : vector<8x32xf32> to vector<8x8xf32>
    %cst_24 = arith.constant dense<0.000000e+00> : vector<8x8xf32>
    %28 = tpu.matmul %25, %26, %cst_24 {dimension_numbers = #tpu.dot_dimension_numbers<[1], [1], [0], [0], [0, 0, 1, 0], [], []>} : vector<8x8xf32>, vector<8x8xf32>, vector<8x8xf32> -> vector<8x8xf32>
    %cst_25 = arith.constant dense<0xFF800000> : vector<8xf32>
    %29 = vector.multi_reduction <maximumf>, %28, %cst_25 [1] : vector<8x8xf32> to vector<8xf32>
    %30 = vector.shape_cast %29 : vector<8xf32> to vector<8x1xf32>
    %31 = vector.broadcast %30 : vector<8x1xf32> to vector<8x8xf32>
    %32 = arith.subf %28, %31 : vector<8x8xf32>
    %33 = math.exp %32 : vector<8x8xf32>
    %cst_26 = arith.constant dense<0.000000e+00> : vector<8xf32>
    %34 = vector.multi_reduction <add>, %33, %cst_26 [1] : vector<8x8xf32> to vector<8xf32>
    %35 = vector.shape_cast %34 : vector<8xf32> to vector<8x1xf32>
    %36 = tpu.reciprocal %35 {approx = true} : vector<8x1xf32> -> vector<8x1xf32>
    %37 = vector.broadcast %36 : vector<8x1xf32> to vector<8x8xf32>
    %38 = arith.mulf %33, %37 : vector<8x8xf32>
    %cst_27 = arith.constant dense<0.000000e+00> : vector<8x8xf32>
    %39 = tpu.matmul %38, %27, %cst_27 {dimension_numbers = #tpu.dot_dimension_numbers<[1], [0], [0], [1], [0, 0, 1, 1], [], []>} : vector<8x8xf32>, vector<8x8xf32>, vector<8x8xf32> -> vector<8x8xf32>
    %40 = vector.extract_strided_slice %24 {offsets = [0, 8], sizes = [8, 8], strides = [1, 1]} : vector<8x32xf32> to vector<8x8xf32>
    %41 = vector.extract_strided_slice %22 {offsets = [0, 8], sizes = [8, 8], strides = [1, 1]} : vector<8x32xf32> to vector<8x8xf32>
    %42 = vector.extract_strided_slice %20 {offsets = [0, 8], sizes = [8, 8], strides = [1, 1]} : vector<8x32xf32> to vector<8x8xf32>
    %cst_28 = arith.constant dense<0.000000e+00> : vector<8x8xf32>
    %43 = tpu.matmul %40, %41, %cst_28 {dimension_numbers = #tpu.dot_dimension_numbers<[1], [1], [0], [0], [0, 0, 1, 0], [], []>} : vector<8x8xf32>, vector<8x8xf32>, vector<8x8xf32> -> vector<8x8xf32>
    %cst_29 = arith.constant dense<0xFF800000> : vector<8xf32>
    %44 = vector.multi_reduction <maximumf>, %43, %cst_29 [1] : vector<8x8xf32> to vector<8xf32>
    %45 = vector.shape_cast %44 : vector<8xf32> to vector<8x1xf32>
    %46 = vector.broadcast %45 : vector<8x1xf32> to vector<8x8xf32>
    %47 = arith.subf %43, %46 : vector<8x8xf32>
    %48 = math.exp %47 : vector<8x8xf32>
    %cst_30 = arith.constant dense<0.000000e+00> : vector<8xf32>
    %49 = vector.multi_reduction <add>, %48, %cst_30 [1] : vector<8x8xf32> to vector<8xf32>
    %50 = vector.shape_cast %49 : vector<8xf32> to vector<8x1xf32>
    %51 = tpu.reciprocal %50 {approx = true} : vector<8x1xf32> -> vector<8x1xf32>
    %52 = vector.broadcast %51 : vector<8x1xf32> to vector<8x8xf32>
    %53 = arith.mulf %48, %52 : vector<8x8xf32>
    %cst_31 = arith.constant dense<0.000000e+00> : vector<8x8xf32>
    %54 = tpu.matmul %53, %42, %cst_31 {dimension_numbers = #tpu.dot_dimension_numbers<[1], [0], [0], [1], [0, 0, 1, 1], [], []>} : vector<8x8xf32>, vector<8x8xf32>, vector<8x8xf32> -> vector<8x8xf32>
    %55 = vector.extract_strided_slice %24 {offsets = [0, 16], sizes = [8, 8], strides = [1, 1]} : vector<8x32xf32> to vector<8x8xf32>
    %56 = vector.extract_strided_slice %22 {offsets = [0, 16], sizes = [8, 8], strides = [1, 1]} : vector<8x32xf32> to vector<8x8xf32>
    %57 = vector.extract_strided_slice %20 {offsets = [0, 16], sizes = [8, 8], strides = [1, 1]} : vector<8x32xf32> to vector<8x8xf32>
    %cst_32 = arith.constant dense<0.000000e+00> : vector<8x8xf32>
    %58 = tpu.matmul %55, %56, %cst_32 {dimension_numbers = #tpu.dot_dimension_numbers<[1], [1], [0], [0], [0, 0, 1, 0], [], []>} : vector<8x8xf32>, vector<8x8xf32>, vector<8x8xf32> -> vector<8x8xf32>
    %cst_33 = arith.constant dense<0xFF800000> : vector<8xf32>
    %59 = vector.multi_reduction <maximumf>, %58, %cst_33 [1] : vector<8x8xf32> to vector<8xf32>
    %60 = vector.shape_cast %59 : vector<8xf32> to vector<8x1xf32>
    %61 = vector.broadcast %60 : vector<8x1xf32> to vector<8x8xf32>
    %62 = arith.subf %58, %61 : vector<8x8xf32>
    %63 = math.exp %62 : vector<8x8xf32>
    %cst_34 = arith.constant dense<0.000000e+00> : vector<8xf32>
    %64 = vector.multi_reduction <add>, %63, %cst_34 [1] : vector<8x8xf32> to vector<8xf32>
    %65 = vector.shape_cast %64 : vector<8xf32> to vector<8x1xf32>
    %66 = tpu.reciprocal %65 {approx = true} : vector<8x1xf32> -> vector<8x1xf32>
    %67 = vector.broadcast %66 : vector<8x1xf32> to vector<8x8xf32>
    %68 = arith.mulf %63, %67 : vector<8x8xf32>
    %cst_35 = arith.constant dense<0.000000e+00> : vector<8x8xf32>
    %69 = tpu.matmul %68, %57, %cst_35 {dimension_numbers = #tpu.dot_dimension_numbers<[1], [0], [0], [1], [0, 0, 1, 1], [], []>} : vector<8x8xf32>, vector<8x8xf32>, vector<8x8xf32> -> vector<8x8xf32>
    %70 = vector.extract_strided_slice %24 {offsets = [0, 24], sizes = [8, 8], strides = [1, 1]} : vector<8x32xf32> to vector<8x8xf32>
    %71 = vector.extract_strided_slice %22 {offsets = [0, 24], sizes = [8, 8], strides = [1, 1]} : vector<8x32xf32> to vector<8x8xf32>
    %72 = vector.extract_strided_slice %20 {offsets = [0, 24], sizes = [8, 8], strides = [1, 1]} : vector<8x32xf32> to vector<8x8xf32>
    %cst_36 = arith.constant dense<0.000000e+00> : vector<8x8xf32>
    %73 = tpu.matmul %70, %71, %cst_36 {dimension_numbers = #tpu.dot_dimension_numbers<[1], [1], [0], [0], [0, 0, 1, 0], [], []>} : vector<8x8xf32>, vector<8x8xf32>, vector<8x8xf32> -> vector<8x8xf32>
    %cst_37 = arith.constant dense<0xFF800000> : vector<8xf32>
    %74 = vector.multi_reduction <maximumf>, %73, %cst_37 [1] : vector<8x8xf32> to vector<8xf32>
    %75 = vector.shape_cast %74 : vector<8xf32> to vector<8x1xf32>
    %76 = vector.broadcast %75 : vector<8x1xf32> to vector<8x8xf32>
    %77 = arith.subf %73, %76 : vector<8x8xf32>
    %78 = math.exp %77 : vector<8x8xf32>
    %cst_38 = arith.constant dense<0.000000e+00> : vector<8xf32>
    %79 = vector.multi_reduction <add>, %78, %cst_38 [1] : vector<8x8xf32> to vector<8xf32>
    %80 = vector.shape_cast %79 : vector<8xf32> to vector<8x1xf32>
    %81 = tpu.reciprocal %80 {approx = true} : vector<8x1xf32> -> vector<8x1xf32>
    %82 = vector.broadcast %81 : vector<8x1xf32> to vector<8x8xf32>
    %83 = arith.mulf %78, %82 : vector<8x8xf32>
    %cst_39 = arith.constant dense<0.000000e+00> : vector<8x8xf32>
    %84 = tpu.matmul %83, %72, %cst_39 {dimension_numbers = #tpu.dot_dimension_numbers<[1], [0], [0], [1], [0, 0, 1, 1], [], []>} : vector<8x8xf32>, vector<8x8xf32>, vector<8x8xf32> -> vector<8x8xf32>
    %85 = tpu.concatenate %39, %54, %69, %84 in 1 : vector<8x8xf32>, vector<8x8xf32>, vector<8x8xf32>, vector<8x8xf32> -> vector<8x32xf32>
    %c0_40 = arith.constant 0 : index
    %c0_41 = arith.constant 0 : index
    %86 = vector.load %arg10[%c0_40, %c0_41] : memref<32x32xf32, #tpu.memory_space<vmem>>, vector<32x32xf32>
    %cst_42 = arith.constant dense<0.000000e+00> : vector<8x32xf32>
    %87 = tpu.matmul %85, %86, %cst_42 {dimension_numbers = #tpu.dot_dimension_numbers<[1], [0], [0], [1], [0, 0, 1, 1], [], []>} : vector<8x32xf32>, vector<32x32xf32>, vector<8x32xf32> -> vector<8x32xf32>
    %c0_43 = arith.constant 0 : index
    %c0_44 = arith.constant 0 : index
    %88 = vector.load %arg11[%c0_43, %c0_44] : memref<1x32xf32, #tpu.memory_space<vmem>>, vector<1x32xf32>
    %89 = vector.broadcast %88 : vector<1x32xf32> to vector<8x32xf32>
    %90 = arith.addf %87, %89 : vector<8x32xf32>
    %c0_45 = arith.constant 0 : index
    %c0_46 = arith.constant 0 : index
    %91 = vector.load %arg24[%c0_45, %c0_46] : memref<1x32xf32, #tpu.memory_space<vmem>>, vector<1x32xf32>
    %c0_47 = arith.constant 0 : index
    %c0_48 = arith.constant 0 : index
    %92 = vector.load %arg25[%c0_47, %c0_48] : memref<1x32xf32, #tpu.memory_space<vmem>>, vector<1x32xf32>
    %93 = arith.addf %1, %90 : vector<8x32xf32>
    %cst_49 = arith.constant dense<0.000000e+00> : vector<8xf32>
    %94 = vector.multi_reduction <add>, %93, %cst_49 [1] : vector<8x32xf32> to vector<8xf32>
    %95 = vector.shape_cast %94 : vector<8xf32> to vector<8x1xf32>
    %cst_50 = arith.constant 3.200000e+01 : f32
    %96 = vector.broadcast %cst_50 : f32 to vector<8x1xf32>
    %97 = arith.divf %95, %96 : vector<8x1xf32>
    %98 = vector.broadcast %97 : vector<8x1xf32> to vector<8x32xf32>
    %99 = arith.subf %93, %98 : vector<8x32xf32>
    %100 = arith.mulf %99, %99 : vector<8x32xf32>
    %cst_51 = arith.constant dense<0.000000e+00> : vector<8xf32>
    %101 = vector.multi_reduction <add>, %100, %cst_51 [1] : vector<8x32xf32> to vector<8xf32>
    %102 = vector.shape_cast %101 : vector<8xf32> to vector<8x1xf32>
    %cst_52 = arith.constant 3.200000e+01 : f32
    %103 = vector.broadcast %cst_52 : f32 to vector<8x1xf32>
    %104 = arith.divf %102, %103 : vector<8x1xf32>
    %105 = vector.broadcast %97 : vector<8x1xf32> to vector<8x32xf32>
    %106 = arith.subf %93, %105 : vector<8x32xf32>
    %cst_53 = arith.constant 9.99999974E-6 : f32
    %107 = vector.broadcast %cst_53 : f32 to vector<8x1xf32>
    %108 = arith.addf %104, %107 : vector<8x1xf32>
    %109 = math.rsqrt %108 : vector<8x1xf32>
    %110 = vector.broadcast %109 : vector<8x1xf32> to vector<8x32xf32>
    %111 = arith.mulf %106, %110 : vector<8x32xf32>
    %112 = vector.broadcast %91 : vector<1x32xf32> to vector<8x32xf32>
    %113 = arith.mulf %111, %112 : vector<8x32xf32>
    %114 = vector.broadcast %92 : vector<1x32xf32> to vector<8x32xf32>
    %115 = arith.addf %113, %114 : vector<8x32xf32>
    %116 = arith.addf %115, %5 : vector<8x32xf32>
    %c0_54 = arith.constant 0 : index
    %c0_55 = arith.constant 0 : index
    %117 = vector.load %arg12[%c0_54, %c0_55] : memref<32x32xf32, #tpu.memory_space<vmem>>, vector<32x32xf32>
    %cst_56 = arith.constant dense<0.000000e+00> : vector<8x32xf32>
    %118 = tpu.matmul %116, %117, %cst_56 {dimension_numbers = #tpu.dot_dimension_numbers<[1], [0], [0], [1], [0, 0, 1, 1], [], []>} : vector<8x32xf32>, vector<32x32xf32>, vector<8x32xf32> -> vector<8x32xf32>
    %c0_57 = arith.constant 0 : index
    %c0_58 = arith.constant 0 : index
    %119 = vector.load %arg13[%c0_57, %c0_58] : memref<1x32xf32, #tpu.memory_space<vmem>>, vector<1x32xf32>
    %120 = vector.broadcast %119 : vector<1x32xf32> to vector<8x32xf32>
    %121 = arith.addf %118, %120 : vector<8x32xf32>
    %122 = arith.addf %3, %7 : vector<16x32xf32>
    %c0_59 = arith.constant 0 : index
    %c0_60 = arith.constant 0 : index
    %123 = vector.load %arg14[%c0_59, %c0_60] : memref<32x32xf32, #tpu.memory_space<vmem>>, vector<32x32xf32>
    %cst_61 = arith.constant dense<0.000000e+00> : vector<16x32xf32>
    %124 = tpu.matmul %122, %123, %cst_61 {dimension_numbers = #tpu.dot_dimension_numbers<[1], [0], [0], [1], [0, 0, 1, 1], [], []>} : vector<16x32xf32>, vector<32x32xf32>, vector<16x32xf32> -> vector<16x32xf32>
    %c0_62 = arith.constant 0 : index
    %c0_63 = arith.constant 0 : index
    %125 = vector.load %arg15[%c0_62, %c0_63] : memref<1x32xf32, #tpu.memory_space<vmem>>, vector<1x32xf32>
    %126 = vector.broadcast %125 : vector<1x32xf32> to vector<16x32xf32>
    %127 = arith.addf %124, %126 : vector<16x32xf32>
    %c0_64 = arith.constant 0 : index
    %c0_65 = arith.constant 0 : index
    %128 = vector.load %arg16[%c0_64, %c0_65] : memref<32x32xf32, #tpu.memory_space<vmem>>, vector<32x32xf32>
    %cst_66 = arith.constant dense<0.000000e+00> : vector<16x32xf32>
    %129 = tpu.matmul %3, %128, %cst_66 {dimension_numbers = #tpu.dot_dimension_numbers<[1], [0], [0], [1], [0, 0, 1, 1], [], []>} : vector<16x32xf32>, vector<32x32xf32>, vector<16x32xf32> -> vector<16x32xf32>
    %c0_67 = arith.constant 0 : index
    %c0_68 = arith.constant 0 : index
    %130 = vector.load %arg17[%c0_67, %c0_68] : memref<1x32xf32, #tpu.memory_space<vmem>>, vector<1x32xf32>
    %131 = vector.broadcast %130 : vector<1x32xf32> to vector<16x32xf32>
    %132 = arith.addf %129, %131 : vector<16x32xf32>
    %cst_69 = arith.constant 0.353553385 : f32
    %133 = vector.broadcast %cst_69 : f32 to vector<8x32xf32>
    %134 = arith.mulf %121, %133 : vector<8x32xf32>
    %135 = vector.extract_strided_slice %134 {offsets = [0, 0], sizes = [8, 8], strides = [1, 1]} : vector<8x32xf32> to vector<8x8xf32>
    %136 = vector.extract_strided_slice %127 {offsets = [0, 0], sizes = [16, 8], strides = [1, 1]} : vector<16x32xf32> to vector<16x8xf32>
    %137 = vector.extract_strided_slice %132 {offsets = [0, 0], sizes = [16, 8], strides = [1, 1]} : vector<16x32xf32> to vector<16x8xf32>
    %cst_70 = arith.constant dense<0.000000e+00> : vector<8x16xf32>
    %138 = tpu.matmul %135, %136, %cst_70 {dimension_numbers = #tpu.dot_dimension_numbers<[1], [1], [0], [0], [0, 0, 1, 0], [], []>} : vector<8x8xf32>, vector<16x8xf32>, vector<8x16xf32> -> vector<8x16xf32>
    %139 = vector.broadcast %9 : vector<1x16xf32> to vector<8x16xf32>
    %140 = arith.addf %138, %139 : vector<8x16xf32>
    %cst_71 = arith.constant dense<0xFF800000> : vector<8xf32>
    %141 = vector.multi_reduction <maximumf>, %140, %cst_71 [1] : vector<8x16xf32> to vector<8xf32>
    %142 = vector.shape_cast %141 : vector<8xf32> to vector<8x1xf32>
    %143 = vector.broadcast %142 : vector<8x1xf32> to vector<8x16xf32>
    %144 = arith.subf %140, %143 : vector<8x16xf32>
    %145 = math.exp %144 : vector<8x16xf32>
    %cst_72 = arith.constant dense<0.000000e+00> : vector<8xf32>
    %146 = vector.multi_reduction <add>, %145, %cst_72 [1] : vector<8x16xf32> to vector<8xf32>
    %147 = vector.shape_cast %146 : vector<8xf32> to vector<8x1xf32>
    %148 = tpu.reciprocal %147 {approx = true} : vector<8x1xf32> -> vector<8x1xf32>
    %149 = vector.broadcast %148 : vector<8x1xf32> to vector<8x16xf32>
    %150 = arith.mulf %145, %149 : vector<8x16xf32>
    %cst_73 = arith.constant dense<0.000000e+00> : vector<8x8xf32>
    %151 = tpu.matmul %150, %137, %cst_73 {dimension_numbers = #tpu.dot_dimension_numbers<[1], [0], [0], [1], [0, 0, 1, 1], [], []>} : vector<8x16xf32>, vector<16x8xf32>, vector<8x8xf32> -> vector<8x8xf32>
    %152 = vector.extract_strided_slice %134 {offsets = [0, 8], sizes = [8, 8], strides = [1, 1]} : vector<8x32xf32> to vector<8x8xf32>
    %153 = vector.extract_strided_slice %127 {offsets = [0, 8], sizes = [16, 8], strides = [1, 1]} : vector<16x32xf32> to vector<16x8xf32>
    %154 = vector.extract_strided_slice %132 {offsets = [0, 8], sizes = [16, 8], strides = [1, 1]} : vector<16x32xf32> to vector<16x8xf32>
    %cst_74 = arith.constant dense<0.000000e+00> : vector<8x16xf32>
    %155 = tpu.matmul %152, %153, %cst_74 {dimension_numbers = #tpu.dot_dimension_numbers<[1], [1], [0], [0], [0, 0, 1, 0], [], []>} : vector<8x8xf32>, vector<16x8xf32>, vector<8x16xf32> -> vector<8x16xf32>
    %156 = vector.broadcast %9 : vector<1x16xf32> to vector<8x16xf32>
    %157 = arith.addf %155, %156 : vector<8x16xf32>
    %cst_75 = arith.constant dense<0xFF800000> : vector<8xf32>
    %158 = vector.multi_reduction <maximumf>, %157, %cst_75 [1] : vector<8x16xf32> to vector<8xf32>
    %159 = vector.shape_cast %158 : vector<8xf32> to vector<8x1xf32>
    %160 = vector.broadcast %159 : vector<8x1xf32> to vector<8x16xf32>
    %161 = arith.subf %157, %160 : vector<8x16xf32>
    %162 = math.exp %161 : vector<8x16xf32>
    %cst_76 = arith.constant dense<0.000000e+00> : vector<8xf32>
    %163 = vector.multi_reduction <add>, %162, %cst_76 [1] : vector<8x16xf32> to vector<8xf32>
    %164 = vector.shape_cast %163 : vector<8xf32> to vector<8x1xf32>
    %165 = tpu.reciprocal %164 {approx = true} : vector<8x1xf32> -> vector<8x1xf32>
    %166 = vector.broadcast %165 : vector<8x1xf32> to vector<8x16xf32>
    %167 = arith.mulf %162, %166 : vector<8x16xf32>
    %cst_77 = arith.constant dense<0.000000e+00> : vector<8x8xf32>
    %168 = tpu.matmul %167, %154, %cst_77 {dimension_numbers = #tpu.dot_dimension_numbers<[1], [0], [0], [1], [0, 0, 1, 1], [], []>} : vector<8x16xf32>, vector<16x8xf32>, vector<8x8xf32> -> vector<8x8xf32>
    %169 = vector.extract_strided_slice %134 {offsets = [0, 16], sizes = [8, 8], strides = [1, 1]} : vector<8x32xf32> to vector<8x8xf32>
    %170 = vector.extract_strided_slice %127 {offsets = [0, 16], sizes = [16, 8], strides = [1, 1]} : vector<16x32xf32> to vector<16x8xf32>
    %171 = vector.extract_strided_slice %132 {offsets = [0, 16], sizes = [16, 8], strides = [1, 1]} : vector<16x32xf32> to vector<16x8xf32>
    %cst_78 = arith.constant dense<0.000000e+00> : vector<8x16xf32>
    %172 = tpu.matmul %169, %170, %cst_78 {dimension_numbers = #tpu.dot_dimension_numbers<[1], [1], [0], [0], [0, 0, 1, 0], [], []>} : vector<8x8xf32>, vector<16x8xf32>, vector<8x16xf32> -> vector<8x16xf32>
    %173 = vector.broadcast %9 : vector<1x16xf32> to vector<8x16xf32>
    %174 = arith.addf %172, %173 : vector<8x16xf32>
    %cst_79 = arith.constant dense<0xFF800000> : vector<8xf32>
    %175 = vector.multi_reduction <maximumf>, %174, %cst_79 [1] : vector<8x16xf32> to vector<8xf32>
    %176 = vector.shape_cast %175 : vector<8xf32> to vector<8x1xf32>
    %177 = vector.broadcast %176 : vector<8x1xf32> to vector<8x16xf32>
    %178 = arith.subf %174, %177 : vector<8x16xf32>
    %179 = math.exp %178 : vector<8x16xf32>
    %cst_80 = arith.constant dense<0.000000e+00> : vector<8xf32>
    %180 = vector.multi_reduction <add>, %179, %cst_80 [1] : vector<8x16xf32> to vector<8xf32>
    %181 = vector.shape_cast %180 : vector<8xf32> to vector<8x1xf32>
    %182 = tpu.reciprocal %181 {approx = true} : vector<8x1xf32> -> vector<8x1xf32>
    %183 = vector.broadcast %182 : vector<8x1xf32> to vector<8x16xf32>
    %184 = arith.mulf %179, %183 : vector<8x16xf32>
    %cst_81 = arith.constant dense<0.000000e+00> : vector<8x8xf32>
    %185 = tpu.matmul %184, %171, %cst_81 {dimension_numbers = #tpu.dot_dimension_numbers<[1], [0], [0], [1], [0, 0, 1, 1], [], []>} : vector<8x16xf32>, vector<16x8xf32>, vector<8x8xf32> -> vector<8x8xf32>
    %186 = vector.extract_strided_slice %134 {offsets = [0, 24], sizes = [8, 8], strides = [1, 1]} : vector<8x32xf32> to vector<8x8xf32>
    %187 = vector.extract_strided_slice %127 {offsets = [0, 24], sizes = [16, 8], strides = [1, 1]} : vector<16x32xf32> to vector<16x8xf32>
    %188 = vector.extract_strided_slice %132 {offsets = [0, 24], sizes = [16, 8], strides = [1, 1]} : vector<16x32xf32> to vector<16x8xf32>
    %cst_82 = arith.constant dense<0.000000e+00> : vector<8x16xf32>
    %189 = tpu.matmul %186, %187, %cst_82 {dimension_numbers = #tpu.dot_dimension_numbers<[1], [1], [0], [0], [0, 0, 1, 0], [], []>} : vector<8x8xf32>, vector<16x8xf32>, vector<8x16xf32> -> vector<8x16xf32>
    %190 = vector.broadcast %9 : vector<1x16xf32> to vector<8x16xf32>
    %191 = arith.addf %189, %190 : vector<8x16xf32>
    %cst_83 = arith.constant dense<0xFF800000> : vector<8xf32>
    %192 = vector.multi_reduction <maximumf>, %191, %cst_83 [1] : vector<8x16xf32> to vector<8xf32>
    %193 = vector.shape_cast %192 : vector<8xf32> to vector<8x1xf32>
    %194 = vector.broadcast %193 : vector<8x1xf32> to vector<8x16xf32>
    %195 = arith.subf %191, %194 : vector<8x16xf32>
    %196 = math.exp %195 : vector<8x16xf32>
    %cst_84 = arith.constant dense<0.000000e+00> : vector<8xf32>
    %197 = vector.multi_reduction <add>, %196, %cst_84 [1] : vector<8x16xf32> to vector<8xf32>
    %198 = vector.shape_cast %197 : vector<8xf32> to vector<8x1xf32>
    %199 = tpu.reciprocal %198 {approx = true} : vector<8x1xf32> -> vector<8x1xf32>
    %200 = vector.broadcast %199 : vector<8x1xf32> to vector<8x16xf32>
    %201 = arith.mulf %196, %200 : vector<8x16xf32>
    %cst_85 = arith.constant dense<0.000000e+00> : vector<8x8xf32>
    %202 = tpu.matmul %201, %188, %cst_85 {dimension_numbers = #tpu.dot_dimension_numbers<[1], [0], [0], [1], [0, 0, 1, 1], [], []>} : vector<8x16xf32>, vector<16x8xf32>, vector<8x8xf32> -> vector<8x8xf32>
    %203 = tpu.concatenate %151, %168, %185, %202 in 1 : vector<8x8xf32>, vector<8x8xf32>, vector<8x8xf32>, vector<8x8xf32> -> vector<8x32xf32>
    %c0_86 = arith.constant 0 : index
    %c0_87 = arith.constant 0 : index
    %204 = vector.load %arg18[%c0_86, %c0_87] : memref<32x32xf32, #tpu.memory_space<vmem>>, vector<32x32xf32>
    %cst_88 = arith.constant dense<0.000000e+00> : vector<8x32xf32>
    %205 = tpu.matmul %203, %204, %cst_88 {dimension_numbers = #tpu.dot_dimension_numbers<[1], [0], [0], [1], [0, 0, 1, 1], [], []>} : vector<8x32xf32>, vector<32x32xf32>, vector<8x32xf32> -> vector<8x32xf32>
    %c0_89 = arith.constant 0 : index
    %c0_90 = arith.constant 0 : index
    %206 = vector.load %arg19[%c0_89, %c0_90] : memref<1x32xf32, #tpu.memory_space<vmem>>, vector<1x32xf32>
    %207 = vector.broadcast %206 : vector<1x32xf32> to vector<8x32xf32>
    %208 = arith.addf %205, %207 : vector<8x32xf32>
    %c0_91 = arith.constant 0 : index
    %c0_92 = arith.constant 0 : index
    %209 = vector.load %arg26[%c0_91, %c0_92] : memref<1x32xf32, #tpu.memory_space<vmem>>, vector<1x32xf32>
    %c0_93 = arith.constant 0 : index
    %c0_94 = arith.constant 0 : index
    %210 = vector.load %arg27[%c0_93, %c0_94] : memref<1x32xf32, #tpu.memory_space<vmem>>, vector<1x32xf32>
    %211 = arith.addf %115, %208 : vector<8x32xf32>
    %cst_95 = arith.constant dense<0.000000e+00> : vector<8xf32>
    %212 = vector.multi_reduction <add>, %211, %cst_95 [1] : vector<8x32xf32> to vector<8xf32>
    %213 = vector.shape_cast %212 : vector<8xf32> to vector<8x1xf32>
    %cst_96 = arith.constant 3.200000e+01 : f32
    %214 = vector.broadcast %cst_96 : f32 to vector<8x1xf32>
    %215 = arith.divf %213, %214 : vector<8x1xf32>
    %216 = vector.broadcast %215 : vector<8x1xf32> to vector<8x32xf32>
    %217 = arith.subf %211, %216 : vector<8x32xf32>
    %218 = arith.mulf %217, %217 : vector<8x32xf32>
    %cst_97 = arith.constant dense<0.000000e+00> : vector<8xf32>
    %219 = vector.multi_reduction <add>, %218, %cst_97 [1] : vector<8x32xf32> to vector<8xf32>
    %220 = vector.shape_cast %219 : vector<8xf32> to vector<8x1xf32>
    %cst_98 = arith.constant 3.200000e+01 : f32
    %221 = vector.broadcast %cst_98 : f32 to vector<8x1xf32>
    %222 = arith.divf %220, %221 : vector<8x1xf32>
    %223 = vector.broadcast %215 : vector<8x1xf32> to vector<8x32xf32>
    %224 = arith.subf %211, %223 : vector<8x32xf32>
    %cst_99 = arith.constant 9.99999974E-6 : f32
    %225 = vector.broadcast %cst_99 : f32 to vector<8x1xf32>
    %226 = arith.addf %222, %225 : vector<8x1xf32>
    %227 = math.rsqrt %226 : vector<8x1xf32>
    %228 = vector.broadcast %227 : vector<8x1xf32> to vector<8x32xf32>
    %229 = arith.mulf %224, %228 : vector<8x32xf32>
    %230 = vector.broadcast %209 : vector<1x32xf32> to vector<8x32xf32>
    %231 = arith.mulf %229, %230 : vector<8x32xf32>
    %232 = vector.broadcast %210 : vector<1x32xf32> to vector<8x32xf32>
    %233 = arith.addf %231, %232 : vector<8x32xf32>
    %c0_100 = arith.constant 0 : index
    %c0_101 = arith.constant 0 : index
    %234 = vector.load %arg20[%c0_100, %c0_101] : memref<32x64xf32, #tpu.memory_space<vmem>>, vector<32x64xf32>
    %cst_102 = arith.constant dense<0.000000e+00> : vector<8x64xf32>
    %235 = tpu.matmul %233, %234, %cst_102 {dimension_numbers = #tpu.dot_dimension_numbers<[1], [0], [0], [1], [0, 0, 1, 1], [], []>} : vector<8x32xf32>, vector<32x64xf32>, vector<8x64xf32> -> vector<8x64xf32>
    %c0_103 = arith.constant 0 : index
    %c0_104 = arith.constant 0 : index
    %236 = vector.load %arg21[%c0_103, %c0_104] : memref<1x64xf32, #tpu.memory_space<vmem>>, vector<1x64xf32>
    %237 = vector.broadcast %236 : vector<1x64xf32> to vector<8x64xf32>
    %238 = arith.addf %235, %237 : vector<8x64xf32>
    %cst_105 = arith.constant 0.000000e+00 : f32
    %239 = vector.broadcast %cst_105 : f32 to vector<8x64xf32>
    %240 = arith.maximumf %238, %239 : vector<8x64xf32>
    %c0_106 = arith.constant 0 : index
    %c0_107 = arith.constant 0 : index
    %241 = vector.load %arg22[%c0_106, %c0_107] : memref<64x32xf32, #tpu.memory_space<vmem>>, vector<64x32xf32>
    %cst_108 = arith.constant dense<0.000000e+00> : vector<8x32xf32>
    %242 = tpu.matmul %240, %241, %cst_108 {dimension_numbers = #tpu.dot_dimension_numbers<[1], [0], [0], [1], [0, 0, 1, 1], [], []>} : vector<8x64xf32>, vector<64x32xf32>, vector<8x32xf32> -> vector<8x32xf32>
    %c0_109 = arith.constant 0 : index
    %c0_110 = arith.constant 0 : index
    %243 = vector.load %arg23[%c0_109, %c0_110] : memref<1x32xf32, #tpu.memory_space<vmem>>, vector<1x32xf32>
    %244 = vector.broadcast %243 : vector<1x32xf32> to vector<8x32xf32>
    %245 = arith.addf %242, %244 : vector<8x32xf32>
    %c0_111 = arith.constant 0 : index
    %c0_112 = arith.constant 0 : index
    %246 = vector.load %arg28[%c0_111, %c0_112] : memref<1x32xf32, #tpu.memory_space<vmem>>, vector<1x32xf32>
    %c0_113 = arith.constant 0 : index
    %c0_114 = arith.constant 0 : index
    %247 = vector.load %arg29[%c0_113, %c0_114] : memref<1x32xf32, #tpu.memory_space<vmem>>, vector<1x32xf32>
    %248 = arith.addf %233, %245 : vector<8x32xf32>
    %cst_115 = arith.constant dense<0.000000e+00> : vector<8xf32>
    %249 = vector.multi_reduction <add>, %248, %cst_115 [1] : vector<8x32xf32> to vector<8xf32>
    %250 = vector.shape_cast %249 : vector<8xf32> to vector<8x1xf32>
    %cst_116 = arith.constant 3.200000e+01 : f32
    %251 = vector.broadcast %cst_116 : f32 to vector<8x1xf32>
    %252 = arith.divf %250, %251 : vector<8x1xf32>
    %253 = vector.broadcast %252 : vector<8x1xf32> to vector<8x32xf32>
    %254 = arith.subf %248, %253 : vector<8x32xf32>
    %255 = arith.mulf %254, %254 : vector<8x32xf32>
    %cst_117 = arith.constant dense<0.000000e+00> : vector<8xf32>
    %256 = vector.multi_reduction <add>, %255, %cst_117 [1] : vector<8x32xf32> to vector<8xf32>
    %257 = vector.shape_cast %256 : vector<8xf32> to vector<8x1xf32>
    %cst_118 = arith.constant 3.200000e+01 : f32
    %258 = vector.broadcast %cst_118 : f32 to vector<8x1xf32>
    %259 = arith.divf %257, %258 : vector<8x1xf32>
    %260 = vector.broadcast %252 : vector<8x1xf32> to vector<8x32xf32>
    %261 = arith.subf %248, %260 : vector<8x32xf32>
    %cst_119 = arith.constant 9.99999974E-6 : f32
    %262 = vector.broadcast %cst_119 : f32 to vector<8x1xf32>
    %263 = arith.addf %259, %262 : vector<8x1xf32>
    %264 = math.rsqrt %263 : vector<8x1xf32>
    %265 = vector.broadcast %264 : vector<8x1xf32> to vector<8x32xf32>
    %266 = arith.mulf %261, %265 : vector<8x32xf32>
    %267 = vector.broadcast %246 : vector<1x32xf32> to vector<8x32xf32>
    %268 = arith.mulf %266, %267 : vector<8x32xf32>
    %269 = vector.broadcast %247 : vector<1x32xf32> to vector<8x32xf32>
    %270 = arith.addf %268, %269 : vector<8x32xf32>
    %c0_120 = arith.constant 0 : index
    %c0_121 = arith.constant 0 : index
    %c0_122 = arith.constant 0 : index
    %271 = vector.load %arg30[%c0_120, %c0_121, %c0_122] : memref<1x8x32xf32, #tpu.memory_space<vmem>>, vector<1x8x32xf32>
    %272 = vector.shape_cast %271 : vector<1x8x32xf32> to vector<8x32xf32>
    %273 = vector.shape_cast %270 : vector<8x32xf32> to vector<1x8x32xf32>
    tpu.vector_store %arg30[%c0_120, %c0_121, %c0_122], %273 {strides = array<i32>} : memref<1x8x32xf32, #tpu.memory_space<vmem>>, vector<1x8x32xf32>,
    return
  }
  func.func @transform_0(%arg0: i32) -> (i32, i32, i32) {
    %c0_i32 = arith.constant 0 : i32
    %c0_i32_0 = arith.constant 0 : i32
    %c0_i32_1 = arith.constant 0 : i32
    return %arg0, %c0_i32, %c0_i32_0 : i32, i32, i32
  }
  func.func @transform_1(%arg0: i32) -> (i32, i32, i32) {
    %c0_i32 = arith.constant 0 : i32
    %c0_i32_0 = arith.constant 0 : i32
    %c0_i32_1 = arith.constant 0 : i32
    return %arg0, %c0_i32, %c0_i32_0 : i32, i32, i32
  }
  func.func @transform_2(%arg0: i32) -> (i32, i32, i32) {
    %c0_i32 = arith.constant 0 : i32
    %c0_i32_0 = arith.constant 0 : i32
    %c0_i32_1 = arith.constant 0 : i32
    return %arg0, %c0_i32, %c0_i32_0 : i32, i32, i32
  }
  func.func @transform_3(%arg0: i32) -> (i32, i32, i32) {
    %c0_i32 = arith.constant 0 : i32
    %c0_i32_0 = arith.constant 0 : i32
    %c0_i32_1 = arith.constant 0 : i32
    return %arg0, %c0_i32, %c0_i32_0 : i32, i32, i32
  }
  func.func @transform_4(%arg0: i32) -> (i32, i32, i32) {
    %c0_i32 = arith.constant 0 : i32
    %c0_i32_0 = arith.constant 0 : i32
    %c0_i32_1 = arith.constant 0 : i32
    return %arg0, %c0_i32, %c0_i32_0 : i32, i32, i32
  }
  func.func @transform_5(%arg0: i32) -> (i32, i32) {
    %c0_i32 = arith.constant 0 : i32
    %c0_i32_0 = arith.constant 0 : i32
    %c0_i32_1 = arith.constant 0 : i32
    return %c0_i32, %c0_i32_0 : i32, i32
  }
  func.func @transform_6(%arg0: i32) -> (i32, i32) {
    %c0_i32 = arith.constant 0 : i32
    %c0_i32_0 = arith.constant 0 : i32
    %c0_i32_1 = arith.constant 0 : i32
    return %c0_i32, %c0_i32_0 : i32, i32
  }
  func.func @transform_7(%arg0: i32) -> (i32, i32) {
    %c0_i32 = arith.constant 0 : i32
    %c0_i32_0 = arith.constant 0 : i32
    %c0_i32_1 = arith.constant 0 : i32
    return %c0_i32, %c0_i32_0 : i32, i32
  }
  func.func @transform_8(%arg0: i32) -> (i32, i32) {
    %c0_i32 = arith.constant 0 : i32
    %c0_i32_0 = arith.constant 0 : i32
    %c0_i32_1 = arith.constant 0 : i32
    return %c0_i32, %c0_i32_0 : i32, i32
  }
  func.func @transform_9(%arg0: i32) -> (i32, i32) {
    %c0_i32 = arith.constant 0 : i32
    %c0_i32_0 = arith.constant 0 : i32
    %c0_i32_1 = arith.constant 0 : i32
    return %c0_i32, %c0_i32_0 : i32, i32
  }
  func.func @transform_10(%arg0: i32) -> (i32, i32) {
    %c0_i32 = arith.constant 0 : i32
    %c0_i32_0 = arith.constant 0 : i32
    %c0_i32_1 = arith.constant 0 : i32
    return %c0_i32, %c0_i32_0 : i32, i32
  }
  func.func @transform_11(%arg0: i32) -> (i32, i32) {
    %c0_i32 = arith.constant 0 : i32
    %c0_i32_0 = arith.constant 0 : i32
    %c0_i32_1 = arith.constant 0 : i32
    return %c0_i32, %c0_i32_0 : i32, i32
  }
  func.func @transform_12(%arg0: i32) -> (i32, i32) {
    %c0_i32 = arith.constant 0 : i32
    %c0_i32_0 = arith.constant 0 : i32
    %c0_i32_1 = arith.constant 0 : i32
    return %c0_i32, %c0_i32_0 : i32, i32
  }
  func.func @transform_13(%arg0: i32) -> (i32, i32) {
    %c0_i32 = arith.constant 0 : i32
    %c0_i32_0 = arith.constant 0 : i32
    %c0_i32_1 = arith.constant 0 : i32
    return %c0_i32, %c0_i32_0 : i32, i32
  }
  func.func @transform_14(%arg0: i32) -> (i32, i32) {
    %c0_i32 = arith.constant 0 : i32
    %c0_i32_0 = arith.constant 0 : i32
    %c0_i32_1 = arith.constant 0 : i32
    return %c0_i32, %c0_i32_0 : i32, i32
  }
  func.func @transform_15(%arg0: i32) -> (i32, i32) {
    %c0_i32 = arith.constant 0 : i32
    %c0_i32_0 = arith.constant 0 : i32
    %c0_i32_1 = arith.constant 0 : i32
    return %c0_i32, %c0_i32_0 : i32, i32
  }
  func.func @transform_16(%arg0: i32) -> (i32, i32) {
    %c0_i32 = arith.constant 0 : i32
    %c0_i32_0 = arith.constant 0 : i32
    %c0_i32_1 = arith.constant 0 : i32
    return %c0_i32, %c0_i32_0 : i32, i32
  }
  func.func @transform_17(%arg0: i32) -> (i32, i32) {
    %c0_i32 = arith.constant 0 : i32
    %c0_i32_0 = arith.constant 0 : i32
    %c0_i32_1 = arith.constant 0 : i32
    return %c0_i32, %c0_i32_0 : i32, i32
  }
  func.func @transform_18(%arg0: i32) -> (i32, i32) {
    %c0_i32 = arith.constant 0 : i32
    %c0_i32_0 = arith.constant 0 : i32
    %c0_i32_1 = arith.constant 0 : i32
    return %c0_i32, %c0_i32_0 : i32, i32
  }
  func.func @transform_19(%arg0: i32) -> (i32, i32) {
    %c0_i32 = arith.constant 0 : i32
    %c0_i32_0 = arith.constant 0 : i32
    %c0_i32_1 = arith.constant 0 : i32
    return %c0_i32, %c0_i32_0 : i32, i32
  }
  func.func @transform_20(%arg0: i32) -> (i32, i32) {
    %c0_i32 = arith.constant 0 : i32
    %c0_i32_0 = arith.constant 0 : i32
    %c0_i32_1 = arith.constant 0 : i32
    return %c0_i32, %c0_i32_0 : i32, i32
  }
  func.func @transform_21(%arg0: i32) -> (i32, i32) {
    %c0_i32 = arith.constant 0 : i32
    %c0_i32_0 = arith.constant 0 : i32
    %c0_i32_1 = arith.constant 0 : i32
    return %c0_i32, %c0_i32_0 : i32, i32
  }
  func.func @transform_22(%arg0: i32) -> (i32, i32) {
    %c0_i32 = arith.constant 0 : i32
    %c0_i32_0 = arith.constant 0 : i32
    %c0_i32_1 = arith.constant 0 : i32
    return %c0_i32, %c0_i32_0 : i32, i32
  }
  func.func @transform_23(%arg0: i32) -> (i32, i32) {
    %c0_i32 = arith.constant 0 : i32
    %c0_i32_0 = arith.constant 0 : i32
    %c0_i32_1 = arith.constant 0 : i32
    return %c0_i32, %c0_i32_0 : i32, i32
  }
  func.func @transform_24(%arg0: i32) -> (i32, i32) {
    %c0_i32 = arith.constant 0 : i32
    %c0_i32_0 = arith.constant 0 : i32
    %c0_i32_1 = arith.constant 0 : i32
    return %c0_i32, %c0_i32_0 : i32, i32
  }
  func.func @transform_25(%arg0: i32) -> (i32, i32) {
    %c0_i32 = arith.constant 0 : i32
    %c0_i32_0 = arith.constant 0 : i32
    %c0_i32_1 = arith.constant 0 : i32
    return %c0_i32, %c0_i32_0 : i32, i32
  }
  func.func @transform_26(%arg0: i32) -> (i32, i32) {
    %c0_i32 = arith.constant 0 : i32
    %c0_i32_0 = arith.constant 0 : i32
    %c0_i32_1 = arith.constant 0 : i32
    return %c0_i32, %c0_i32_0 : i32, i32
  }
  func.func @transform_27(%arg0: i32) -> (i32, i32) {
    %c0_i32 = arith.constant 0 : i32
    %c0_i32_0 = arith.constant 0 : i32
    %c0_i32_1 = arith.constant 0 : i32
    return %c0_i32, %c0_i32_0 : i32, i32
  }
  func.func @transform_28(%arg0: i32) -> (i32, i32) {
    %c0_i32 = arith.constant 0 : i32
    %c0_i32_0 = arith.constant 0 : i32
    %c0_i32_1 = arith.constant 0 : i32
    return %c0_i32, %c0_i32_0 : i32, i32
  }
  func.func @transform_29(%arg0: i32) -> (i32, i32, i32) {
    %c0_i32 = arith.constant 0 : i32
    %c0_i32_0 = arith.constant 0 : i32
    %c0_i32_1 = arith.constant 0 : i32
    return %arg0, %c0_i32, %c0_i32_0 : i32, i32, i32
  }
}

</mosaic_0001>

<llo_original>
// kernel: transformer_decoder_layer.1
$region0: #{transformer_decoder_layer.1}
  #allocation0 [shape = 'u32[]', space=smem, size = 0x4, offset = 0x4, fixed_abs, tag = 'smem constant byte address 0x4 - core index']
  #allocation1 [shape = 'u32[144,128]{1,0:T(1,128)}', space=vmem, size = 0x12000, scoped, tag = 'internal scratch']
  %s0 = inlined_call_operand.smem [shape: u32[30], index: -1, kind: input, shape index: {}]
  %s1 = sld [smem:[%s0]]
  %s2 = scalar_lea.smem %s0, 1
  %s3 = sld [smem:[%s2]]
  %s4 = scalar_lea.smem %s0, 2
  %s5 = sld [smem:[%s4]]
  %s6 = scalar_lea.smem %s0, 3
  %s7 = sld [smem:[%s6]]
  %s8 = scalar_lea.smem %s0, 4
  %s9 = sld [smem:[%s8]]
  %s10 = scalar_lea.smem %s0, 5
  %s11 = sld [smem:[%s10]]
  %s12 = scalar_lea.smem %s0, 6
  %s13 = sld [smem:[%s12]]
  %s14 = scalar_lea.smem %s0, 7
  %s15 = sld [smem:[%s14]]
  %s16 = scalar_lea.smem %s0, 8
  %s17 = sld [smem:[%s16]]
  %s18 = scalar_lea.smem %s0, 9
  %s19 = sld [smem:[%s18]]
  %s20 = scalar_lea.smem %s0, 10
  %s21 = sld [smem:[%s20]]
  %s22 = scalar_lea.smem %s0, 11
  %s23 = sld [smem:[%s22]]
  %s24 = scalar_lea.smem %s0, 12
  %s25 = sld [smem:[%s24]]
  %s26 = scalar_lea.smem %s0, 13
  %s27 = sld [smem:[%s26]]
  %s28 = scalar_lea.smem %s0, 14
  %s29 = sld [smem:[%s28]]
  %s30 = scalar_lea.smem %s0, 15
  %s31 = sld [smem:[%s30]]
  %s32 = scalar_lea.smem %s0, 16
  %s33 = sld [smem:[%s32]]
  %s34 = scalar_lea.smem %s0, 17
  %s35 = sld [smem:[%s34]]
  %s36 = scalar_lea.smem %s0, 18
  %s37 = sld [smem:[%s36]]
  %s38 = scalar_lea.smem %s0, 19
  %s39 = sld [smem:[%s38]]
  %s40 = scalar_lea.smem %s0, 20
  %s41 = sld [smem:[%s40]]
  %s42 = scalar_lea.smem %s0, 21
  %s43 = sld [smem:[%s42]]
  %s44 = scalar_lea.smem %s0, 22
  %s45 = sld [smem:[%s44]]
  %s46 = scalar_lea.smem %s0, 23
  %s47 = sld [smem:[%s46]]
  %s48 = scalar_lea.smem %s0, 24
  %s49 = sld [smem:[%s48]]
  %s50 = scalar_lea.smem %s0, 25
  %s51 = sld [smem:[%s50]]
  %s52 = scalar_lea.smem %s0, 26
  %s53 = sld [smem:[%s52]]
  %s54 = scalar_lea.smem %s0, 27
  %s55 = sld [smem:[%s54]]
  %s56 = scalar_lea.smem %s0, 28
  %s57 = sld [smem:[%s56]]
  %s58 = scalar_lea.smem %s0, 29
  %s59 = sld [smem:[%s58]]
  %s60 = sld [smem:[#allocation0]]
  $region173: #{transformer_decoder_layer.1} parent=0
    _
  %s62 = ssub.s32 1, %s60
  %s63 = scalar_select 0, %s62, %s60
  $region1: #{transformer_decoder_layer.1} parent=0
    #allocation2 [shape = 'u8[512]{0}', space=vmem, size = 0x400, scoped, tag = 'input window, operand 12, single buffered']
    #allocation3 [shape = 's32[2]{0}', space=sflag, size = 0x8, scoped, tag = 'scoped memory for transformer_decoder_layer.1']
    #allocation4 [shape = 'u8[512]{0}', space=vmem, size = 0x400, scoped, tag = 'input window, operand 14, single buffered']
    #allocation5 [shape = 's32[1]{0}', space=sflag, size = 0x4, scoped, tag = 'scoped memory for transformer_decoder_layer.1']
    #allocation6 [shape = 'u8[512]{0}', space=vmem, size = 0x400, scoped, tag = 'input window, operand 16, single buffered']
    #allocation7 [shape = 'u8[512]{0}', space=vmem, size = 0x400, scoped, tag = 'input window, operand 18, single buffered']
    #allocation8 [shape = 's32[1]{0}', space=sflag, size = 0x4, scoped, tag = 'scoped memory for transformer_decoder_layer.1']
    #allocation9 [shape = 'u8[512]{0}', space=vmem, size = 0x400, scoped, tag = 'input window, operand 20, single buffered']
    #allocation10 [shape = 'u8[512]{0}', space=vmem, size = 0x400, scoped, tag = 'input window, operand 22, single buffered']
    #allocation11 [shape = 's32[1]{0}', space=sflag, size = 0x4, scoped, tag = 'scoped memory for transformer_decoder_layer.1']
    %64 = vsyncpa [#allocation3], 0
    %65 = vsyncpa [#allocation5], 0
    %66 = vsyncpa [#allocation8], 0
    %67 = vsyncpa [#allocation11], 0
    loop: start=0, step=1, limit=4
    $region2: #{transformer_decoder_layer.1} parent=1 // loop_pre_header
      _
    $region3: #{transformer_decoder_layer.1} parent=1 // loop_header
      %s69 = sphi 0, %s73
      %p70 = scmp.ge.s32.totalorder %s69, 4
      %s79 = sphi 0, %s81
      %s82 = sphi 0, %s79
      %s83 = sphi 0, %s82
      %s99 = sphi 0, %s83
      %s105 = sphi 0, %s107
      %s108 = sphi 0, %s105
      %s109 = sphi 0, %s108
      %s125 = sphi 0, %s109
      %s131 = sphi 0, %s133
      %s134 = sphi 0, %s131
      %s135 = sphi 0, %s134
      %s151 = sphi 0, %s135
      %s157 = sphi 0, %s159
      %s160 = sphi 0, %s157
      %s161 = sphi 0, %s160
      %s177 = sphi 0, %s161
      %s183 = sphi 0, %s185
      %s186 = sphi 0, %s183
      %s187 = sphi 0, %s186
      %s203 = sphi 0, %s187
      %s207 = sphi 0, %s207
      %s209 = sphi 0, %s207
      %s210 = sphi 0, %s209
      %s224 = sphi 0, %s210
      %s228 = sphi 0, %s228
      %s230 = sphi 0, %s228
      %s231 = sphi 0, %s230
      %s245 = sphi 0, %s231
      %s249 = sphi 0, %s249
      %s251 = sphi 0, %s249
      %s252 = sphi 0, %s251
      %s266 = sphi 0, %s252
      %s270 = sphi 0, %s270
      %s272 = sphi 0, %s270
      %s273 = sphi 0, %s272
      %s287 = sphi 0, %s273
      %s291 = sphi 0, %s291
      %s293 = sphi 0, %s291
      %s294 = sphi 0, %s293
      %s308 = sphi 0, %s294
      %s312 = sphi 0, %s312
      %s314 = sphi 0, %s312
      %s315 = sphi 0, %s314
      %s329 = sphi 0, %s315
      %s333 = sphi 0, %s333
      %s335 = sphi 0, %s333
      %s336 = sphi 0, %s335
      %s350 = sphi 0, %s336
      %s354 = sphi 0, %s354
      %s356 = sphi 0, %s354
      %s357 = sphi 0, %s356
      %s371 = sphi 0, %s357
      %s375 = sphi 0, %s375
      %s377 = sphi 0, %s375
      %s378 = sphi 0, %s377
      %s392 = sphi 0, %s378
      %s396 = sphi 0, %s396
      %s398 = sphi 0, %s396
      %s399 = sphi 0, %s398
      %s413 = sphi 0, %s399
      %s417 = sphi 0, %s417
      %s419 = sphi 0, %s417
      %s420 = sphi 0, %s419
      %s434 = sphi 0, %s420
      %s438 = sphi 0, %s438
      %s440 = sphi 0, %s438
      %s441 = sphi 0, %s440
      %s455 = sphi 0, %s441
      %s459 = sphi 0, %s459
      %s461 = sphi 0, %s459
      %s462 = sphi 0, %s461
      %s476 = sphi 0, %s462
      %s480 = sphi 0, %s480
      %s482 = sphi 0, %s480
      %s483 = sphi 0, %s482
      %s497 = sphi 0, %s483
      %s501 = sphi 0, %s501
      %s503 = sphi 0, %s501
      %s504 = sphi 0, %s503
      %s518 = sphi 0, %s504
      %s522 = sphi 0, %s522
      %s524 = sphi 0, %s522
      %s525 = sphi 0, %s524
      %s539 = sphi 0, %s525
      %s543 = sphi 0, %s543
      %s545 = sphi 0, %s543
      %s546 = sphi 0, %s545
      %s560 = sphi 0, %s546
      %s564 = sphi 0, %s564
      %s566 = sphi 0, %s564
      %s567 = sphi 0, %s566
      %s581 = sphi 0, %s567
      %s585 = sphi 0, %s585
      %s587 = sphi 0, %s585
      %s588 = sphi 0, %s587
      %s602 = sphi 0, %s588
      %s606 = sphi 0, %s606
      %s608 = sphi 0, %s606
      %s609 = sphi 0, %s608
      %s623 = sphi 0, %s609
      %s627 = sphi 0, %s627
      %s629 = sphi 0, %s627
      %s630 = sphi 0, %s629
      %s644 = sphi 0, %s630
      %s648 = sphi 0, %s648
      %s650 = sphi 0, %s648
      %s651 = sphi 0, %s650
      %s665 = sphi 0, %s651
      %s669 = sphi 0, %s669
      %s671 = sphi 0, %s669
      %s672 = sphi 0, %s671
      %s686 = sphi 0, %s672
      %s690 = sphi 0, %s690
      %s692 = sphi 0, %s690
      %s693 = sphi 0, %s692
      %s707 = sphi 0, %s693
      %s713 = sphi 0, %s715
      %s716 = sphi 0, %s713
      %s717 = sphi 0, %s716
      %s733 = sphi 0, %s717
    $region4: #{transformer_decoder_layer.1} parent=1 // loop_header_branch
      %72 = sbr.rel (%p70) target = $region8
    $region5: #{transformer_decoder_layer.1} parent=1 // loop_body
      %s74 = ssub.s32 %s69, 1
      %s75 = ssub.s32 %s69, 2
      %s76 = sadd.s32 %s69, 1
      %s77 = ssub.s32 %s69, %s76
      %p78 = scmp.eq.s32.totalorder %s77, 0
      %s80 = sadd.s32 %s79, 1
      %s81 = scalar_select %p78, %s79, %s80
      %p84 = pneg %p78
      %p85 = scmp.eq.s32.totalorder %s69, 1
      %p86 = por %p84, %p85
      %p87 = scmp.ne.s32.totalorder %s79, %s82
      %p88 = scmp.eq.s32.totalorder %s69, 0
      %p89 = por %p87, %p88
      %p90 = scmp.ne.s32.totalorder %s79, %s82
      %p91 = scmp.eq.s32.totalorder %s74, 1
      %p92 = por %p90, %p91
      %p93 = scmp.ne.s32.totalorder %s82, %s83
      %p94 = scmp.eq.s32.totalorder %s74, 0
      %p95 = por %p93, %p94
      %p96 = scmp.ne.s32.totalorder %s82, %s83
      %p97 = scmp.eq.s32.totalorder %s75, 1
      %p98 = por %p96, %p97
      %p100 = scmp.ne.s32.totalorder %s83, %s99
      %p101 = scmp.eq.s32.totalorder %s75, 0
      %p102 = por %p100, %p101
      %s103 = ssub.s32 %s69, %s76
      %p104 = scmp.eq.s32.totalorder %s103, 0
      %s106 = sadd.s32 %s105, 1
      %s107 = scalar_select %p104, %s105, %s106
      %p110 = pneg %p104
      %p111 = scmp.eq.s32.totalorder %s69, 1
      %p112 = por %p110, %p111
      %p113 = scmp.ne.s32.totalorder %s105, %s108
      %p114 = scmp.eq.s32.totalorder %s69, 0
      %p115 = por %p113, %p114
      %p116 = scmp.ne.s32.totalorder %s105, %s108
      %p117 = scmp.eq.s32.totalorder %s74, 1
      %p118 = por %p116, %p117
      %p119 = scmp.ne.s32.totalorder %s108, %s109
      %p120 = scmp.eq.s32.totalorder %s74, 0
      %p121 = por %p119, %p120
      %p122 = scmp.ne.s32.totalorder %s108, %s109
      %p123 = scmp.eq.s32.totalorder %s75, 1
      %p124 = por %p122, %p123
      %p126 = scmp.ne.s32.totalorder %s109, %s125
      %p127 = scmp.eq.s32.totalorder %s75, 0
      %p128 = por %p126, %p127
      %s129 = ssub.s32 %s69, %s76
      %p130 = scmp.eq.s32.totalorder %s129, 0
      %s132 = sadd.s32 %s131, 1
      %s133 = scalar_select %p130, %s131, %s132
      %p136 = pneg %p130
      %p137 = scmp.eq.s32.totalorder %s69, 1
      %p138 = por %p136, %p137
      %p139 = scmp.ne.s32.totalorder %s131, %s134
      %p140 = scmp.eq.s32.totalorder %s69, 0
      %p141 = por %p139, %p140
      %p142 = scmp.ne.s32.totalorder %s131, %s134
      %p143 = scmp.eq.s32.totalorder %s74, 1
      %p144 = por %p142, %p143
      %p145 = scmp.ne.s32.totalorder %s134, %s135
      %p146 = scmp.eq.s32.totalorder %s74, 0
      %p147 = por %p145, %p146
      %p148 = scmp.ne.s32.totalorder %s134, %s135
      %p149 = scmp.eq.s32.totalorder %s75, 1
      %p150 = por %p148, %p149
      %p152 = scmp.ne.s32.totalorder %s135, %s151
      %p153 = scmp.eq.s32.totalorder %s75, 0
      %p154 = por %p152, %p153
      %s155 = ssub.s32 %s69, %s76
      %p156 = scmp.eq.s32.totalorder %s155, 0
      %s158 = sadd.s32 %s157, 1
      %s159 = scalar_select %p156, %s157, %s158
      %p162 = pneg %p156
      %p163 = scmp.eq.s32.totalorder %s69, 1
      %p164 = por %p162, %p163
      %p165 = scmp.ne.s32.totalorder %s157, %s160
      %p166 = scmp.eq.s32.totalorder %s69, 0
      %p167 = por %p165, %p166
      %p168 = scmp.ne.s32.totalorder %s157, %s160
      %p169 = scmp.eq.s32.totalorder %s74, 1
      %p170 = por %p168, %p169
      %p171 = scmp.ne.s32.totalorder %s160, %s161
      %p172 = scmp.eq.s32.totalorder %s74, 0
      %p173 = por %p171, %p172
      %p174 = scmp.ne.s32.totalorder %s160, %s161
      %p175 = scmp.eq.s32.totalorder %s75, 1
      %p176 = por %p174, %p175
      %p178 = scmp.ne.s32.totalorder %s161, %s177
      %p179 = scmp.eq.s32.totalorder %s75, 0
      %p180 = por %p178, %p179
      %s181 = ssub.s32 %s69, %s76
      %p182 = scmp.eq.s32.totalorder %s181, 0
      %s184 = sadd.s32 %s183, 1
      %s185 = scalar_select %p182, %s183, %s184
      %p188 = pneg %p182
      %p189 = scmp.eq.s32.totalorder %s69, 1
      %p190 = por %p188, %p189
      %p191 = scmp.ne.s32.totalorder %s183, %s186
      %p192 = scmp.eq.s32.totalorder %s69, 0
      %p193 = por %p191, %p192
      %p194 = scmp.ne.s32.totalorder %s183, %s186
      %p195 = scmp.eq.s32.totalorder %s74, 1
      %p196 = por %p194, %p195
      %p197 = scmp.ne.s32.totalorder %s186, %s187
      %p198 = scmp.eq.s32.totalorder %s74, 0
      %p199 = por %p197, %p198
      %p200 = scmp.ne.s32.totalorder %s186, %s187
      %p201 = scmp.eq.s32.totalorder %s75, 1
      %p202 = por %p200, %p201
      %p204 = scmp.ne.s32.totalorder %s187, %s203
      %p205 = scmp.eq.s32.totalorder %s75, 0
      %p206 = por %p204, %p205
      %s208 = sadd.s32 %s207, 1
      %p211 = scmp.eq.s32.totalorder %s69, 1
      %p212 = scmp.ne.s32.totalorder %s207, %s209
      %p213 = scmp.eq.s32.totalorder %s69, 0
      %p214 = por %p212, %p213
      %p215 = scmp.ne.s32.totalorder %s207, %s209
      %p216 = scmp.eq.s32.totalorder %s74, 1
      %p217 = por %p215, %p216
      %p218 = scmp.ne.s32.totalorder %s209, %s210
      %p219 = scmp.eq.s32.totalorder %s74, 0
      %p220 = por %p218, %p219
      %p221 = scmp.ne.s32.totalorder %s209, %s210
      %p222 = scmp.eq.s32.totalorder %s75, 1
      %p223 = por %p221, %p222
      %p225 = scmp.ne.s32.totalorder %s210, %s224
      %p226 = scmp.eq.s32.totalorder %s75, 0
      %p227 = por %p225, %p226
      %s229 = sadd.s32 %s228, 1
      %p232 = scmp.eq.s32.totalorder %s69, 1
      %p233 = scmp.ne.s32.totalorder %s228, %s230
      %p234 = scmp.eq.s32.totalorder %s69, 0
      %p235 = por %p233, %p234
      %p236 = scmp.ne.s32.totalorder %s228, %s230
      %p237 = scmp.eq.s32.totalorder %s74, 1
      %p238 = por %p236, %p237
      %p239 = scmp.ne.s32.totalorder %s230, %s231
      %p240 = scmp.eq.s32.totalorder %s74, 0
      %p241 = por %p239, %p240
      %p242 = scmp.ne.s32.totalorder %s230, %s231
      %p243 = scmp.eq.s32.totalorder %s75, 1
      %p244 = por %p242, %p243
      %p246 = scmp.ne.s32.totalorder %s231, %s245
      %p247 = scmp.eq.s32.totalorder %s75, 0
      %p248 = por %p246, %p247
      %s250 = sadd.s32 %s249, 1
      %p253 = scmp.eq.s32.totalorder %s69, 1
      %p254 = scmp.ne.s32.totalorder %s249, %s251
      %p255 = scmp.eq.s32.totalorder %s69, 0
      %p256 = por %p254, %p255
      %p257 = scmp.ne.s32.totalorder %s249, %s251
      %p258 = scmp.eq.s32.totalorder %s74, 1
      %p259 = por %p257, %p258
      %p260 = scmp.ne.s32.totalorder %s251, %s252
      %p261 = scmp.eq.s32.totalorder %s74, 0
      %p262 = por %p260, %p261
      %p263 = scmp.ne.s32.totalorder %s251, %s252
      %p264 = scmp.eq.s32.totalorder %s75, 1
      %p265 = por %p263, %p264
      %p267 = scmp.ne.s32.totalorder %s252, %s266
      %p268 = scmp.eq.s32.totalorder %s75, 0
      %p269 = por %p267, %p268
      %s271 = sadd.s32 %s270, 1
      %p274 = scmp.eq.s32.totalorder %s69, 1
      %p275 = scmp.ne.s32.totalorder %s270, %s272
      %p276 = scmp.eq.s32.totalorder %s69, 0
      %p277 = por %p275, %p276
      %p278 = scmp.ne.s32.totalorder %s270, %s272
      %p279 = scmp.eq.s32.totalorder %s74, 1
      %p280 = por %p278, %p279
      %p281 = scmp.ne.s32.totalorder %s272, %s273
      %p282 = scmp.eq.s32.totalorder %s74, 0
      %p283 = por %p281, %p282
      %p284 = scmp.ne.s32.totalorder %s272, %s273
      %p285 = scmp.eq.s32.totalorder %s75, 1
      %p286 = por %p284, %p285
      %p288 = scmp.ne.s32.totalorder %s273, %s287
      %p289 = scmp.eq.s32.totalorder %s75, 0
      %p290 = por %p288, %p289
      %s292 = sadd.s32 %s291, 1
      %p295 = scmp.eq.s32.totalorder %s69, 1
      %p296 = scmp.ne.s32.totalorder %s291, %s293
      %p297 = scmp.eq.s32.totalorder %s69, 0
      %p298 = por %p296, %p297
      %p299 = scmp.ne.s32.totalorder %s291, %s293
      %p300 = scmp.eq.s32.totalorder %s74, 1
      %p301 = por %p299, %p300
      %p302 = scmp.ne.s32.totalorder %s293, %s294
      %p303 = scmp.eq.s32.totalorder %s74, 0
      %p304 = por %p302, %p303
      %p305 = scmp.ne.s32.totalorder %s293, %s294
      %p306 = scmp.eq.s32.totalorder %s75, 1
      %p307 = por %p305, %p306
      %p309 = scmp.ne.s32.totalorder %s294, %s308
      %p310 = scmp.eq.s32.totalorder %s75, 0
      %p311 = por %p309, %p310
      %s313 = sadd.s32 %s312, 1
      %p316 = scmp.eq.s32.totalorder %s69, 1
      %p317 = scmp.ne.s32.totalorder %s312, %s314
      %p318 = scmp.eq.s32.totalorder %s69, 0
      %p319 = por %p317, %p318
      %p320 = scmp.ne.s32.totalorder %s312, %s314
      %p321 = scmp.eq.s32.totalorder %s74, 1
      %p322 = por %p320, %p321
      %p323 = scmp.ne.s32.totalorder %s314, %s315
      %p324 = scmp.eq.s32.totalorder %s74, 0
      %p325 = por %p323, %p324
      %p326 = scmp.ne.s32.totalorder %s314, %s315
      %p327 = scmp.eq.s32.totalorder %s75, 1
      %p328 = por %p326, %p327
      %p330 = scmp.ne.s32.totalorder %s315, %s329
      %p331 = scmp.eq.s32.totalorder %s75, 0
      %p332 = por %p330, %p331
      %s334 = sadd.s32 %s333, 1
      %p337 = scmp.eq.s32.totalorder %s69, 1
      %p338 = scmp.ne.s32.totalorder %s333, %s335
      %p339 = scmp.eq.s32.totalorder %s69, 0
      %p340 = por %p338, %p339
      %p341 = scmp.ne.s32.totalorder %s333, %s335
      %p342 = scmp.eq.s32.totalorder %s74, 1
      %p343 = por %p341, %p342
      %p344 = scmp.ne.s32.totalorder %s335, %s336
      %p345 = scmp.eq.s32.totalorder %s74, 0
      %p346 = por %p344, %p345
      %p347 = scmp.ne.s32.totalorder %s335, %s336
      %p348 = scmp.eq.s32.totalorder %s75, 1
      %p349 = por %p347, %p348
      %p351 = scmp.ne.s32.totalorder %s336, %s350
      %p352 = scmp.eq.s32.totalorder %s75, 0
      %p353 = por %p351, %p352
      %s355 = sadd.s32 %s354, 1
      %p358 = scmp.eq.s32.totalorder %s69, 1
      %p359 = scmp.ne.s32.totalorder %s354, %s356
      %p360 = scmp.eq.s32.totalorder %s69, 0
      %p361 = por %p359, %p360
      %p362 = scmp.ne.s32.totalorder %s354, %s356
      %p363 = scmp.eq.s32.totalorder %s74, 1
      %p364 = por %p362, %p363
      %p365 = scmp.ne.s32.totalorder %s356, %s357
      %p366 = scmp.eq.s32.totalorder %s74, 0
      %p367 = por %p365, %p366
      %p368 = scmp.ne.s32.totalorder %s356, %s357
      %p369 = scmp.eq.s32.totalorder %s75, 1
      %p370 = por %p368, %p369
      %p372 = scmp.ne.s32.totalorder %s357, %s371
      %p373 = scmp.eq.s32.totalorder %s75, 0
      %p374 = por %p372, %p373
      %s376 = sadd.s32 %s375, 1
      %p379 = scmp.eq.s32.totalorder %s69, 1
      %p380 = scmp.ne.s32.totalorder %s375, %s377
      %p381 = scmp.eq.s32.totalorder %s69, 0
      %p382 = por %p380, %p381
      %p383 = scmp.ne.s32.totalorder %s375, %s377
      %p384 = scmp.eq.s32.totalorder %s74, 1
      %p385 = por %p383, %p384
      %p386 = scmp.ne.s32.totalorder %s377, %s378
      %p387 = scmp.eq.s32.totalorder %s74, 0
      %p388 = por %p386, %p387
      %p389 = scmp.ne.s32.totalorder %s377, %s378
      %p390 = scmp.eq.s32.totalorder %s75, 1
      %p391 = por %p389, %p390
      %p393 = scmp.ne.s32.totalorder %s378, %s392
      %p394 = scmp.eq.s32.totalorder %s75, 0
      %p395 = por %p393, %p394
      %s397 = sadd.s32 %s396, 1
      %p400 = scmp.eq.s32.totalorder %s69, 1
      %p401 = scmp.ne.s32.totalorder %s396, %s398
      %p402 = scmp.eq.s32.totalorder %s69, 0
      %p403 = por %p401, %p402
      %p404 = scmp.ne.s32.totalorder %s396, %s398
      %p405 = scmp.eq.s32.totalorder %s74, 1
      %p406 = por %p404, %p405
      %p407 = scmp.ne.s32.totalorder %s398, %s399
      %p408 = scmp.eq.s32.totalorder %s74, 0
      %p409 = por %p407, %p408
      %p410 = scmp.ne.s32.totalorder %s398, %s399
      %p411 = scmp.eq.s32.totalorder %s75, 1
      %p412 = por %p410, %p411
      %p414 = scmp.ne.s32.totalorder %s399, %s413
      %p415 = scmp.eq.s32.totalorder %s75, 0
      %p416 = por %p414, %p415
      %s418 = sadd.s32 %s417, 1
      %p421 = scmp.eq.s32.totalorder %s69, 1
      %p422 = scmp.ne.s32.totalorder %s417, %s419
      %p423 = scmp.eq.s32.totalorder %s69, 0
      %p424 = por %p422, %p423
      %p425 = scmp.ne.s32.totalorder %s417, %s419
      %p426 = scmp.eq.s32.totalorder %s74, 1
      %p427 = por %p425, %p426
      %p428 = scmp.ne.s32.totalorder %s419, %s420
      %p429 = scmp.eq.s32.totalorder %s74, 0
      %p430 = por %p428, %p429
      %p431 = scmp.ne.s32.totalorder %s419, %s420
      %p432 = scmp.eq.s32.totalorder %s75, 1
      %p433 = por %p431, %p432
      %p435 = scmp.ne.s32.totalorder %s420, %s434
      %p436 = scmp.eq.s32.totalorder %s75, 0
      %p437 = por %p435, %p436
      %s439 = sadd.s32 %s438, 1
      %p442 = scmp.eq.s32.totalorder %s69, 1
      %p443 = scmp.ne.s32.totalorder %s438, %s440
      %p444 = scmp.eq.s32.totalorder %s69, 0
      %p445 = por %p443, %p444
      %p446 = scmp.ne.s32.totalorder %s438, %s440
      %p447 = scmp.eq.s32.totalorder %s74, 1
      %p448 = por %p446, %p447
      %p449 = scmp.ne.s32.totalorder %s440, %s441
      %p450 = scmp.eq.s32.totalorder %s74, 0
      %p451 = por %p449, %p450
      %p452 = scmp.ne.s32.totalorder %s440, %s441
      %p453 = scmp.eq.s32.totalorder %s75, 1
      %p454 = por %p452, %p453
      %p456 = scmp.ne.s32.totalorder %s441, %s455
      %p457 = scmp.eq.s32.totalorder %s75, 0
      %p458 = por %p456, %p457
      %s460 = sadd.s32 %s459, 1
      %p463 = scmp.eq.s32.totalorder %s69, 1
      %p464 = scmp.ne.s32.totalorder %s459, %s461
      %p465 = scmp.eq.s32.totalorder %s69, 0
      %p466 = por %p464, %p465
      %p467 = scmp.ne.s32.totalorder %s459, %s461
      %p468 = scmp.eq.s32.totalorder %s74, 1
      %p469 = por %p467, %p468
      %p470 = scmp.ne.s32.totalorder %s461, %s462
      %p471 = scmp.eq.s32.totalorder %s74, 0
      %p472 = por %p470, %p471
      %p473 = scmp.ne.s32.totalorder %s461, %s462
      %p474 = scmp.eq.s32.totalorder %s75, 1
      %p475 = por %p473, %p474
      %p477 = scmp.ne.s32.totalorder %s462, %s476
      %p478 = scmp.eq.s32.totalorder %s75, 0
      %p479 = por %p477, %p478
      %s481 = sadd.s32 %s480, 1
      %p484 = scmp.eq.s32.totalorder %s69, 1
      %p485 = scmp.ne.s32.totalorder %s480, %s482
      %p486 = scmp.eq.s32.totalorder %s69, 0
      %p487 = por %p485, %p486
      %p488 = scmp.ne.s32.totalorder %s480, %s482
      %p489 = scmp.eq.s32.totalorder %s74, 1
      %p490 = por %p488, %p489
      %p491 = scmp.ne.s32.totalorder %s482, %s483
      %p492 = scmp.eq.s32.totalorder %s74, 0
      %p493 = por %p491, %p492
      %p494 = scmp.ne.s32.totalorder %s482, %s483
      %p495 = scmp.eq.s32.totalorder %s75, 1
      %p496 = por %p494, %p495
      %p498 = scmp.ne.s32.totalorder %s483, %s497
      %p499 = scmp.eq.s32.totalorder %s75, 0
      %p500 = por %p498, %p499
      %s502 = sadd.s32 %s501, 1
      %p505 = scmp.eq.s32.totalorder %s69, 1
      %p506 = scmp.ne.s32.totalorder %s501, %s503
      %p507 = scmp.eq.s32.totalorder %s69, 0
      %p508 = por %p506, %p507
      %p509 = scmp.ne.s32.totalorder %s501, %s503
      %p510 = scmp.eq.s32.totalorder %s74, 1
      %p511 = por %p509, %p510
      %p512 = scmp.ne.s32.totalorder %s503, %s504
      %p513 = scmp.eq.s32.totalorder %s74, 0
      %p514 = por %p512, %p513
      %p515 = scmp.ne.s32.totalorder %s503, %s504
      %p516 = scmp.eq.s32.totalorder %s75, 1
      %p517 = por %p515, %p516
      %p519 = scmp.ne.s32.totalorder %s504, %s518
      %p520 = scmp.eq.s32.totalorder %s75, 0
      %p521 = por %p519, %p520
      %s523 = sadd.s32 %s522, 1
      %p526 = scmp.eq.s32.totalorder %s69, 1
      %p527 = scmp.ne.s32.totalorder %s522, %s524
      %p528 = scmp.eq.s32.totalorder %s69, 0
      %p529 = por %p527, %p528
      %p530 = scmp.ne.s32.totalorder %s522, %s524
      %p531 = scmp.eq.s32.totalorder %s74, 1
      %p532 = por %p530, %p531
      %p533 = scmp.ne.s32.totalorder %s524, %s525
      %p534 = scmp.eq.s32.totalorder %s74, 0
      %p535 = por %p533, %p534
      %p536 = scmp.ne.s32.totalorder %s524, %s525
      %p537 = scmp.eq.s32.totalorder %s75, 1
      %p538 = por %p536, %p537
      %p540 = scmp.ne.s32.totalorder %s525, %s539
      %p541 = scmp.eq.s32.totalorder %s75, 0
      %p542 = por %p540, %p541
      %s544 = sadd.s32 %s543, 1
      %p547 = scmp.eq.s32.totalorder %s69, 1
      %p548 = scmp.ne.s32.totalorder %s543, %s545
      %p549 = scmp.eq.s32.totalorder %s69, 0
      %p550 = por %p548, %p549
      %p551 = scmp.ne.s32.totalorder %s543, %s545
      %p552 = scmp.eq.s32.totalorder %s74, 1
      %p553 = por %p551, %p552
      %p554 = scmp.ne.s32.totalorder %s545, %s546
      %p555 = scmp.eq.s32.totalorder %s74, 0
      %p556 = por %p554, %p555
      %p557 = scmp.ne.s32.totalorder %s545, %s546
      %p558 = scmp.eq.s32.totalorder %s75, 1
      %p559 = por %p557, %p558
      %p561 = scmp.ne.s32.totalorder %s546, %s560
      %p562 = scmp.eq.s32.totalorder %s75, 0
      %p563 = por %p561, %p562
      %s565 = sadd.s32 %s564, 1
      %p568 = scmp.eq.s32.totalorder %s69, 1
      %p569 = scmp.ne.s32.totalorder %s564, %s566
      %p570 = scmp.eq.s32.totalorder %s69, 0
      %p571 = por %p569, %p570
      %p572 = scmp.ne.s32.totalorder %s564, %s566
      %p573 = scmp.eq.s32.totalorder %s74, 1
      %p574 = por %p572, %p573
      %p575 = scmp.ne.s32.totalorder %s566, %s567
      %p576 = scmp.eq.s32.totalorder %s74, 0
      %p577 = por %p575, %p576
      %p578 = scmp.ne.s32.totalorder %s566, %s567
      %p579 = scmp.eq.s32.totalorder %s75, 1
      %p580 = por %p578, %p579
      %p582 = scmp.ne.s32.totalorder %s567, %s581
      %p583 = scmp.eq.s32.totalorder %s75, 0
      %p584 = por %p582, %p583
      %s586 = sadd.s32 %s585, 1
      %p589 = scmp.eq.s32.totalorder %s69, 1
      %p590 = scmp.ne.s32.totalorder %s585, %s587
      %p591 = scmp.eq.s32.totalorder %s69, 0
      %p592 = por %p590, %p591
      %p593 = scmp.ne.s32.totalorder %s585, %s587
      %p594 = scmp.eq.s32.totalorder %s74, 1
      %p595 = por %p593, %p594
      %p596 = scmp.ne.s32.totalorder %s587, %s588
      %p597 = scmp.eq.s32.totalorder %s74, 0
      %p598 = por %p596, %p597
      %p599 = scmp.ne.s32.totalorder %s587, %s588
      %p600 = scmp.eq.s32.totalorder %s75, 1
      %p601 = por %p599, %p600
      %p603 = scmp.ne.s32.totalorder %s588, %s602
      %p604 = scmp.eq.s32.totalorder %s75, 0
      %p605 = por %p603, %p604
      %s607 = sadd.s32 %s606, 1
      %p610 = scmp.eq.s32.totalorder %s69, 1
      %p611 = scmp.ne.s32.totalorder %s606, %s608
      %p612 = scmp.eq.s32.totalorder %s69, 0
      %p613 = por %p611, %p612
      %p614 = scmp.ne.s32.totalorder %s606, %s608
      %p615 = scmp.eq.s32.totalorder %s74, 1
      %p616 = por %p614, %p615
      %p617 = scmp.ne.s32.totalorder %s608, %s609
      %p618 = scmp.eq.s32.totalorder %s74, 0
      %p619 = por %p617, %p618
      %p620 = scmp.ne.s32.totalorder %s608, %s609
      %p621 = scmp.eq.s32.totalorder %s75, 1
      %p622 = por %p620, %p621
      %p624 = scmp.ne.s32.totalorder %s609, %s623
      %p625 = scmp.eq.s32.totalorder %s75, 0
      %p626 = por %p624, %p625
      %s628 = sadd.s32 %s627, 1
      %p631 = scmp.eq.s32.totalorder %s69, 1
      %p632 = scmp.ne.s32.totalorder %s627, %s629
      %p633 = scmp.eq.s32.totalorder %s69, 0
      %p634 = por %p632, %p633
      %p635 = scmp.ne.s32.totalorder %s627, %s629
      %p636 = scmp.eq.s32.totalorder %s74, 1
      %p637 = por %p635, %p636
      %p638 = scmp.ne.s32.totalorder %s629, %s630
      %p639 = scmp.eq.s32.totalorder %s74, 0
      %p640 = por %p638, %p639
      %p641 = scmp.ne.s32.totalorder %s629, %s630
      %p642 = scmp.eq.s32.totalorder %s75, 1
      %p643 = por %p641, %p642
      %p645 = scmp.ne.s32.totalorder %s630, %s644
      %p646 = scmp.eq.s32.totalorder %s75, 0
      %p647 = por %p645, %p646
      %s649 = sadd.s32 %s648, 1
      %p652 = scmp.eq.s32.totalorder %s69, 1
      %p653 = scmp.ne.s32.totalorder %s648, %s650
      %p654 = scmp.eq.s32.totalorder %s69, 0
      %p655 = por %p653, %p654
      %p656 = scmp.ne.s32.totalorder %s648, %s650
      %p657 = scmp.eq.s32.totalorder %s74, 1
      %p658 = por %p656, %p657
      %p659 = scmp.ne.s32.totalorder %s650, %s651
      %p660 = scmp.eq.s32.totalorder %s74, 0
      %p661 = por %p659, %p660
      %p662 = scmp.ne.s32.totalorder %s650, %s651
      %p663 = scmp.eq.s32.totalorder %s75, 1
      %p664 = por %p662, %p663
      %p666 = scmp.ne.s32.totalorder %s651, %s665
      %p667 = scmp.eq.s32.totalorder %s75, 0
      %p668 = por %p666, %p667
      %s670 = sadd.s32 %s669, 1
      %p673 = scmp.eq.s32.totalorder %s69, 1
      %p674 = scmp.ne.s32.totalorder %s669, %s671
      %p675 = scmp.eq.s32.totalorder %s69, 0
      %p676 = por %p674, %p675
      %p677 = scmp.ne.s32.totalorder %s669, %s671
      %p678 = scmp.eq.s32.totalorder %s74, 1
      %p679 = por %p677, %p678
      %p680 = scmp.ne.s32.totalorder %s671, %s672
      %p681 = scmp.eq.s32.totalorder %s74, 0
      %p682 = por %p680, %p681
      %p683 = scmp.ne.s32.totalorder %s671, %s672
      %p684 = scmp.eq.s32.totalorder %s75, 1
      %p685 = por %p683, %p684
      %p687 = scmp.ne.s32.totalorder %s672, %s686
      %p688 = scmp.eq.s32.totalorder %s75, 0
      %p689 = por %p687, %p688
      %s691 = sadd.s32 %s690, 1
      %p694 = scmp.eq.s32.totalorder %s69, 1
      %p695 = scmp.ne.s32.totalorder %s690, %s692
      %p696 = scmp.eq.s32.totalorder %s69, 0
      %p697 = por %p695, %p696
      %p698 = scmp.ne.s32.totalorder %s690, %s692
      %p699 = scmp.eq.s32.totalorder %s74, 1
      %p700 = por %p698, %p699
      %p701 = scmp.ne.s32.totalorder %s692, %s693
      %p702 = scmp.eq.s32.totalorder %s74, 0
      %p703 = por %p701, %p702
      %p704 = scmp.ne.s32.totalorder %s692, %s693
      %p705 = scmp.eq.s32.totalorder %s75, 1
      %p706 = por %p704, %p705
      %p708 = scmp.ne.s32.totalorder %s693, %s707
      %p709 = scmp.eq.s32.totalorder %s75, 0
      %p710 = por %p708, %p709
      %s711 = ssub.s32 %s69, %s76
      %p712 = scmp.eq.s32.totalorder %s711, 0
      %s714 = sadd.s32 %s713, 1
      %s715 = scalar_select %p712, %s713, %s714
      %p718 = pneg %p712
      %p719 = scmp.eq.s32.totalorder %s69, 1
      %p720 = por %p718, %p719
      %p721 = scmp.ne.s32.totalorder %s713, %s716
      %p722 = scmp.eq.s32.totalorder %s69, 0
      %p723 = por %p721, %p722
      %p724 = scmp.ne.s32.totalorder %s713, %s716
      %p725 = scmp.eq.s32.totalorder %s74, 1
      %p726 = por %p724, %p725
      %p727 = scmp.ne.s32.totalorder %s716, %s717
      %p728 = scmp.eq.s32.totalorder %s74, 0
      %p729 = por %p727, %p728
      %p730 = scmp.ne.s32.totalorder %s716, %s717
      %p731 = scmp.eq.s32.totalorder %s75, 1
      %p732 = por %p730, %p731
      %p734 = scmp.ne.s32.totalorder %s717, %s733
      %p735 = scmp.eq.s32.totalorder %s75, 0
      %p736 = por %p734, %p735
      %p737 = scmp.le.s32.totalorder 1, %s69
      %p738 = scmp.lt.s32.totalorder %s69, 3
      %p739 = pnand %p737, %p738
      %p740 = pneg %p739
      // Predicated region
      $region9: #{transformer_decoder_layer.1} parent=5 // pred_check
        _
      $region10: #{transformer_decoder_layer.1} parent=5 // pred_check_branch
        %742 = sbr.rel (%p739) target = $region12
      $region11: #{transformer_decoder_layer.1} parent=5 // pred_region
        %s743 = ssub.s32 %s69, 1
        // Predicated region
        $region13: #{transformer_decoder_layer.1} parent=11 // pred_check
          %p744 = pneg %p220
        $region14: #{transformer_decoder_layer.1} parent=11 // pred_check_branch
          %746 = sbr.rel (%p744) target = $region16
        $region15: #{transformer_decoder_layer.1} parent=11 // pred_region
          _
        $region16: #{transformer_decoder_layer.1} parent=11 // pred_fallthru
          _
        // Predicated region
        $region17: #{transformer_decoder_layer.1} parent=11 // pred_check
          %p747 = pneg %p241
        $region18: #{transformer_decoder_layer.1} parent=11 // pred_check_branch
          %749 = sbr.rel (%p747) target = $region20
        $region19: #{transformer_decoder_layer.1} parent=11 // pred_region
          _
        $region20: #{transformer_decoder_layer.1} parent=11 // pred_fallthru
          _
        // Predicated region
        $region21: #{transformer_decoder_layer.1} parent=11 // pred_check
          %p750 = pneg %p262
        $region22: #{transformer_decoder_layer.1} parent=11 // pred_check_branch
          %752 = sbr.rel (%p750) target = $region24
        $region23: #{transformer_decoder_layer.1} parent=11 // pred_region
          _
        $region24: #{transformer_decoder_layer.1} parent=11 // pred_fallthru
          _
        // Predicated region
        $region25: #{transformer_decoder_layer.1} parent=11 // pred_check
          %p753 = pneg %p283
        $region26: #{transformer_decoder_layer.1} parent=11 // pred_check_branch
          %755 = sbr.rel (%p753) target = $region28
        $region27: #{transformer_decoder_layer.1} parent=11 // pred_region
          _
        $region28: #{transformer_decoder_layer.1} parent=11 // pred_fallthru
          _
        // Predicated region
        $region29: #{transformer_decoder_layer.1} parent=11 // pred_check
          %p756 = pneg %p304
        $region30: #{transformer_decoder_layer.1} parent=11 // pred_check_branch
          %758 = sbr.rel (%p756) target = $region32
        $region31: #{transformer_decoder_layer.1} parent=11 // pred_region
          _
        $region32: #{transformer_decoder_layer.1} parent=11 // pred_fallthru
          _
        // Predicated region
        $region33: #{transformer_decoder_layer.1} parent=11 // pred_check
          %p759 = pneg %p325
        $region34: #{transformer_decoder_layer.1} parent=11 // pred_check_branch
          %761 = sbr.rel (%p759) target = $region36
        $region35: #{transformer_decoder_layer.1} parent=11 // pred_region
          _
        $region36: #{transformer_decoder_layer.1} parent=11 // pred_fallthru
          _
        // Predicated region
        $region37: #{transformer_decoder_layer.1} parent=11 // pred_check
          %p762 = pneg %p346
        $region38: #{transformer_decoder_layer.1} parent=11 // pred_check_branch
          %764 = sbr.rel (%p762) target = $region40
        $region39: #{transformer_decoder_layer.1} parent=11 // pred_region
          _
        $region40: #{transformer_decoder_layer.1} parent=11 // pred_fallthru
          _
        // Predicated region
        $region41: #{transformer_decoder_layer.1} parent=11 // pred_check
          %p765 = pneg %p367
        $region42: #{transformer_decoder_layer.1} parent=11 // pred_check_branch
          %767 = sbr.rel (%p765) target = $region44
        $region43: #{transformer_decoder_layer.1} parent=11 // pred_region
          %s769 = ssub.s32 16, 16
          %770 = vsyncadd [#allocation3], %s769
          %s772 = sshll.u32 [#allocation2], 4
          %s773 = int_to_ptr.vmem [resolvable:$true] %s772
          %775 = dma.hbm_to_vmem [thread:$0]  %s25, 16, %s773, [#allocation3]
        $region44: #{transformer_decoder_layer.1} parent=11 // pred_fallthru
          _
        // Predicated region
        $region45: #{transformer_decoder_layer.1} parent=11 // pred_check
          %p776 = pneg %p388
        $region46: #{transformer_decoder_layer.1} parent=11 // pred_check_branch
          %778 = sbr.rel (%p776) target = $region48
        $region47: #{transformer_decoder_layer.1} parent=11 // pred_region
          _
        $region48: #{transformer_decoder_layer.1} parent=11 // pred_fallthru
          _
        // Predicated region
        $region49: #{transformer_decoder_layer.1} parent=11 // pred_check
          %p779 = pneg %p409
        $region50: #{transformer_decoder_layer.1} parent=11 // pred_check_branch
          %781 = sbr.rel (%p779) target = $region52
        $region51: #{transformer_decoder_layer.1} parent=11 // pred_region
          %s783 = ssub.s32 16, 16
          %784 = vsyncadd [#allocation5], %s783
          %s786 = sshll.u32 [#allocation4], 4
          %s787 = int_to_ptr.vmem [resolvable:$true] %s786
          %789 = dma.hbm_to_vmem [thread:$0]  %s29, 16, %s787, [#allocation5]
        $region52: #{transformer_decoder_layer.1} parent=11 // pred_fallthru
          _
        // Predicated region
        $region53: #{transformer_decoder_layer.1} parent=11 // pred_check
          %p790 = pneg %p430
        $region54: #{transformer_decoder_layer.1} parent=11 // pred_check_branch
          %792 = sbr.rel (%p790) target = $region56
        $region55: #{transformer_decoder_layer.1} parent=11 // pred_region
          _
        $region56: #{transformer_decoder_layer.1} parent=11 // pred_fallthru
          _
        // Predicated region
        $region57: #{transformer_decoder_layer.1} parent=11 // pred_check
          %p793 = pneg %p451
        $region58: #{transformer_decoder_layer.1} parent=11 // pred_check_branch
          %795 = sbr.rel (%p793) target = $region60
        $region59: #{transformer_decoder_layer.1} parent=11 // pred_region
          %s797 = ssub.s32 16, 16
          %798 = vsyncadd [#allocation5], %s797
          %s800 = sshll.u32 [#allocation6], 4
          %s801 = int_to_ptr.vmem [resolvable:$true] %s800
          %803 = dma.hbm_to_vmem [thread:$0]  %s33, 16, %s801, [#allocation5]
        $region60: #{transformer_decoder_layer.1} parent=11 // pred_fallthru
          _
        // Predicated region
        $region61: #{transformer_decoder_layer.1} parent=11 // pred_check
          %p804 = pneg %p472
        $region62: #{transformer_decoder_layer.1} parent=11 // pred_check_branch
          %806 = sbr.rel (%p804) target = $region64
        $region63: #{transformer_decoder_layer.1} parent=11 // pred_region
          _
        $region64: #{transformer_decoder_layer.1} parent=11 // pred_fallthru
          _
        // Predicated region
        $region65: #{transformer_decoder_layer.1} parent=11 // pred_check
          %p807 = pneg %p493
        $region66: #{transformer_decoder_layer.1} parent=11 // pred_check_branch
          %809 = sbr.rel (%p807) target = $region68
        $region67: #{transformer_decoder_layer.1} parent=11 // pred_region
          %s811 = ssub.s32 16, 16
          %812 = vsyncadd [#allocation8], %s811
          %s814 = sshll.u32 [#allocation7], 4
          %s815 = int_to_ptr.vmem [resolvable:$true] %s814
          %817 = dma.hbm_to_vmem [thread:$0]  %s37, 16, %s815, [#allocation8]
        $region68: #{transformer_decoder_layer.1} parent=11 // pred_fallthru
          _
        // Predicated region
        $region69: #{transformer_decoder_layer.1} parent=11 // pred_check
          %p818 = pneg %p514
        $region70: #{transformer_decoder_layer.1} parent=11 // pred_check_branch
          %820 = sbr.rel (%p818) target = $region72
        $region71: #{transformer_decoder_layer.1} parent=11 // pred_region
          _
        $region72: #{transformer_decoder_layer.1} parent=11 // pred_fallthru
          _
        // Predicated region
        $region73: #{transformer_decoder_layer.1} parent=11 // pred_check
          %p821 = pneg %p535
        $region74: #{transformer_decoder_layer.1} parent=11 // pred_check_branch
          %823 = sbr.rel (%p821) target = $region76
        $region75: #{transformer_decoder_layer.1} parent=11 // pred_region
          %s825 = ssub.s32 16, 16
          %826 = vsyncadd [#allocation8], %s825
          %s828 = sshll.u32 [#allocation9], 4
          %s829 = int_to_ptr.vmem [resolvable:$true] %s828
          %831 = dma.hbm_to_vmem [thread:$0]  %s41, 16, %s829, [#allocation8]
        $region76: #{transformer_decoder_layer.1} parent=11 // pred_fallthru
          _
        // Predicated region
        $region77: #{transformer_decoder_layer.1} parent=11 // pred_check
          %p832 = pneg %p556
        $region78: #{transformer_decoder_layer.1} parent=11 // pred_check_branch
          %834 = sbr.rel (%p832) target = $region80
        $region79: #{transformer_decoder_layer.1} parent=11 // pred_region
          _
        $region80: #{transformer_decoder_layer.1} parent=11 // pred_fallthru
          _
        // Predicated region
        $region81: #{transformer_decoder_layer.1} parent=11 // pred_check
          %p835 = pneg %p577
        $region82: #{transformer_decoder_layer.1} parent=11 // pred_check_branch
          %837 = sbr.rel (%p835) target = $region84
        $region83: #{transformer_decoder_layer.1} parent=11 // pred_region
          %s839 = ssub.s32 16, 16
          %840 = vsyncadd [#allocation11], %s839
          %s842 = sshll.u32 [#allocation10], 4
          %s843 = int_to_ptr.vmem [resolvable:$true] %s842
          %845 = dma.hbm_to_vmem [thread:$0]  %s45, 16, %s843, [#allocation11]
        $region84: #{transformer_decoder_layer.1} parent=11 // pred_fallthru
          _
        // Predicated region
        $region85: #{transformer_decoder_layer.1} parent=11 // pred_check
          %p846 = pneg %p598
        $region86: #{transformer_decoder_layer.1} parent=11 // pred_check_branch
          %848 = sbr.rel (%p846) target = $region88
        $region87: #{transformer_decoder_layer.1} parent=11 // pred_region
          _
        $region88: #{transformer_decoder_layer.1} parent=11 // pred_fallthru
          _
        // Predicated region
        $region89: #{transformer_decoder_layer.1} parent=11 // pred_check
          %p849 = pneg %p619
        $region90: #{transformer_decoder_layer.1} parent=11 // pred_check_branch
          %851 = sbr.rel (%p849) target = $region92
        $region91: #{transformer_decoder_layer.1} parent=11 // pred_region
          _
        $region92: #{transformer_decoder_layer.1} parent=11 // pred_fallthru
          _
        // Predicated region
        $region93: #{transformer_decoder_layer.1} parent=11 // pred_check
          %p852 = pneg %p640
        $region94: #{transformer_decoder_layer.1} parent=11 // pred_check_branch
          %854 = sbr.rel (%p852) target = $region96
        $region95: #{transformer_decoder_layer.1} parent=11 // pred_region
          _
        $region96: #{transformer_decoder_layer.1} parent=11 // pred_fallthru
          _
        // Predicated region
        $region97: #{transformer_decoder_layer.1} parent=11 // pred_check
          %p855 = pneg %p661
        $region98: #{transformer_decoder_layer.1} parent=11 // pred_check_branch
          %857 = sbr.rel (%p855) target = $region100
        $region99: #{transformer_decoder_layer.1} parent=11 // pred_region
          _
        $region100: #{transformer_decoder_layer.1} parent=11 // pred_fallthru
          _
        // Predicated region
        $region101: #{transformer_decoder_layer.1} parent=11 // pred_check
          %p858 = pneg %p682
        $region102: #{transformer_decoder_layer.1} parent=11 // pred_check_branch
          %860 = sbr.rel (%p858) target = $region104
        $region103: #{transformer_decoder_layer.1} parent=11 // pred_region
          _
        $region104: #{transformer_decoder_layer.1} parent=11 // pred_fallthru
          _
        // Predicated region
        $region105: #{transformer_decoder_layer.1} parent=11 // pred_check
          %p861 = pneg %p703
        $region106: #{transformer_decoder_layer.1} parent=11 // pred_check_branch
          %863 = sbr.rel (%p861) target = $region108
        $region107: #{transformer_decoder_layer.1} parent=11 // pred_region
          _
        $region108: #{transformer_decoder_layer.1} parent=11 // pred_fallthru
          _
      $region12: #{transformer_decoder_layer.1} parent=5 // pred_fallthru
        _
      %p864 = scmp.lt.s32.totalorder %s69, 2
      // Predicated region
      $region109: #{transformer_decoder_layer.1} parent=5 // pred_check
        %p865 = pneg %p864
      $region110: #{transformer_decoder_layer.1} parent=5 // pred_check_branch
        %867 = sbr.rel (%p865) target = $region112
      $region111: #{transformer_decoder_layer.1} parent=5 // pred_region
        // Predicated region
        $region113: #{transformer_decoder_layer.1} parent=111 // pred_check
          %p868 = pneg %p89
        $region114: #{transformer_decoder_layer.1} parent=111 // pred_check_branch
          %870 = sbr.rel (%p868) target = $region116
        $region115: #{transformer_decoder_layer.1} parent=111 // pred_region
          %p871 = scmp.lt.s32.totalorder %s69, 1
          %s872 = scalar_select %p871, %s69, 1
          %s873 = smul.addr %s872, 8
          %s874 = scalar_lea.vmem %s1, %s873
        $region116: #{transformer_decoder_layer.1} parent=111 // pred_fallthru
          _
        // Predicated region
        $region117: #{transformer_decoder_layer.1} parent=111 // pred_check
          %p875 = pneg %p115
        $region118: #{transformer_decoder_layer.1} parent=111 // pred_check_branch
          %877 = sbr.rel (%p875) target = $region120
        $region119: #{transformer_decoder_layer.1} parent=111 // pred_region
          %p878 = scmp.lt.s32.totalorder %s69, 1
          %s879 = scalar_select %p878, %s69, 1
          %s880 = smul.addr %s879, 2
          %s881 = smul.addr %s880, 8
          %s882 = scalar_lea.vmem %s3, %s881
        $region120: #{transformer_decoder_layer.1} parent=111 // pred_fallthru
          _
        // Predicated region
        $region121: #{transformer_decoder_layer.1} parent=111 // pred_check
          %p883 = pneg %p141
        $region122: #{transformer_decoder_layer.1} parent=111 // pred_check_branch
          %885 = sbr.rel (%p883) target = $region124
        $region123: #{transformer_decoder_layer.1} parent=111 // pred_region
          %p886 = scmp.lt.s32.totalorder %s69, 1
          %s887 = scalar_select %p886, %s69, 1
          %s888 = smul.addr %s887, 8
          %s889 = scalar_lea.vmem %s5, %s888
        $region124: #{transformer_decoder_layer.1} parent=111 // pred_fallthru
          _
        // Predicated region
        $region125: #{transformer_decoder_layer.1} parent=111 // pred_check
          %p890 = pneg %p167
        $region126: #{transformer_decoder_layer.1} parent=111 // pred_check_branch
          %892 = sbr.rel (%p890) target = $region128
        $region127: #{transformer_decoder_layer.1} parent=111 // pred_region
          %p893 = scmp.lt.s32.totalorder %s69, 1
          %s894 = scalar_select %p893, %s69, 1
          %s895 = smul.addr %s894, 2
          %s896 = smul.addr %s895, 8
          %s897 = scalar_lea.vmem %s7, %s896
        $region128: #{transformer_decoder_layer.1} parent=111 // pred_fallthru
          _
        // Predicated region
        $region129: #{transformer_decoder_layer.1} parent=111 // pred_check
          %p898 = pneg %p193
        $region130: #{transformer_decoder_layer.1} parent=111 // pred_check_branch
          %900 = sbr.rel (%p898) target = $region132
        $region131: #{transformer_decoder_layer.1} parent=111 // pred_region
          %p901 = scmp.lt.s32.totalorder %s69, 1
          %s902 = scalar_select %p901, %s69, 1
          %s903 = scalar_lea.vmem %s9, %s902
        $region132: #{transformer_decoder_layer.1} parent=111 // pred_fallthru
          _
      $region112: #{transformer_decoder_layer.1} parent=5 // pred_fallthru
        _
      %p904 = scmp.le.s32.totalorder 1, %s69
      %p905 = scmp.lt.s32.totalorder %s69, 3
      %p906 = pnand %p904, %p905
      %p907 = pneg %p906
      // Predicated region
      $region133: #{transformer_decoder_layer.1} parent=5 // pred_check
        _
      $region134: #{transformer_decoder_layer.1} parent=5 // pred_check_branch
        %909 = sbr.rel (%p906) target = $region136
      $region135: #{transformer_decoder_layer.1} parent=5 // pred_region
        %s910 = ssub.s32 %s69, 1
        // Predicated region
        $region137: #{transformer_decoder_layer.1} parent=135 // pred_check
          %p911 = pneg %p367
        $region138: #{transformer_decoder_layer.1} parent=135 // pred_check_branch
          %913 = sbr.rel (%p911) target = $region140
        $region139: #{transformer_decoder_layer.1} parent=135 // pred_region
          %914 = dma.done [#allocation3], 16
        $region140: #{transformer_decoder_layer.1} parent=135 // pred_fallthru
          _
        // Predicated region
        $region141: #{transformer_decoder_layer.1} parent=135 // pred_check
          %p915 = pneg %p409
        $region142: #{transformer_decoder_layer.1} parent=135 // pred_check_branch
          %917 = sbr.rel (%p915) target = $region144
        $region143: #{transformer_decoder_layer.1} parent=135 // pred_region
          %918 = dma.done [#allocation5], 16
        $region144: #{transformer_decoder_layer.1} parent=135 // pred_fallthru
          _
        // Predicated region
        $region145: #{transformer_decoder_layer.1} parent=135 // pred_check
          %p919 = pneg %p451
        $region146: #{transformer_decoder_layer.1} parent=135 // pred_check_branch
          %921 = sbr.rel (%p919) target = $region148
        $region147: #{transformer_decoder_layer.1} parent=135 // pred_region
          %922 = dma.done [#allocation5], 16
        $region148: #{transformer_decoder_layer.1} parent=135 // pred_fallthru
          _
        // Predicated region
        $region149: #{transformer_decoder_layer.1} parent=135 // pred_check
          %p923 = pneg %p493
        $region150: #{transformer_decoder_layer.1} parent=135 // pred_check_branch
          %925 = sbr.rel (%p923) target = $region152
        $region151: #{transformer_decoder_layer.1} parent=135 // pred_region
          %926 = dma.done [#allocation8], 16
        $region152: #{transformer_decoder_layer.1} parent=135 // pred_fallthru
          _
        // Predicated region
        $region153: #{transformer_decoder_layer.1} parent=135 // pred_check
          %p927 = pneg %p535
        $region154: #{transformer_decoder_layer.1} parent=135 // pred_check_branch
          %929 = sbr.rel (%p927) target = $region156
        $region155: #{transformer_decoder_layer.1} parent=135 // pred_region
          %930 = dma.done [#allocation8], 16
        $region156: #{transformer_decoder_layer.1} parent=135 // pred_fallthru
          _
        // Predicated region
        $region157: #{transformer_decoder_layer.1} parent=135 // pred_check
          %p931 = pneg %p577
        $region158: #{transformer_decoder_layer.1} parent=135 // pred_check_branch
          %933 = sbr.rel (%p931) target = $region160
        $region159: #{transformer_decoder_layer.1} parent=135 // pred_region
          %934 = dma.done [#allocation11], 16
        $region160: #{transformer_decoder_layer.1} parent=135 // pred_fallthru
          _
        %p935 = scmp.lt.s32.totalorder %s74, 1
        %s936 = scalar_select %p935, %s74, 1
        %s937 = smul.addr %s936, 8
        %s938 = scalar_lea.vmem %s1, %s937
        %p939 = pneg %p95
        %p940 = pneg %p92
        %p941 = scmp.lt.s32.totalorder %s74, 1
        %s942 = scalar_select %p941, %s74, 1
        %s943 = smul.addr %s942, 2
        %s944 = smul.addr %s943, 8
        %s945 = scalar_lea.vmem %s3, %s944
        %p946 = pneg %p121
        %p947 = pneg %p118
        %p948 = scmp.lt.s32.totalorder %s74, 1
        %s949 = scalar_select %p948, %s74, 1
        %s950 = smul.addr %s949, 8
        %s951 = scalar_lea.vmem %s5, %s950
        %p952 = pneg %p147
        %p953 = pneg %p144
        %p954 = scmp.lt.s32.totalorder %s74, 1
        %s955 = scalar_select %p954, %s74, 1
        %s956 = smul.addr %s955, 2
        %s957 = smul.addr %s956, 8
        %s958 = scalar_lea.vmem %s7, %s957
        %p959 = pneg %p173
        %p960 = pneg %p170
        %p961 = scmp.lt.s32.totalorder %s74, 1
        %s962 = scalar_select %p961, %s74, 1
        %s963 = scalar_lea.vmem %s9, %s962
        %p964 = pneg %p199
        %p965 = pneg %p196
        %p966 = pneg %p220
        %p967 = pneg %p217
        %p968 = pneg %p241
        %p969 = pneg %p238
        %p970 = pneg %p262
        %p971 = pneg %p259
        %p972 = pneg %p283
        %p973 = pneg %p280
        %p974 = pneg %p304
        %p975 = pneg %p301
        %p976 = pneg %p325
        %p977 = pneg %p322
        %p978 = pneg %p346
        %p979 = pneg %p343
        %p980 = pneg %p367
        %p981 = pneg %p364
        %p982 = pneg %p388
        %p983 = pneg %p385
        %p984 = pneg %p409
        %p985 = pneg %p406
        %p986 = pneg %p430
        %p987 = pneg %p427
        %p988 = pneg %p451
        %p989 = pneg %p448
        %p990 = pneg %p472
        %p991 = pneg %p469
        %p992 = pneg %p493
        %p993 = pneg %p490
        %p994 = pneg %p514
        %p995 = pneg %p511
        %p996 = pneg %p535
        %p997 = pneg %p532
        %p998 = pneg %p556
        %p999 = pneg %p553
        %p1000 = pneg %p577
        %p1001 = pneg %p574
        %p1002 = pneg %p598
        %p1003 = pneg %p595
        %p1004 = pneg %p619
        %p1005 = pneg %p616
        %p1006 = pneg %p640
        %p1007 = pneg %p637
        %p1008 = pneg %p661
        %p1009 = pneg %p658
        %p1010 = pneg %p682
        %p1011 = pneg %p679
        %p1012 = pneg %p703
        %p1013 = pneg %p700
        %p1014 = pneg %p729
        %p1015 = pneg %p726
        %p1016 = scmp.lt.s32.totalorder %s74, 1
        %s1017 = scalar_select %p1016, %s74, 1
        %s1018 = smul.addr %s1017, 8
        %s1019 = scalar_lea.vmem %s59, %s1018
        %p1020 = scmp.lt.s32.totalorder %s74, 1
        %s1021 = scalar_select %p1020, %s74, 1
        %s1022 = smul.addr %s1021, 8
        %s1023 = scalar_lea.vmem %s1, %s1022
        %p1024 = scmp.lt.s32.totalorder %s74, 1
        %s1025 = scalar_select %p1024, %s74, 1
        %s1026 = smul.addr %s1025, 2
        %s1027 = smul.addr %s1026, 8
        %s1028 = scalar_lea.vmem %s3, %s1027
        %p1029 = scmp.lt.s32.totalorder %s74, 1
        %s1030 = scalar_select %p1029, %s74, 1
        %s1031 = smul.addr %s1030, 8
        %s1032 = scalar_lea.vmem %s5, %s1031
        %p1033 = scmp.lt.s32.totalorder %s74, 1
        %s1034 = scalar_select %p1033, %s74, 1
        %s1035 = smul.addr %s1034, 2
        %s1036 = smul.addr %s1035, 8
        %s1037 = scalar_lea.vmem %s7, %s1036
        %p1038 = scmp.lt.s32.totalorder %s74, 1
        %s1039 = scalar_select %p1038, %s74, 1
        %s1040 = scalar_lea.vmem %s9, %s1039
        %p1041 = scmp.lt.s32.totalorder %s74, 1
        %s1042 = scalar_select %p1041, %s74, 1
        %s1043 = smul.addr %s1042, 8
        %s1044 = scalar_lea.vmem %s59, %s1043
        %v1045 = vld [vmem:[%s1023] sm:$0xff]
        %v1046 = vld [vmem:[%s1028] sm:$0xff]
        %v1047 = vld [vmem:[%s1028 + $0x8] sm:$0xff]
        %v1048 = vld [vmem:[%s1032] sm:$0xff]
        %v1049 = vld [vmem:[%s1037] sm:$0xff]
        %v1050 = vld [vmem:[%s1037 + $0x8] sm:$0xff]
        %v1051 = vld [vmem:[%s1040] sm:$0x1]
        %v1052 = vadd.f32 %v1045, %v1048
        %v1053 = vld [vmem:[%s11] sm:$0xff]
        %v1054 = vld [vmem:[%s11 + $0x8] sm:$0xff]
        %v1055 = vld [vmem:[%s11 + $0x10] sm:$0xff]
        %v1056 = vld [vmem:[%s11 + $0x18] sm:$0xff]
        %v1057 = vld [vmem:[%s13] sm:$0x1]
        %v1059 = vlaneseq
        %v1060 = vshrl.u32 %v1059, 7
        %v1061 = vsub.s32 0, %v1060
        %v1062 = vrot.slane %v1057, %v1061
        %vm1064 = vcmask 261120
        %v1066 = vsel %vm1064, %v1052, 0
        %1068 = vmatprep.subr.mxu0 0.0
        %1069 = vmatpush1.msra.mxu0 0.0
        %1070 = vmatprep.subr.mxu0 0.0
        %1071 = vmatpush1.msra.mxu0 0.0
        %1072 = vmatprep.subr.mxu0 0.0
        %1073 = vmatpush1.msra.mxu0 0.0
        %1074 = vmatprep.subr.mxu0 0.0
        %1075 = vmatpush1.msra.mxu0 0.0
        %1076 = vmatprep.subr.mxu0 0.0
        %1077 = vmatpush1.msra.mxu0 0.0
        %1078 = vmatprep.subr.mxu0 0.0
        %1079 = vmatpush1.msra.mxu0 0.0
        %1080 = vmatprep.subr.mxu0 0.0
        %1081 = vmatpush1.msra.mxu0 0.0
        %1082 = vmatprep.subr.mxu0 0.0
        %1083 = vmatpush1.msra.mxu0 0.0
        %1084 = vmatprep.subr.mxu0 0.0
        %1085 = vmatpush1.msra.mxu0 0.0
        %1086 = vmatprep.subr.mxu0 0.0
        %1087 = vmatpush1.msra.mxu0 0.0
        %1088 = vmatprep.subr.mxu0 0.0
        %1089 = vmatpush1.msra.mxu0 0.0
        %1090 = vmatprep.subr.mxu0 0.0
        %1091 = vmatpush1.msra.mxu0 0.0
        %1092 = vmatprep.subr.mxu0 0.0
        %1093 = vmatpush1.msra.mxu0 %v1056
        %1094 = vmatprep.subr.mxu0 0.0
        %1095 = vmatpush1.msra.mxu0 %v1055
        %1096 = vmatprep.subr.mxu0 0.0
        %1097 = vmatpush1.msra.mxu0 %v1054
        %1098 = vmatprep.subr.mxu0 0.0
        %1099 = vmatpush1.msra.mxu0 %v1053
        %1100 = vmatprep.subr.mxu0 0.0
        %1101 = vmatpush2.msra.mxu0 0.0
        %1102 = vmatprep.subr.mxu0 0.0
        %1103 = vmatpush2.msra.mxu0 0.0
        %1104 = vmatprep.subr.mxu0 0.0
        %1105 = vmatpush2.msra.mxu0 0.0
        %1106 = vmatprep.subr.mxu0 0.0
        %1107 = vmatpush2.msra.mxu0 0.0
        %1108 = vmatprep.subr.mxu0 0.0
        %1109 = vmatpush2.msra.mxu0 0.0
        %1110 = vmatprep.subr.mxu0 0.0
        %1111 = vmatpush2.msra.mxu0 0.0
        %1112 = vmatprep.subr.mxu0 0.0
        %1113 = vmatpush2.msra.mxu0 0.0
        %1114 = vmatprep.subr.mxu0 0.0
        %1115 = vmatpush2.msra.mxu0 0.0
        %1116 = vmatprep.subr.mxu0 0.0
        %1117 = vmatpush2.msra.mxu0 0.0
        %1118 = vmatprep.subr.mxu0 0.0
        %1119 = vmatpush2.msra.mxu0 0.0
        %1120 = vmatprep.subr.mxu0 0.0
        %1121 = vmatpush2.msra.mxu0 0.0
        %1122 = vmatprep.subr.mxu0 0.0
        %1123 = vmatpush2.msra.mxu0 0.0
        %1124 = vmatprep.subr.mxu0 0.0
        %1125 = vmatpush2.msra.mxu0 0.0
        %1126 = vmatprep.subr.mxu0 0.0
        %1127 = vmatpush2.msra.mxu0 0.0
        %1128 = vmatprep.subr.mxu0 0.0
        %1129 = vmatpush2.msra.mxu0 0.0
        %1130 = vmatprep.subr.mxu0 0.0
        %1131 = vmatpush2.msra.mxu0 0.0
        %1132 = vmatprep.mubr.f32.mxu0 0.0
        %1133 = vmatmul.mubr.f32.gmra.mxu0 %v1066
        %v1134 = vpop.f32.mrf.mxu0
        %v1135 = vadd.f32 %v1062, %v1134
        %v1136 = vpop.f32.mrf.mxu0
        %1137 = vdwg.mxu0
        %v1138 = vld [vmem:[%s15] sm:$0xff]
        %v1139 = vld [vmem:[%s15 + $0x8] sm:$0xff]
        %v1140 = vld [vmem:[%s15 + $0x10] sm:$0xff]
        %v1141 = vld [vmem:[%s15 + $0x18] sm:$0xff]
        %v1142 = vld [vmem:[%s17] sm:$0x1]
        %v1144 = vlaneseq
        %v1145 = vshrl.u32 %v1144, 7
        %v1146 = vsub.s32 0, %v1145
        %v1147 = vrot.slane %v1142, %v1146
        %v1150 = vsel %vm1064, %v1045, 0
        %1152 = vmatprep.subr.mxu0 0.0
        %1153 = vmatpush1.msra.mxu0 0.0
        %1154 = vmatprep.subr.mxu0 0.0
        %1155 = vmatpush1.msra.mxu0 0.0
        %1156 = vmatprep.subr.mxu0 0.0
        %1157 = vmatpush1.msra.mxu0 0.0
        %1158 = vmatprep.subr.mxu0 0.0
        %1159 = vmatpush1.msra.mxu0 0.0
        %1160 = vmatprep.subr.mxu0 0.0
        %1161 = vmatpush1.msra.mxu0 0.0
        %1162 = vmatprep.subr.mxu0 0.0
        %1163 = vmatpush1.msra.mxu0 0.0
        %1164 = vmatprep.subr.mxu0 0.0
        %1165 = vmatpush1.msra.mxu0 0.0
        %1166 = vmatprep.subr.mxu0 0.0
        %1167 = vmatpush1.msra.mxu0 0.0
        %1168 = vmatprep.subr.mxu0 0.0
        %1169 = vmatpush1.msra.mxu0 0.0
        %1170 = vmatprep.subr.mxu0 0.0
        %1171 = vmatpush1.msra.mxu0 0.0
        %1172 = vmatprep.subr.mxu0 0.0
        %1173 = vmatpush1.msra.mxu0 0.0
        %1174 = vmatprep.subr.mxu0 0.0
        %1175 = vmatpush1.msra.mxu0 0.0
        %1176 = vmatprep.subr.mxu0 0.0
        %1177 = vmatpush1.msra.mxu0 %v1141
        %1178 = vmatprep.subr.mxu0 0.0
        %1179 = vmatpush1.msra.mxu0 %v1140
        %1180 = vmatprep.subr.mxu0 0.0
        %1181 = vmatpush1.msra.mxu0 %v1139
        %1182 = vmatprep.subr.mxu0 0.0
        %1183 = vmatpush1.msra.mxu0 %v1138
        %1184 = vmatprep.subr.mxu0 0.0
        %1185 = vmatpush2.msra.mxu0 0.0
        %1186 = vmatprep.subr.mxu0 0.0
        %1187 = vmatpush2.msra.mxu0 0.0
        %1188 = vmatprep.subr.mxu0 0.0
        %1189 = vmatpush2.msra.mxu0 0.0
        %1190 = vmatprep.subr.mxu0 0.0
        %1191 = vmatpush2.msra.mxu0 0.0
        %1192 = vmatprep.subr.mxu0 0.0
        %1193 = vmatpush2.msra.mxu0 0.0
        %1194 = vmatprep.subr.mxu0 0.0
        %1195 = vmatpush2.msra.mxu0 0.0
        %1196 = vmatprep.subr.mxu0 0.0
        %1197 = vmatpush2.msra.mxu0 0.0
        %1198 = vmatprep.subr.mxu0 0.0
        %1199 = vmatpush2.msra.mxu0 0.0
        %1200 = vmatprep.subr.mxu0 0.0
        %1201 = vmatpush2.msra.mxu0 0.0
        %1202 = vmatprep.subr.mxu0 0.0
        %1203 = vmatpush2.msra.mxu0 0.0
        %1204 = vmatprep.subr.mxu0 0.0
        %1205 = vmatpush2.msra.mxu0 0.0
        %1206 = vmatprep.subr.mxu0 0.0
        %1207 = vmatpush2.msra.mxu0 0.0
        %1208 = vmatprep.subr.mxu0 0.0
        %1209 = vmatpush2.msra.mxu0 0.0
        %1210 = vmatprep.subr.mxu0 0.0
        %1211 = vmatpush2.msra.mxu0 0.0
        %1212 = vmatprep.subr.mxu0 0.0
        %1213 = vmatpush2.msra.mxu0 0.0
        %1214 = vmatprep.subr.mxu0 0.0
        %1215 = vmatpush2.msra.mxu0 0.0
        %1216 = vmatprep.mubr.f32.mxu0 0.0
        %1217 = vmatmul.mubr.f32.gmra.mxu0 %v1150
        %v1218 = vpop.f32.mrf.mxu0
        %v1219 = vadd.f32 %v1147, %v1218
        %v1220 = vpop.f32.mrf.mxu0
        %1221 = vdwg.mxu0
        %v1222 = vmul.f32 %v1135, 0.35355338
        %1224 = vrot.lane.b32.xlu0 %v1135, 96
        %v1225 = vpop.permute.xlu0 %1224
        %vm1226 = vcmask 64512
        %v1228 = vsel %vm1226, %v1222, 0
        %v1230 = vsel %vm1226, %v1225, 0
        %1232 = vmatprep.subr.mxu0 0.0
        %1233 = vmatpush1.xpose.msra.mxu0 0.0
        %1234 = vmatprep.subr.mxu0 0.0
        %1235 = vmatpush1.xpose.msra.mxu0 0.0
        %1236 = vmatprep.subr.mxu0 0.0
        %1237 = vmatpush1.xpose.msra.mxu0 0.0
        %1238 = vmatprep.subr.mxu0 0.0
        %1239 = vmatpush1.xpose.msra.mxu0 0.0
        %1240 = vmatprep.subr.mxu0 0.0
        %1241 = vmatpush1.xpose.msra.mxu0 0.0
        %1242 = vmatprep.subr.mxu0 0.0
        %1243 = vmatpush1.xpose.msra.mxu0 0.0
        %1244 = vmatprep.subr.mxu0 0.0
        %1245 = vmatpush1.xpose.msra.mxu0 0.0
        %1246 = vmatprep.subr.mxu0 0.0
        %1247 = vmatpush1.xpose.msra.mxu0 0.0
        %1248 = vmatprep.subr.mxu0 0.0
        %1249 = vmatpush1.xpose.msra.mxu0 0.0
        %1250 = vmatprep.subr.mxu0 0.0
        %1251 = vmatpush1.xpose.msra.mxu0 0.0
        %1252 = vmatprep.subr.mxu0 0.0
        %1253 = vmatpush1.xpose.msra.mxu0 0.0
        %1254 = vmatprep.subr.mxu0 0.0
        %1255 = vmatpush1.xpose.msra.mxu0 0.0
        %1256 = vmatprep.subr.mxu0 0.0
        %1257 = vmatpush1.xpose.msra.mxu0 0.0
        %1258 = vmatprep.subr.mxu0 0.0
        %1259 = vmatpush1.xpose.msra.mxu0 0.0
        %1260 = vmatprep.subr.mxu0 0.0
        %1261 = vmatpush1.xpose.msra.mxu0 0.0
        %1262 = vmatprep.subr.mxu0 0.0
        %1263 = vmatpush1.xpose.msra.mxu0 %v1230
        %1264 = vmatprep.subr.mxu0 0.0
        %1265 = vmatpush2.xpose.msra.mxu0 0.0
        %1266 = vmatprep.subr.mxu0 0.0
        %1267 = vmatpush2.xpose.msra.mxu0 0.0
        %1268 = vmatprep.subr.mxu0 0.0
        %1269 = vmatpush2.xpose.msra.mxu0 0.0
        %1270 = vmatprep.subr.mxu0 0.0
        %1271 = vmatpush2.xpose.msra.mxu0 0.0
        %1272 = vmatprep.subr.mxu0 0.0
        %1273 = vmatpush2.xpose.msra.mxu0 0.0
        %1274 = vmatprep.subr.mxu0 0.0
        %1275 = vmatpush2.xpose.msra.mxu0 0.0
        %1276 = vmatprep.subr.mxu0 0.0
        %1277 = vmatpush2.xpose.msra.mxu0 0.0
        %1278 = vmatprep.subr.mxu0 0.0
        %1279 = vmatpush2.xpose.msra.mxu0 0.0
        %1280 = vmatprep.subr.mxu0 0.0
        %1281 = vmatpush2.xpose.msra.mxu0 0.0
        %1282 = vmatprep.subr.mxu0 0.0
        %1283 = vmatpush2.xpose.msra.mxu0 0.0
        %1284 = vmatprep.subr.mxu0 0.0
        %1285 = vmatpush2.xpose.msra.mxu0 0.0
        %1286 = vmatprep.subr.mxu0 0.0
        %1287 = vmatpush2.xpose.msra.mxu0 0.0
        %1288 = vmatprep.subr.mxu0 0.0
        %1289 = vmatpush2.xpose.msra.mxu0 0.0
        %1290 = vmatprep.subr.mxu0 0.0
        %1291 = vmatpush2.xpose.msra.mxu0 0.0
        %1292 = vmatprep.subr.mxu0 0.0
        %1293 = vmatpush2.xpose.msra.mxu0 0.0
        %1294 = vmatprep.subr.mxu0 0.0
        %1295 = vmatpush2.xpose.msra.mxu0 0.0
        %1296 = vmatprep.mubr.f32.mxu0 0.0
        %1297 = vmatmul.mubr.f32.gmra.mxu0 %v1228
        %v1298 = vpop.f32.mrf.mxu0
        %v1299 = vadd.f32 0.0, %v1298
        %v1300 = vpop.f32.mrf.mxu0
        %1301 = vdwg.mxu0
        %v1302 = vsel %vm1226, %v1299, -inf
        %1303 = vmax.xlane.f32.xlu0 %v1302
        %v1304 = vpop.xlane.xlu0 %1303
        %v1305 = vsub.f32 %v1299, %v1304
        %v1306 = vmul.f32 %v1305, 1.442695
        %v1307 = vpow.pop %v1306
        %v1308 = vsel %vm1226, %v1307, 0.0
        %1309 = vadd.xlane.f32.xlu0 %v1308
        %v1310 = vpop.xlane.xlu0 %1309
        %v1311 = vrcp.pop %v1310
        %v1312 = vmul.f32 %v1307, %v1311
        %v1314 = vsel %vm1226, %v1312, 0
        %1316 = vmatprep.subr.mxu0 0.0
        %1317 = vmatpush1.msra.mxu0 0.0
        %1318 = vmatprep.subr.mxu0 0.0
        %1319 = vmatpush1.msra.mxu0 0.0
        %1320 = vmatprep.subr.mxu0 0.0
        %1321 = vmatpush1.msra.mxu0 0.0
        %1322 = vmatprep.subr.mxu0 0.0
        %1323 = vmatpush1.msra.mxu0 0.0
        %1324 = vmatprep.subr.mxu0 0.0
        %1325 = vmatpush1.msra.mxu0 0.0
        %1326 = vmatprep.subr.mxu0 0.0
        %1327 = vmatpush1.msra.mxu0 0.0
        %1328 = vmatprep.subr.mxu0 0.0
        %1329 = vmatpush1.msra.mxu0 0.0
        %1330 = vmatprep.subr.mxu0 0.0
        %1331 = vmatpush1.msra.mxu0 0.0
        %1332 = vmatprep.subr.mxu0 0.0
        %1333 = vmatpush1.msra.mxu0 0.0
        %1334 = vmatprep.subr.mxu0 0.0
        %1335 = vmatpush1.msra.mxu0 0.0
        %1336 = vmatprep.subr.mxu0 0.0
        %1337 = vmatpush1.msra.mxu0 0.0
        %1338 = vmatprep.subr.mxu0 0.0
        %1339 = vmatpush1.msra.mxu0 0.0
        %1340 = vmatprep.subr.mxu0 0.0
        %1341 = vmatpush1.msra.mxu0 0.0
        %1342 = vmatprep.subr.mxu0 0.0
        %1343 = vmatpush1.msra.mxu0 0.0
        %1344 = vmatprep.subr.mxu0 0.0
        %1345 = vmatpush1.msra.mxu0 0.0
        %1346 = vmatprep.subr.mxu0 0.0
        %1347 = vmatpush1.msra.mxu0 %v1219
        %1348 = vmatprep.subr.mxu0 0.0
        %1349 = vmatpush2.msra.mxu0 0.0
        %1350 = vmatprep.subr.mxu0 0.0
        %1351 = vmatpush2.msra.mxu0 0.0
        %1352 = vmatprep.subr.mxu0 0.0
        %1353 = vmatpush2.msra.mxu0 0.0
        %1354 = vmatprep.subr.mxu0 0.0
        %1355 = vmatpush2.msra.mxu0 0.0
        %1356 = vmatprep.subr.mxu0 0.0
        %1357 = vmatpush2.msra.mxu0 0.0
        %1358 = vmatprep.subr.mxu0 0.0
        %1359 = vmatpush2.msra.mxu0 0.0
        %1360 = vmatprep.subr.mxu0 0.0
        %1361 = vmatpush2.msra.mxu0 0.0
        %1362 = vmatprep.subr.mxu0 0.0
        %1363 = vmatpush2.msra.mxu0 0.0
        %1364 = vmatprep.subr.mxu0 0.0
        %1365 = vmatpush2.msra.mxu0 0.0
        %1366 = vmatprep.subr.mxu0 0.0
        %1367 = vmatpush2.msra.mxu0 0.0
        %1368 = vmatprep.subr.mxu0 0.0
        %1369 = vmatpush2.msra.mxu0 0.0
        %1370 = vmatprep.subr.mxu0 0.0
        %1371 = vmatpush2.msra.mxu0 0.0
        %1372 = vmatprep.subr.mxu0 0.0
        %1373 = vmatpush2.msra.mxu0 0.0
        %1374 = vmatprep.subr.mxu0 0.0
        %1375 = vmatpush2.msra.mxu0 0.0
        %1376 = vmatprep.subr.mxu0 0.0
        %1377 = vmatpush2.msra.mxu0 0.0
        %1378 = vmatprep.subr.mxu0 0.0
        %1379 = vmatpush2.msra.mxu0 0.0
        %1380 = vmatprep.mubr.f32.mxu0 0.0
        %1381 = vmatmul.mubr.f32.gmra.mxu0 %v1314
        %v1382 = vpop.f32.mrf.mxu0
        %v1383 = vadd.f32 0.0, %v1382
        %v1384 = vpop.f32.mrf.mxu0
        %1385 = vdwg.mxu0
        %1386 = vrot.lane.b32.xlu0 %v1222, 120
        %v1387 = vpop.permute.xlu0 %1386
        %1388 = vrot.lane.b32.xlu0 %v1135, 88
        %v1389 = vpop.permute.xlu0 %1388
        %v1390 = vsel %vm1226, %v1387, 0
        %v1392 = vsel %vm1226, %v1389, 0
        %1394 = vmatprep.subr.mxu0 0.0
        %1395 = vmatpush1.xpose.msra.mxu0 0.0
        %1396 = vmatprep.subr.mxu0 0.0
        %1397 = vmatpush1.xpose.msra.mxu0 0.0
        %1398 = vmatprep.subr.mxu0 0.0
        %1399 = vmatpush1.xpose.msra.mxu0 0.0
        %1400 = vmatprep.subr.mxu0 0.0
        %1401 = vmatpush1.xpose.msra.mxu0 0.0
        %1402 = vmatprep.subr.mxu0 0.0
        %1403 = vmatpush1.xpose.msra.mxu0 0.0
        %1404 = vmatprep.subr.mxu0 0.0
        %1405 = vmatpush1.xpose.msra.mxu0 0.0
        %1406 = vmatprep.subr.mxu0 0.0
        %1407 = vmatpush1.xpose.msra.mxu0 0.0
        %1408 = vmatprep.subr.mxu0 0.0
        %1409 = vmatpush1.xpose.msra.mxu0 0.0
        %1410 = vmatprep.subr.mxu0 0.0
        %1411 = vmatpush1.xpose.msra.mxu0 0.0
        %1412 = vmatprep.subr.mxu0 0.0
        %1413 = vmatpush1.xpose.msra.mxu0 0.0
        %1414 = vmatprep.subr.mxu0 0.0
        %1415 = vmatpush1.xpose.msra.mxu0 0.0
        %1416 = vmatprep.subr.mxu0 0.0
        %1417 = vmatpush1.xpose.msra.mxu0 0.0
        %1418 = vmatprep.subr.mxu0 0.0
        %1419 = vmatpush1.xpose.msra.mxu0 0.0
        %1420 = vmatprep.subr.mxu0 0.0
        %1421 = vmatpush1.xpose.msra.mxu0 0.0
        %1422 = vmatprep.subr.mxu0 0.0
        %1423 = vmatpush1.xpose.msra.mxu0 0.0
        %1424 = vmatprep.subr.mxu0 0.0
        %1425 = vmatpush1.xpose.msra.mxu0 %v1392
        %1426 = vmatprep.subr.mxu0 0.0
        %1427 = vmatpush2.xpose.msra.mxu0 0.0
        %1428 = vmatprep.subr.mxu0 0.0
        %1429 = vmatpush2.xpose.msra.mxu0 0.0
        %1430 = vmatprep.subr.mxu0 0.0
        %1431 = vmatpush2.xpose.msra.mxu0 0.0
        %1432 = vmatprep.subr.mxu0 0.0
        %1433 = vmatpush2.xpose.msra.mxu0 0.0
        %1434 = vmatprep.subr.mxu0 0.0
        %1435 = vmatpush2.xpose.msra.mxu0 0.0
        %1436 = vmatprep.subr.mxu0 0.0
        %1437 = vmatpush2.xpose.msra.mxu0 0.0
        %1438 = vmatprep.subr.mxu0 0.0
        %1439 = vmatpush2.xpose.msra.mxu0 0.0
        %1440 = vmatprep.subr.mxu0 0.0
        %1441 = vmatpush2.xpose.msra.mxu0 0.0
        %1442 = vmatprep.subr.mxu0 0.0
        %1443 = vmatpush2.xpose.msra.mxu0 0.0
        %1444 = vmatprep.subr.mxu0 0.0
        %1445 = vmatpush2.xpose.msra.mxu0 0.0
        %1446 = vmatprep.subr.mxu0 0.0
        %1447 = vmatpush2.xpose.msra.mxu0 0.0
        %1448 = vmatprep.subr.mxu0 0.0
        %1449 = vmatpush2.xpose.msra.mxu0 0.0
        %1450 = vmatprep.subr.mxu0 0.0
        %1451 = vmatpush2.xpose.msra.mxu0 0.0
        %1452 = vmatprep.subr.mxu0 0.0
        %1453 = vmatpush2.xpose.msra.mxu0 0.0
        %1454 = vmatprep.subr.mxu0 0.0
        %1455 = vmatpush2.xpose.msra.mxu0 0.0
        %1456 = vmatprep.subr.mxu0 0.0
        %1457 = vmatpush2.xpose.msra.mxu0 0.0
        %1458 = vmatprep.mubr.f32.mxu0 0.0
        %1459 = vmatmul.mubr.f32.gmra.mxu0 %v1390
        %v1460 = vpop.f32.mrf.mxu0
        %v1461 = vadd.f32 0.0, %v1460
        %v1462 = vpop.f32.mrf.mxu0
        %1463 = vdwg.mxu0
        %v1464 = vsel %vm1226, %v1461, -inf
        %1465 = vmax.xlane.f32.xlu0 %v1464
        %v1466 = vpop.xlane.xlu0 %1465
        %v1467 = vsub.f32 %v1461, %v1466
        %v1468 = vmul.f32 %v1467, 1.442695
        %v1469 = vpow.pop %v1468
        %v1470 = vsel %vm1226, %v1469, 0.0
        %1471 = vadd.xlane.f32.xlu0 %v1470
        %v1472 = vpop.xlane.xlu0 %1471
        %v1473 = vrcp.pop %v1472
        %v1474 = vmul.f32 %v1469, %v1473
        %1476 = vrot.lane.b32.xlu0 %v1219, 120
        %v1477 = vpop.permute.xlu0 %1476
        %v1480 = vsel %vm1226, %v1474, 0
        %1482 = vmatprep.subr.mxu0 0.0
        %1483 = vmatpush1.msra.mxu0 0.0
        %1484 = vmatprep.subr.mxu0 0.0
        %1485 = vmatpush1.msra.mxu0 0.0
        %1486 = vmatprep.subr.mxu0 0.0
        %1487 = vmatpush1.msra.mxu0 0.0
        %1488 = vmatprep.subr.mxu0 0.0
        %1489 = vmatpush1.msra.mxu0 0.0
        %1490 = vmatprep.subr.mxu0 0.0
        %1491 = vmatpush1.msra.mxu0 0.0
        %1492 = vmatprep.subr.mxu0 0.0
        %1493 = vmatpush1.msra.mxu0 0.0
        %1494 = vmatprep.subr.mxu0 0.0
        %1495 = vmatpush1.msra.mxu0 0.0
        %1496 = vmatprep.subr.mxu0 0.0
        %1497 = vmatpush1.msra.mxu0 0.0
        %1498 = vmatprep.subr.mxu0 0.0
        %1499 = vmatpush1.msra.mxu0 0.0
        %1500 = vmatprep.subr.mxu0 0.0
        %1501 = vmatpush1.msra.mxu0 0.0
        %1502 = vmatprep.subr.mxu0 0.0
        %1503 = vmatpush1.msra.mxu0 0.0
        %1504 = vmatprep.subr.mxu0 0.0
        %1505 = vmatpush1.msra.mxu0 0.0
        %1506 = vmatprep.subr.mxu0 0.0
        %1507 = vmatpush1.msra.mxu0 0.0
        %1508 = vmatprep.subr.mxu0 0.0
        %1509 = vmatpush1.msra.mxu0 0.0
        %1510 = vmatprep.subr.mxu0 0.0
        %1511 = vmatpush1.msra.mxu0 0.0
        %1512 = vmatprep.subr.mxu0 0.0
        %1513 = vmatpush1.msra.mxu0 %v1477
        %1514 = vmatprep.subr.mxu0 0.0
        %1515 = vmatpush2.msra.mxu0 0.0
        %1516 = vmatprep.subr.mxu0 0.0
        %1517 = vmatpush2.msra.mxu0 0.0
        %1518 = vmatprep.subr.mxu0 0.0
        %1519 = vmatpush2.msra.mxu0 0.0
        %1520 = vmatprep.subr.mxu0 0.0
        %1521 = vmatpush2.msra.mxu0 0.0
        %1522 = vmatprep.subr.mxu0 0.0
        %1523 = vmatpush2.msra.mxu0 0.0
        %1524 = vmatprep.subr.mxu0 0.0
        %1525 = vmatpush2.msra.mxu0 0.0
        %1526 = vmatprep.subr.mxu0 0.0
        %1527 = vmatpush2.msra.mxu0 0.0
        %1528 = vmatprep.subr.mxu0 0.0
        %1529 = vmatpush2.msra.mxu0 0.0
        %1530 = vmatprep.subr.mxu0 0.0
        %1531 = vmatpush2.msra.mxu0 0.0
        %1532 = vmatprep.subr.mxu0 0.0
        %1533 = vmatpush2.msra.mxu0 0.0
        %1534 = vmatprep.subr.mxu0 0.0
        %1535 = vmatpush2.msra.mxu0 0.0
        %1536 = vmatprep.subr.mxu0 0.0
        %1537 = vmatpush2.msra.mxu0 0.0
        %1538 = vmatprep.subr.mxu0 0.0
        %1539 = vmatpush2.msra.mxu0 0.0
        %1540 = vmatprep.subr.mxu0 0.0
        %1541 = vmatpush2.msra.mxu0 0.0
        %1542 = vmatprep.subr.mxu0 0.0
        %1543 = vmatpush2.msra.mxu0 0.0
        %1544 = vmatprep.subr.mxu0 0.0
        %1545 = vmatpush2.msra.mxu0 0.0
        %1546 = vmatprep.mubr.f32.mxu0 0.0
        %1547 = vmatmul.mubr.f32.gmra.mxu0 %v1480
        %v1548 = vpop.f32.mrf.mxu0
        %v1549 = vadd.f32 0.0, %v1548
        %v1550 = vpop.f32.mrf.mxu0
        %1551 = vdwg.mxu0
        %1552 = vrot.lane.b32.xlu0 %v1222, 112
        %v1553 = vpop.permute.xlu0 %1552
        %1554 = vrot.lane.b32.xlu0 %v1135, 80
        %v1555 = vpop.permute.xlu0 %1554
        %v1556 = vsel %vm1226, %v1553, 0
        %v1558 = vsel %vm1226, %v1555, 0
        %1560 = vmatprep.subr.mxu0 0.0
        %1561 = vmatpush1.xpose.msra.mxu0 0.0
        %1562 = vmatprep.subr.mxu0 0.0
        %1563 = vmatpush1.xpose.msra.mxu0 0.0
        %1564 = vmatprep.subr.mxu0 0.0
        %1565 = vmatpush1.xpose.msra.mxu0 0.0
        %1566 = vmatprep.subr.mxu0 0.0
        %1567 = vmatpush1.xpose.msra.mxu0 0.0
        %1568 = vmatprep.subr.mxu0 0.0
        %1569 = vmatpush1.xpose.msra.mxu0 0.0
        %1570 = vmatprep.subr.mxu0 0.0
        %1571 = vmatpush1.xpose.msra.mxu0 0.0
        %1572 = vmatprep.subr.mxu0 0.0
        %1573 = vmatpush1.xpose.msra.mxu0 0.0
        %1574 = vmatprep.subr.mxu0 0.0
        %1575 = vmatpush1.xpose.msra.mxu0 0.0
        %1576 = vmatprep.subr.mxu0 0.0
        %1577 = vmatpush1.xpose.msra.mxu0 0.0
        %1578 = vmatprep.subr.mxu0 0.0
        %1579 = vmatpush1.xpose.msra.mxu0 0.0
        %1580 = vmatprep.subr.mxu0 0.0
        %1581 = vmatpush1.xpose.msra.mxu0 0.0
        %1582 = vmatprep.subr.mxu0 0.0
        %1583 = vmatpush1.xpose.msra.mxu0 0.0
        %1584 = vmatprep.subr.mxu0 0.0
        %1585 = vmatpush1.xpose.msra.mxu0 0.0
        %1586 = vmatprep.subr.mxu0 0.0
        %1587 = vmatpush1.xpose.msra.mxu0 0.0
        %1588 = vmatprep.subr.mxu0 0.0
        %1589 = vmatpush1.xpose.msra.mxu0 0.0
        %1590 = vmatprep.subr.mxu0 0.0
        %1591 = vmatpush1.xpose.msra.mxu0 %v1558
        %1592 = vmatprep.subr.mxu0 0.0
        %1593 = vmatpush2.xpose.msra.mxu0 0.0
        %1594 = vmatprep.subr.mxu0 0.0
        %1595 = vmatpush2.xpose.msra.mxu0 0.0
        %1596 = vmatprep.subr.mxu0 0.0
        %1597 = vmatpush2.xpose.msra.mxu0 0.0
        %1598 = vmatprep.subr.mxu0 0.0
        %1599 = vmatpush2.xpose.msra.mxu0 0.0
        %1600 = vmatprep.subr.mxu0 0.0
        %1601 = vmatpush2.xpose.msra.mxu0 0.0
        %1602 = vmatprep.subr.mxu0 0.0
        %1603 = vmatpush2.xpose.msra.mxu0 0.0
        %1604 = vmatprep.subr.mxu0 0.0
        %1605 = vmatpush2.xpose.msra.mxu0 0.0
        %1606 = vmatprep.subr.mxu0 0.0
        %1607 = vmatpush2.xpose.msra.mxu0 0.0
        %1608 = vmatprep.subr.mxu0 0.0
        %1609 = vmatpush2.xpose.msra.mxu0 0.0
        %1610 = vmatprep.subr.mxu0 0.0
        %1611 = vmatpush2.xpose.msra.mxu0 0.0
        %1612 = vmatprep.subr.mxu0 0.0
        %1613 = vmatpush2.xpose.msra.mxu0 0.0
        %1614 = vmatprep.subr.mxu0 0.0
        %1615 = vmatpush2.xpose.msra.mxu0 0.0
        %1616 = vmatprep.subr.mxu0 0.0
        %1617 = vmatpush2.xpose.msra.mxu0 0.0
        %1618 = vmatprep.subr.mxu0 0.0
        %1619 = vmatpush2.xpose.msra.mxu0 0.0
        %1620 = vmatprep.subr.mxu0 0.0
        %1621 = vmatpush2.xpose.msra.mxu0 0.0
        %1622 = vmatprep.subr.mxu0 0.0
        %1623 = vmatpush2.xpose.msra.mxu0 0.0
        %1624 = vmatprep.mubr.f32.mxu0 0.0
        %1625 = vmatmul.mubr.f32.gmra.mxu0 %v1556
        %v1626 = vpop.f32.mrf.mxu0
        %v1627 = vadd.f32 0.0, %v1626
        %v1628 = vpop.f32.mrf.mxu0
        %1629 = vdwg.mxu0
        %v1630 = vsel %vm1226, %v1627, -inf
        %1631 = vmax.xlane.f32.xlu0 %v1630
        %v1632 = vpop.xlane.xlu0 %1631
        %v1633 = vsub.f32 %v1627, %v1632
        %v1634 = vmul.f32 %v1633, 1.442695
        %v1635 = vpow.pop %v1634
        %v1636 = vsel %vm1226, %v1635, 0.0
        %1637 = vadd.xlane.f32.xlu0 %v1636
        %v1638 = vpop.xlane.xlu0 %1637
        %v1639 = vrcp.pop %v1638
        %v1640 = vmul.f32 %v1635, %v1639
        %1641 = vrot.lane.b32.xlu0 %v1219, 112
        %v1642 = vpop.permute.xlu0 %1641
        %v1645 = vsel %vm1226, %v1640, 0
        %1647 = vmatprep.subr.mxu0 0.0
        %1648 = vmatpush1.msra.mxu0 0.0
        %1649 = vmatprep.subr.mxu0 0.0
        %1650 = vmatpush1.msra.mxu0 0.0
        %1651 = vmatprep.subr.mxu0 0.0
        %1652 = vmatpush1.msra.mxu0 0.0
        %1653 = vmatprep.subr.mxu0 0.0
        %1654 = vmatpush1.msra.mxu0 0.0
        %1655 = vmatprep.subr.mxu0 0.0
        %1656 = vmatpush1.msra.mxu0 0.0
        %1657 = vmatprep.subr.mxu0 0.0
        %1658 = vmatpush1.msra.mxu0 0.0
        %1659 = vmatprep.subr.mxu0 0.0
        %1660 = vmatpush1.msra.mxu0 0.0
        %1661 = vmatprep.subr.mxu0 0.0
        %1662 = vmatpush1.msra.mxu0 0.0
        %1663 = vmatprep.subr.mxu0 0.0
        %1664 = vmatpush1.msra.mxu0 0.0
        %1665 = vmatprep.subr.mxu0 0.0
        %1666 = vmatpush1.msra.mxu0 0.0
        %1667 = vmatprep.subr.mxu0 0.0
        %1668 = vmatpush1.msra.mxu0 0.0
        %1669 = vmatprep.subr.mxu0 0.0
        %1670 = vmatpush1.msra.mxu0 0.0
        %1671 = vmatprep.subr.mxu0 0.0
        %1672 = vmatpush1.msra.mxu0 0.0
        %1673 = vmatprep.subr.mxu0 0.0
        %1674 = vmatpush1.msra.mxu0 0.0
        %1675 = vmatprep.subr.mxu0 0.0
        %1676 = vmatpush1.msra.mxu0 0.0
        %1677 = vmatprep.subr.mxu0 0.0
        %1678 = vmatpush1.msra.mxu0 %v1642
        %1679 = vmatprep.subr.mxu0 0.0
        %1680 = vmatpush2.msra.mxu0 0.0
        %1681 = vmatprep.subr.mxu0 0.0
        %1682 = vmatpush2.msra.mxu0 0.0
        %1683 = vmatprep.subr.mxu0 0.0
        %1684 = vmatpush2.msra.mxu0 0.0
        %1685 = vmatprep.subr.mxu0 0.0
        %1686 = vmatpush2.msra.mxu0 0.0
        %1687 = vmatprep.subr.mxu0 0.0
        %1688 = vmatpush2.msra.mxu0 0.0
        %1689 = vmatprep.subr.mxu0 0.0
        %1690 = vmatpush2.msra.mxu0 0.0
        %1691 = vmatprep.subr.mxu0 0.0
        %1692 = vmatpush2.msra.mxu0 0.0
        %1693 = vmatprep.subr.mxu0 0.0
        %1694 = vmatpush2.msra.mxu0 0.0
        %1695 = vmatprep.subr.mxu0 0.0
        %1696 = vmatpush2.msra.mxu0 0.0
        %1697 = vmatprep.subr.mxu0 0.0
        %1698 = vmatpush2.msra.mxu0 0.0
        %1699 = vmatprep.subr.mxu0 0.0
        %1700 = vmatpush2.msra.mxu0 0.0
        %1701 = vmatprep.subr.mxu0 0.0
        %1702 = vmatpush2.msra.mxu0 0.0
        %1703 = vmatprep.subr.mxu0 0.0
        %1704 = vmatpush2.msra.mxu0 0.0
        %1705 = vmatprep.subr.mxu0 0.0
        %1706 = vmatpush2.msra.mxu0 0.0
        %1707 = vmatprep.subr.mxu0 0.0
        %1708 = vmatpush2.msra.mxu0 0.0
        %1709 = vmatprep.subr.mxu0 0.0
        %1710 = vmatpush2.msra.mxu0 0.0
        %1711 = vmatprep.mubr.f32.mxu0 0.0
        %1712 = vmatmul.mubr.f32.gmra.mxu0 %v1645
        %v1713 = vpop.f32.mrf.mxu0
        %v1714 = vadd.f32 0.0, %v1713
        %v1715 = vpop.f32.mrf.mxu0
        %1716 = vdwg.mxu0
        %1717 = vrot.lane.b32.xlu0 %v1222, 104
        %v1718 = vpop.permute.xlu0 %1717
        %1719 = vrot.lane.b32.xlu0 %v1135, 72
        %v1720 = vpop.permute.xlu0 %1719
        %v1721 = vsel %vm1226, %v1718, 0
        %v1723 = vsel %vm1226, %v1720, 0
        %1725 = vmatprep.subr.mxu0 0.0
        %1726 = vmatpush1.xpose.msra.mxu0 0.0
        %1727 = vmatprep.subr.mxu0 0.0
        %1728 = vmatpush1.xpose.msra.mxu0 0.0
        %1729 = vmatprep.subr.mxu0 0.0
        %1730 = vmatpush1.xpose.msra.mxu0 0.0
        %1731 = vmatprep.subr.mxu0 0.0
        %1732 = vmatpush1.xpose.msra.mxu0 0.0
        %1733 = vmatprep.subr.mxu0 0.0
        %1734 = vmatpush1.xpose.msra.mxu0 0.0
        %1735 = vmatprep.subr.mxu0 0.0
        %1736 = vmatpush1.xpose.msra.mxu0 0.0
        %1737 = vmatprep.subr.mxu0 0.0
        %1738 = vmatpush1.xpose.msra.mxu0 0.0
        %1739 = vmatprep.subr.mxu0 0.0
        %1740 = vmatpush1.xpose.msra.mxu0 0.0
        %1741 = vmatprep.subr.mxu0 0.0
        %1742 = vmatpush1.xpose.msra.mxu0 0.0
        %1743 = vmatprep.subr.mxu0 0.0
        %1744 = vmatpush1.xpose.msra.mxu0 0.0
        %1745 = vmatprep.subr.mxu0 0.0
        %1746 = vmatpush1.xpose.msra.mxu0 0.0
        %1747 = vmatprep.subr.mxu0 0.0
        %1748 = vmatpush1.xpose.msra.mxu0 0.0
        %1749 = vmatprep.subr.mxu0 0.0
        %1750 = vmatpush1.xpose.msra.mxu0 0.0
        %1751 = vmatprep.subr.mxu0 0.0
        %1752 = vmatpush1.xpose.msra.mxu0 0.0
        %1753 = vmatprep.subr.mxu0 0.0
        %1754 = vmatpush1.xpose.msra.mxu0 0.0
        %1755 = vmatprep.subr.mxu0 0.0
        %1756 = vmatpush1.xpose.msra.mxu0 %v1723
        %1757 = vmatprep.subr.mxu0 0.0
        %1758 = vmatpush2.xpose.msra.mxu0 0.0
        %1759 = vmatprep.subr.mxu0 0.0
        %1760 = vmatpush2.xpose.msra.mxu0 0.0
        %1761 = vmatprep.subr.mxu0 0.0
        %1762 = vmatpush2.xpose.msra.mxu0 0.0
        %1763 = vmatprep.subr.mxu0 0.0
        %1764 = vmatpush2.xpose.msra.mxu0 0.0
        %1765 = vmatprep.subr.mxu0 0.0
        %1766 = vmatpush2.xpose.msra.mxu0 0.0
        %1767 = vmatprep.subr.mxu0 0.0
        %1768 = vmatpush2.xpose.msra.mxu0 0.0
        %1769 = vmatprep.subr.mxu0 0.0
        %1770 = vmatpush2.xpose.msra.mxu0 0.0
        %1771 = vmatprep.subr.mxu0 0.0
        %1772 = vmatpush2.xpose.msra.mxu0 0.0
        %1773 = vmatprep.subr.mxu0 0.0
        %1774 = vmatpush2.xpose.msra.mxu0 0.0
        %1775 = vmatprep.subr.mxu0 0.0
        %1776 = vmatpush2.xpose.msra.mxu0 0.0
        %1777 = vmatprep.subr.mxu0 0.0
        %1778 = vmatpush2.xpose.msra.mxu0 0.0
        %1779 = vmatprep.subr.mxu0 0.0
        %1780 = vmatpush2.xpose.msra.mxu0 0.0
        %1781 = vmatprep.subr.mxu0 0.0
        %1782 = vmatpush2.xpose.msra.mxu0 0.0
        %1783 = vmatprep.subr.mxu0 0.0
        %1784 = vmatpush2.xpose.msra.mxu0 0.0
        %1785 = vmatprep.subr.mxu0 0.0
        %1786 = vmatpush2.xpose.msra.mxu0 0.0
        %1787 = vmatprep.subr.mxu0 0.0
        %1788 = vmatpush2.xpose.msra.mxu0 0.0
        %1789 = vmatprep.mubr.f32.mxu0 0.0
        %1790 = vmatmul.mubr.f32.gmra.mxu0 %v1721
        %v1791 = vpop.f32.mrf.mxu0
        %v1792 = vadd.f32 0.0, %v1791
        %v1793 = vpop.f32.mrf.mxu0
        %1794 = vdwg.mxu0
        %v1795 = vsel %vm1226, %v1792, -inf
        %1796 = vmax.xlane.f32.xlu0 %v1795
        %v1797 = vpop.xlane.xlu0 %1796
        %v1798 = vsub.f32 %v1792, %v1797
        %v1799 = vmul.f32 %v1798, 1.442695
        %v1800 = vpow.pop %v1799
        %v1801 = vsel %vm1226, %v1800, 0.0
        %1802 = vadd.xlane.f32.xlu0 %v1801
        %v1803 = vpop.xlane.xlu0 %1802
        %v1804 = vrcp.pop %v1803
        %v1805 = vmul.f32 %v1800, %v1804
        %1806 = vrot.lane.b32.xlu0 %v1219, 104
        %v1807 = vpop.permute.xlu0 %1806
        %v1810 = vsel %vm1226, %v1805, 0
        %1812 = vmatprep.subr.mxu0 0.0
        %1813 = vmatpush1.msra.mxu0 0.0
        %1814 = vmatprep.subr.mxu0 0.0
        %1815 = vmatpush1.msra.mxu0 0.0
        %1816 = vmatprep.subr.mxu0 0.0
        %1817 = vmatpush1.msra.mxu0 0.0
        %1818 = vmatprep.subr.mxu0 0.0
        %1819 = vmatpush1.msra.mxu0 0.0
        %1820 = vmatprep.subr.mxu0 0.0
        %1821 = vmatpush1.msra.mxu0 0.0
        %1822 = vmatprep.subr.mxu0 0.0
        %1823 = vmatpush1.msra.mxu0 0.0
        %1824 = vmatprep.subr.mxu0 0.0
        %1825 = vmatpush1.msra.mxu0 0.0
        %1826 = vmatprep.subr.mxu0 0.0
        %1827 = vmatpush1.msra.mxu0 0.0
        %1828 = vmatprep.subr.mxu0 0.0
        %1829 = vmatpush1.msra.mxu0 0.0
        %1830 = vmatprep.subr.mxu0 0.0
        %1831 = vmatpush1.msra.mxu0 0.0
        %1832 = vmatprep.subr.mxu0 0.0
        %1833 = vmatpush1.msra.mxu0 0.0
        %1834 = vmatprep.subr.mxu0 0.0
        %1835 = vmatpush1.msra.mxu0 0.0
        %1836 = vmatprep.subr.mxu0 0.0
        %1837 = vmatpush1.msra.mxu0 0.0
        %1838 = vmatprep.subr.mxu0 0.0
        %1839 = vmatpush1.msra.mxu0 0.0
        %1840 = vmatprep.subr.mxu0 0.0
        %1841 = vmatpush1.msra.mxu0 0.0
        %1842 = vmatprep.subr.mxu0 0.0
        %1843 = vmatpush1.msra.mxu0 %v1807
        %1844 = vmatprep.subr.mxu0 0.0
        %1845 = vmatpush2.msra.mxu0 0.0
        %1846 = vmatprep.subr.mxu0 0.0
        %1847 = vmatpush2.msra.mxu0 0.0
        %1848 = vmatprep.subr.mxu0 0.0
        %1849 = vmatpush2.msra.mxu0 0.0
        %1850 = vmatprep.subr.mxu0 0.0
        %1851 = vmatpush2.msra.mxu0 0.0
        %1852 = vmatprep.subr.mxu0 0.0
        %1853 = vmatpush2.msra.mxu0 0.0
        %1854 = vmatprep.subr.mxu0 0.0
        %1855 = vmatpush2.msra.mxu0 0.0
        %1856 = vmatprep.subr.mxu0 0.0
        %1857 = vmatpush2.msra.mxu0 0.0
        %1858 = vmatprep.subr.mxu0 0.0
        %1859 = vmatpush2.msra.mxu0 0.0
        %1860 = vmatprep.subr.mxu0 0.0
        %1861 = vmatpush2.msra.mxu0 0.0
        %1862 = vmatprep.subr.mxu0 0.0
        %1863 = vmatpush2.msra.mxu0 0.0
        %1864 = vmatprep.subr.mxu0 0.0
        %1865 = vmatpush2.msra.mxu0 0.0
        %1866 = vmatprep.subr.mxu0 0.0
        %1867 = vmatpush2.msra.mxu0 0.0
        %1868 = vmatprep.subr.mxu0 0.0
        %1869 = vmatpush2.msra.mxu0 0.0
        %1870 = vmatprep.subr.mxu0 0.0
        %1871 = vmatpush2.msra.mxu0 0.0
        %1872 = vmatprep.subr.mxu0 0.0
        %1873 = vmatpush2.msra.mxu0 0.0
        %1874 = vmatprep.subr.mxu0 0.0
        %1875 = vmatpush2.msra.mxu0 0.0
        %1876 = vmatprep.mubr.f32.mxu0 0.0
        %1877 = vmatmul.mubr.f32.gmra.mxu0 %v1810
        %v1878 = vpop.f32.mrf.mxu0
        %v1879 = vadd.f32 0.0, %v1878
        %v1880 = vpop.f32.mrf.mxu0
        %1881 = vdwg.mxu0
        %1883 = vrot.lane.b32.xlu0 %v1549, 8
        %v1884 = vpop.permute.xlu0 %1883
        %1887 = vrot.lane.b32.xlu0 %v1714, 16
        %v1888 = vpop.permute.xlu0 %1887
        %1891 = vrot.lane.b32.xlu0 %v1879, 24
        %v1892 = vpop.permute.xlu0 %1891
        %v1894 = vsel %vm1226, %v1383, %v1884
        %vm1895 = vcmask 130048
        %v1896 = vsel %vm1895, %v1894, %v1888
        %vm1897 = vcmask 195584
        %v1898 = vsel %vm1897, %v1896, %v1892
        %v1899 = vld [vmem:[%s19] sm:$0xff]
        %v1900 = vld [vmem:[%s19 + $0x8] sm:$0xff]
        %v1901 = vld [vmem:[%s19 + $0x10] sm:$0xff]
        %v1902 = vld [vmem:[%s19 + $0x18] sm:$0xff]
        %v1903 = vld [vmem:[%s21] sm:$0x1]
        %v1905 = vlaneseq
        %v1906 = vshrl.u32 %v1905, 7
        %v1907 = vsub.s32 0, %v1906
        %v1908 = vrot.slane %v1903, %v1907
        %v1911 = vsel %vm1064, %v1898, 0
        %1913 = vmatprep.subr.mxu0 0.0
        %1914 = vmatpush1.msra.mxu0 0.0
        %1915 = vmatprep.subr.mxu0 0.0
        %1916 = vmatpush1.msra.mxu0 0.0
        %1917 = vmatprep.subr.mxu0 0.0
        %1918 = vmatpush1.msra.mxu0 0.0
        %1919 = vmatprep.subr.mxu0 0.0
        %1920 = vmatpush1.msra.mxu0 0.0
        %1921 = vmatprep.subr.mxu0 0.0
        %1922 = vmatpush1.msra.mxu0 0.0
        %1923 = vmatprep.subr.mxu0 0.0
        %1924 = vmatpush1.msra.mxu0 0.0
        %1925 = vmatprep.subr.mxu0 0.0
        %1926 = vmatpush1.msra.mxu0 0.0
        %1927 = vmatprep.subr.mxu0 0.0
        %1928 = vmatpush1.msra.mxu0 0.0
        %1929 = vmatprep.subr.mxu0 0.0
        %1930 = vmatpush1.msra.mxu0 0.0
        %1931 = vmatprep.subr.mxu0 0.0
        %1932 = vmatpush1.msra.mxu0 0.0
        %1933 = vmatprep.subr.mxu0 0.0
        %1934 = vmatpush1.msra.mxu0 0.0
        %1935 = vmatprep.subr.mxu0 0.0
        %1936 = vmatpush1.msra.mxu0 0.0
        %1937 = vmatprep.subr.mxu0 0.0
        %1938 = vmatpush1.msra.mxu0 %v1902
        %1939 = vmatprep.subr.mxu0 0.0
        %1940 = vmatpush1.msra.mxu0 %v1901
        %1941 = vmatprep.subr.mxu0 0.0
        %1942 = vmatpush1.msra.mxu0 %v1900
        %1943 = vmatprep.subr.mxu0 0.0
        %1944 = vmatpush1.msra.mxu0 %v1899
        %1945 = vmatprep.subr.mxu0 0.0
        %1946 = vmatpush2.msra.mxu0 0.0
        %1947 = vmatprep.subr.mxu0 0.0
        %1948 = vmatpush2.msra.mxu0 0.0
        %1949 = vmatprep.subr.mxu0 0.0
        %1950 = vmatpush2.msra.mxu0 0.0
        %1951 = vmatprep.subr.mxu0 0.0
        %1952 = vmatpush2.msra.mxu0 0.0
        %1953 = vmatprep.subr.mxu0 0.0
        %1954 = vmatpush2.msra.mxu0 0.0
        %1955 = vmatprep.subr.mxu0 0.0
        %1956 = vmatpush2.msra.mxu0 0.0
        %1957 = vmatprep.subr.mxu0 0.0
        %1958 = vmatpush2.msra.mxu0 0.0
        %1959 = vmatprep.subr.mxu0 0.0
        %1960 = vmatpush2.msra.mxu0 0.0
        %1961 = vmatprep.subr.mxu0 0.0
        %1962 = vmatpush2.msra.mxu0 0.0
        %1963 = vmatprep.subr.mxu0 0.0
        %1964 = vmatpush2.msra.mxu0 0.0
        %1965 = vmatprep.subr.mxu0 0.0
        %1966 = vmatpush2.msra.mxu0 0.0
        %1967 = vmatprep.subr.mxu0 0.0
        %1968 = vmatpush2.msra.mxu0 0.0
        %1969 = vmatprep.subr.mxu0 0.0
        %1970 = vmatpush2.msra.mxu0 0.0
        %1971 = vmatprep.subr.mxu0 0.0
        %1972 = vmatpush2.msra.mxu0 0.0
        %1973 = vmatprep.subr.mxu0 0.0
        %1974 = vmatpush2.msra.mxu0 0.0
        %1975 = vmatprep.subr.mxu0 0.0
        %1976 = vmatpush2.msra.mxu0 0.0
        %1977 = vmatprep.mubr.f32.mxu0 0.0
        %1978 = vmatmul.mubr.f32.gmra.mxu0 %v1911
        %v1979 = vpop.f32.mrf.mxu0
        %v1980 = vadd.f32 %v1908, %v1979
        %v1981 = vpop.f32.mrf.mxu0
        %1982 = vdwg.mxu0
        %v1983 = vld [vmem:[%s47] sm:$0x1]
        %v1984 = vld [vmem:[%s49] sm:$0x1]
        %v1985 = vadd.f32 %v1045, %v1980
        %v1986 = vsel %vm1064, %v1985, 0.0
        %1987 = vadd.xlane.f32.xlu0 %v1986
        %v1988 = vpop.xlane.xlu0 %1987
        %v1989 = vrcp.pop 32.0
        %v1990 = vmul.f32 %v1988, %v1989
        %v1991 = vsub.f32 %v1985, %v1990
        %v1992 = vmul.f32 %v1991, %v1991
        %v1993 = vsel %vm1064, %v1992, 0.0
        %1994 = vadd.xlane.f32.xlu0 %v1993
        %v1995 = vpop.xlane.xlu0 %1994
        %v1996 = vmul.f32 %v1995, %v1989
        %v1997 = vadd.f32 %v1996, 1e-05
        %v1998 = vrsqrt.pop %v1997
        %v1999 = vmul.f32 %v1991, %v1998
        %v2001 = vlaneseq
        %v2002 = vshrl.u32 %v2001, 7
        %v2003 = vsub.s32 0, %v2002
        %v2004 = vrot.slane %v1983, %v2003
        %v2006 = vmul.f32 %v1999, %v2004
        %v2008 = vlaneseq
        %v2009 = vshrl.u32 %v2008, 7
        %v2010 = vsub.s32 0, %v2009
        %v2011 = vrot.slane %v1984, %v2010
        %v2013 = vadd.f32 %v2006, %v2011
        %v2014 = vadd.f32 %v2013, %v1048
        %v2015 = vld [vmem:[%s23] sm:$0xff]
        %v2016 = vld [vmem:[%s23 + $0x8] sm:$0xff]
        %v2017 = vld [vmem:[%s23 + $0x10] sm:$0xff]
        %v2018 = vld [vmem:[%s23 + $0x18] sm:$0xff]
        %v2019 = vld [vmem:[#allocation2] sm:$0x1]
        %v2021 = vlaneseq
        %v2022 = vshrl.u32 %v2021, 7
        %v2023 = vsub.s32 0, %v2022
        %v2024 = vrot.slane %v2019, %v2023
        %v2027 = vsel %vm1064, %v2014, 0
        %2029 = vmatprep.subr.mxu0 0.0
        %2030 = vmatpush1.msra.mxu0 0.0
        %2031 = vmatprep.subr.mxu0 0.0
        %2032 = vmatpush1.msra.mxu0 0.0
        %2033 = vmatprep.subr.mxu0 0.0
        %2034 = vmatpush1.msra.mxu0 0.0
        %2035 = vmatprep.subr.mxu0 0.0
        %2036 = vmatpush1.msra.mxu0 0.0
        %2037 = vmatprep.subr.mxu0 0.0
        %2038 = vmatpush1.msra.mxu0 0.0
        %2039 = vmatprep.subr.mxu0 0.0
        %2040 = vmatpush1.msra.mxu0 0.0
        %2041 = vmatprep.subr.mxu0 0.0
        %2042 = vmatpush1.msra.mxu0 0.0
        %2043 = vmatprep.subr.mxu0 0.0
        %2044 = vmatpush1.msra.mxu0 0.0
        %2045 = vmatprep.subr.mxu0 0.0
        %2046 = vmatpush1.msra.mxu0 0.0
        %2047 = vmatprep.subr.mxu0 0.0
        %2048 = vmatpush1.msra.mxu0 0.0
        %2049 = vmatprep.subr.mxu0 0.0
        %2050 = vmatpush1.msra.mxu0 0.0
        %2051 = vmatprep.subr.mxu0 0.0
        %2052 = vmatpush1.msra.mxu0 0.0
        %2053 = vmatprep.subr.mxu0 0.0
        %2054 = vmatpush1.msra.mxu0 %v2018
        %2055 = vmatprep.subr.mxu0 0.0
        %2056 = vmatpush1.msra.mxu0 %v2017
        %2057 = vmatprep.subr.mxu0 0.0
        %2058 = vmatpush1.msra.mxu0 %v2016
        %2059 = vmatprep.subr.mxu0 0.0
        %2060 = vmatpush1.msra.mxu0 %v2015
        %2061 = vmatprep.subr.mxu0 0.0
        %2062 = vmatpush2.msra.mxu0 0.0
        %2063 = vmatprep.subr.mxu0 0.0
        %2064 = vmatpush2.msra.mxu0 0.0
        %2065 = vmatprep.subr.mxu0 0.0
        %2066 = vmatpush2.msra.mxu0 0.0
        %2067 = vmatprep.subr.mxu0 0.0
        %2068 = vmatpush2.msra.mxu0 0.0
        %2069 = vmatprep.subr.mxu0 0.0
        %2070 = vmatpush2.msra.mxu0 0.0
        %2071 = vmatprep.subr.mxu0 0.0
        %2072 = vmatpush2.msra.mxu0 0.0
        %2073 = vmatprep.subr.mxu0 0.0
        %2074 = vmatpush2.msra.mxu0 0.0
        %2075 = vmatprep.subr.mxu0 0.0
        %2076 = vmatpush2.msra.mxu0 0.0
        %2077 = vmatprep.subr.mxu0 0.0
        %2078 = vmatpush2.msra.mxu0 0.0
        %2079 = vmatprep.subr.mxu0 0.0
        %2080 = vmatpush2.msra.mxu0 0.0
        %2081 = vmatprep.subr.mxu0 0.0
        %2082 = vmatpush2.msra.mxu0 0.0
        %2083 = vmatprep.subr.mxu0 0.0
        %2084 = vmatpush2.msra.mxu0 0.0
        %2085 = vmatprep.subr.mxu0 0.0
        %2086 = vmatpush2.msra.mxu0 0.0
        %2087 = vmatprep.subr.mxu0 0.0
        %2088 = vmatpush2.msra.mxu0 0.0
        %2089 = vmatprep.subr.mxu0 0.0
        %2090 = vmatpush2.msra.mxu0 0.0
        %2091 = vmatprep.subr.mxu0 0.0
        %2092 = vmatpush2.msra.mxu0 0.0
        %2093 = vmatprep.mubr.f32.mxu0 0.0
        %2094 = vmatmul.mubr.f32.gmra.mxu0 %v2027
        %v2095 = vpop.f32.mrf.mxu0
        %v2096 = vadd.f32 %v2024, %v2095
        %v2097 = vpop.f32.mrf.mxu0
        %2098 = vdwg.mxu0
        %v2099 = vadd.f32 %v1046, %v1049
        %v2100 = vadd.f32 %v1047, %v1050
        %v2101 = vld [vmem:[%s27] sm:$0xff]
        %v2102 = vld [vmem:[%s27 + $0x8] sm:$0xff]
        %v2103 = vld [vmem:[%s27 + $0x10] sm:$0xff]
        %v2104 = vld [vmem:[%s27 + $0x18] sm:$0xff]
        %v2105 = vld [vmem:[#allocation4] sm:$0x1]
        %v2107 = vlaneseq
        %v2108 = vshrl.u32 %v2107, 7
        %v2109 = vsub.s32 0, %v2108
        %v2110 = vrot.slane %v2105, %v2109
        %v2113 = vsel %vm1064, %v2099, 0
        %v2116 = vsel %vm1064, %v2100, 0
        %2118 = vmatprep.subr.mxu0 0.0
        %2119 = vmatpush1.msra.mxu0 0.0
        %2120 = vmatprep.subr.mxu0 0.0
        %2121 = vmatpush1.msra.mxu0 0.0
        %2122 = vmatprep.subr.mxu0 0.0
        %2123 = vmatpush1.msra.mxu0 0.0
        %2124 = vmatprep.subr.mxu0 0.0
        %2125 = vmatpush1.msra.mxu0 0.0
        %2126 = vmatprep.subr.mxu0 0.0
        %2127 = vmatpush1.msra.mxu0 0.0
        %2128 = vmatprep.subr.mxu0 0.0
        %2129 = vmatpush1.msra.mxu0 0.0
        %2130 = vmatprep.subr.mxu0 0.0
        %2131 = vmatpush1.msra.mxu0 0.0
        %2132 = vmatprep.subr.mxu0 0.0
        %2133 = vmatpush1.msra.mxu0 0.0
        %2134 = vmatprep.subr.mxu0 0.0
        %2135 = vmatpush1.msra.mxu0 0.0
        %2136 = vmatprep.subr.mxu0 0.0
        %2137 = vmatpush1.msra.mxu0 0.0
        %2138 = vmatprep.subr.mxu0 0.0
        %2139 = vmatpush1.msra.mxu0 0.0
        %2140 = vmatprep.subr.mxu0 0.0
        %2141 = vmatpush1.msra.mxu0 0.0
        %2142 = vmatprep.subr.mxu0 0.0
        %2143 = vmatpush1.msra.mxu0 %v2104
        %2144 = vmatprep.subr.mxu0 0.0
        %2145 = vmatpush1.msra.mxu0 %v2103
        %2146 = vmatprep.subr.mxu0 0.0
        %2147 = vmatpush1.msra.mxu0 %v2102
        %2148 = vmatprep.subr.mxu0 0.0
        %2149 = vmatpush1.msra.mxu0 %v2101
        %2150 = vmatprep.subr.mxu0 0.0
        %2151 = vmatpush2.msra.mxu0 0.0
        %2152 = vmatprep.subr.mxu0 0.0
        %2153 = vmatpush2.msra.mxu0 0.0
        %2154 = vmatprep.subr.mxu0 0.0
        %2155 = vmatpush2.msra.mxu0 0.0
        %2156 = vmatprep.subr.mxu0 0.0
        %2157 = vmatpush2.msra.mxu0 0.0
        %2158 = vmatprep.subr.mxu0 0.0
        %2159 = vmatpush2.msra.mxu0 0.0
        %2160 = vmatprep.subr.mxu0 0.0
        %2161 = vmatpush2.msra.mxu0 0.0
        %2162 = vmatprep.subr.mxu0 0.0
        %2163 = vmatpush2.msra.mxu0 0.0
        %2164 = vmatprep.subr.mxu0 0.0
        %2165 = vmatpush2.msra.mxu0 0.0
        %2166 = vmatprep.subr.mxu0 0.0
        %2167 = vmatpush2.msra.mxu0 0.0
        %2168 = vmatprep.subr.mxu0 0.0
        %2169 = vmatpush2.msra.mxu0 0.0
        %2170 = vmatprep.subr.mxu0 0.0
        %2171 = vmatpush2.msra.mxu0 0.0
        %2172 = vmatprep.subr.mxu0 0.0
        %2173 = vmatpush2.msra.mxu0 0.0
        %2174 = vmatprep.subr.mxu0 0.0
        %2175 = vmatpush2.msra.mxu0 0.0
        %2176 = vmatprep.subr.mxu0 0.0
        %2177 = vmatpush2.msra.mxu0 0.0
        %2178 = vmatprep.subr.mxu0 0.0
        %2179 = vmatpush2.msra.mxu0 0.0
        %2180 = vmatprep.subr.mxu0 0.0
        %2181 = vmatpush2.msra.mxu0 0.0
        %2182 = vmatprep.mubr.f32.mxu0 0.0
        %2183 = vmatmul.mubr.f32.gmra.mxu0 %v2113
        %v2184 = vpop.f32.mrf.mxu0
        %v2185 = vadd.f32 %v2110, %v2184
        %v2186 = vpop.f32.mrf.mxu0
        %2187 = vmatprep.mubr.f32.mxu0 0.0
        %2188 = vmatmul.mubr.f32.gmra.mxu0 %v2116
        %v2189 = vpop.f32.mrf.mxu0
        %v2190 = vadd.f32 %v2110, %v2189
        %v2191 = vpop.f32.mrf.mxu0
        %2192 = vdwg.mxu0
        %v2193 = vld [vmem:[%s31] sm:$0xff]
        %v2194 = vld [vmem:[%s31 + $0x8] sm:$0xff]
        %v2195 = vld [vmem:[%s31 + $0x10] sm:$0xff]
        %v2196 = vld [vmem:[%s31 + $0x18] sm:$0xff]
        %v2197 = vld [vmem:[#allocation6] sm:$0x1]
        %v2199 = vlaneseq
        %v2200 = vshrl.u32 %v2199, 7
        %v2201 = vsub.s32 0, %v2200
        %v2202 = vrot.slane %v2197, %v2201
        %v2205 = vsel %vm1064, %v1046, 0
        %v2208 = vsel %vm1064, %v1047, 0
        %2210 = vmatprep.subr.mxu0 0.0
        %2211 = vmatpush1.msra.mxu0 0.0
        %2212 = vmatprep.subr.mxu0 0.0
        %2213 = vmatpush1.msra.mxu0 0.0
        %2214 = vmatprep.subr.mxu0 0.0
        %2215 = vmatpush1.msra.mxu0 0.0
        %2216 = vmatprep.subr.mxu0 0.0
        %2217 = vmatpush1.msra.mxu0 0.0
        %2218 = vmatprep.subr.mxu0 0.0
        %2219 = vmatpush1.msra.mxu0 0.0
        %2220 = vmatprep.subr.mxu0 0.0
        %2221 = vmatpush1.msra.mxu0 0.0
        %2222 = vmatprep.subr.mxu0 0.0
        %2223 = vmatpush1.msra.mxu0 0.0
        %2224 = vmatprep.subr.mxu0 0.0
        %2225 = vmatpush1.msra.mxu0 0.0
        %2226 = vmatprep.subr.mxu0 0.0
        %2227 = vmatpush1.msra.mxu0 0.0
        %2228 = vmatprep.subr.mxu0 0.0
        %2229 = vmatpush1.msra.mxu0 0.0
        %2230 = vmatprep.subr.mxu0 0.0
        %2231 = vmatpush1.msra.mxu0 0.0
        %2232 = vmatprep.subr.mxu0 0.0
        %2233 = vmatpush1.msra.mxu0 0.0
        %2234 = vmatprep.subr.mxu0 0.0
        %2235 = vmatpush1.msra.mxu0 %v2196
        %2236 = vmatprep.subr.mxu0 0.0
        %2237 = vmatpush1.msra.mxu0 %v2195
        %2238 = vmatprep.subr.mxu0 0.0
        %2239 = vmatpush1.msra.mxu0 %v2194
        %2240 = vmatprep.subr.mxu0 0.0
        %2241 = vmatpush1.msra.mxu0 %v2193
        %2242 = vmatprep.subr.mxu0 0.0
        %2243 = vmatpush2.msra.mxu0 0.0
        %2244 = vmatprep.subr.mxu0 0.0
        %2245 = vmatpush2.msra.mxu0 0.0
        %2246 = vmatprep.subr.mxu0 0.0
        %2247 = vmatpush2.msra.mxu0 0.0
        %2248 = vmatprep.subr.mxu0 0.0
        %2249 = vmatpush2.msra.mxu0 0.0
        %2250 = vmatprep.subr.mxu0 0.0
        %2251 = vmatpush2.msra.mxu0 0.0
        %2252 = vmatprep.subr.mxu0 0.0
        %2253 = vmatpush2.msra.mxu0 0.0
        %2254 = vmatprep.subr.mxu0 0.0
        %2255 = vmatpush2.msra.mxu0 0.0
        %2256 = vmatprep.subr.mxu0 0.0
        %2257 = vmatpush2.msra.mxu0 0.0
        %2258 = vmatprep.subr.mxu0 0.0
        %2259 = vmatpush2.msra.mxu0 0.0
        %2260 = vmatprep.subr.mxu0 0.0
        %2261 = vmatpush2.msra.mxu0 0.0
        %2262 = vmatprep.subr.mxu0 0.0
        %2263 = vmatpush2.msra.mxu0 0.0
        %2264 = vmatprep.subr.mxu0 0.0
        %2265 = vmatpush2.msra.mxu0 0.0
        %2266 = vmatprep.subr.mxu0 0.0
        %2267 = vmatpush2.msra.mxu0 0.0
        %2268 = vmatprep.subr.mxu0 0.0
        %2269 = vmatpush2.msra.mxu0 0.0
        %2270 = vmatprep.subr.mxu0 0.0
        %2271 = vmatpush2.msra.mxu0 0.0
        %2272 = vmatprep.subr.mxu0 0.0
        %2273 = vmatpush2.msra.mxu0 0.0
        %2274 = vmatprep.mubr.f32.mxu0 0.0
        %2275 = vmatmul.mubr.f32.gmra.mxu0 %v2205
        %v2276 = vpop.f32.mrf.mxu0
        %v2277 = vadd.f32 %v2202, %v2276
        %v2278 = vpop.f32.mrf.mxu0
        %2279 = vmatprep.mubr.f32.mxu0 0.0
        %2280 = vmatmul.mubr.f32.gmra.mxu0 %v2208
        %v2281 = vpop.f32.mrf.mxu0
        %v2282 = vadd.f32 %v2202, %v2281
        %v2283 = vpop.f32.mrf.mxu0
        %2284 = vdwg.mxu0
        %v2285 = vmul.f32 %v2096, 0.35355338
        %v2287 = vlaneseq
        %v2288 = vshrl.u32 %v2287, 7
        %v2289 = vsub.s32 0, %v2288
        %v2290 = vrot.slane %v1051, %v2289
        %v2293 = vsel %vm1226, %v2285, 0
        %v2296 = vsel %vm1226, %v2185, 0
        %v2299 = vsel %vm1226, %v2190, 0
        %2301 = vmatprep.subr.mxu0 0.0
        %2302 = vmatpush1.xpose.msra.mxu0 0.0
        %2303 = vmatprep.subr.mxu0 0.0
        %2304 = vmatpush1.xpose.msra.mxu0 0.0
        %2305 = vmatprep.subr.mxu0 0.0
        %2306 = vmatpush1.xpose.msra.mxu0 0.0
        %2307 = vmatprep.subr.mxu0 0.0
        %2308 = vmatpush1.xpose.msra.mxu0 0.0
        %2309 = vmatprep.subr.mxu0 0.0
        %2310 = vmatpush1.xpose.msra.mxu0 0.0
        %2311 = vmatprep.subr.mxu0 0.0
        %2312 = vmatpush1.xpose.msra.mxu0 0.0
        %2313 = vmatprep.subr.mxu0 0.0
        %2314 = vmatpush1.xpose.msra.mxu0 0.0
        %2315 = vmatprep.subr.mxu0 0.0
        %2316 = vmatpush1.xpose.msra.mxu0 0.0
        %2317 = vmatprep.subr.mxu0 0.0
        %2318 = vmatpush1.xpose.msra.mxu0 0.0
        %2319 = vmatprep.subr.mxu0 0.0
        %2320 = vmatpush1.xpose.msra.mxu0 0.0
        %2321 = vmatprep.subr.mxu0 0.0
        %2322 = vmatpush1.xpose.msra.mxu0 0.0
        %2323 = vmatprep.subr.mxu0 0.0
        %2324 = vmatpush1.xpose.msra.mxu0 0.0
        %2325 = vmatprep.subr.mxu0 0.0
        %2326 = vmatpush1.xpose.msra.mxu0 0.0
        %2327 = vmatprep.subr.mxu0 0.0
        %2328 = vmatpush1.xpose.msra.mxu0 0.0
        %2329 = vmatprep.subr.mxu0 0.0
        %2330 = vmatpush1.xpose.msra.mxu0 %v2299
        %2331 = vmatprep.subr.mxu0 0.0
        %2332 = vmatpush1.xpose.msra.mxu0 %v2296
        %2333 = vmatprep.subr.mxu0 0.0
        %2334 = vmatpush2.xpose.msra.mxu0 0.0
        %2335 = vmatprep.subr.mxu0 0.0
        %2336 = vmatpush2.xpose.msra.mxu0 0.0
        %2337 = vmatprep.subr.mxu0 0.0
        %2338 = vmatpush2.xpose.msra.mxu0 0.0
        %2339 = vmatprep.subr.mxu0 0.0
        %2340 = vmatpush2.xpose.msra.mxu0 0.0
        %2341 = vmatprep.subr.mxu0 0.0
        %2342 = vmatpush2.xpose.msra.mxu0 0.0
        %2343 = vmatprep.subr.mxu0 0.0
        %2344 = vmatpush2.xpose.msra.mxu0 0.0
        %2345 = vmatprep.subr.mxu0 0.0
        %2346 = vmatpush2.xpose.msra.mxu0 0.0
        %2347 = vmatprep.subr.mxu0 0.0
        %2348 = vmatpush2.xpose.msra.mxu0 0.0
        %2349 = vmatprep.subr.mxu0 0.0
        %2350 = vmatpush2.xpose.msra.mxu0 0.0
        %2351 = vmatprep.subr.mxu0 0.0
        %2352 = vmatpush2.xpose.msra.mxu0 0.0
        %2353 = vmatprep.subr.mxu0 0.0
        %2354 = vmatpush2.xpose.msra.mxu0 0.0
        %2355 = vmatprep.subr.mxu0 0.0
        %2356 = vmatpush2.xpose.msra.mxu0 0.0
        %2357 = vmatprep.subr.mxu0 0.0
        %2358 = vmatpush2.xpose.msra.mxu0 0.0
        %2359 = vmatprep.subr.mxu0 0.0
        %2360 = vmatpush2.xpose.msra.mxu0 0.0
        %2361 = vmatprep.subr.mxu0 0.0
        %2362 = vmatpush2.xpose.msra.mxu0 0.0
        %2363 = vmatprep.subr.mxu0 0.0
        %2364 = vmatpush2.xpose.msra.mxu0 0.0
        %2365 = vmatprep.mubr.f32.mxu0 0.0
        %2366 = vmatmul.mubr.f32.gmra.mxu0 %v2293
        %v2367 = vpop.f32.mrf.mxu0
        %v2368 = vadd.f32 %v2290, %v2367
        %v2369 = vpop.f32.mrf.mxu0
        %2370 = vdwg.mxu0
        %v2371 = vsel %vm1895, %v2368, -inf
        %2372 = vmax.xlane.f32.xlu0 %v2371
        %v2373 = vpop.xlane.xlu0 %2372
        %v2374 = vsub.f32 %v2368, %v2373
        %v2375 = vmul.f32 %v2374, 1.442695
        %v2376 = vpow.pop %v2375
        %v2377 = vsel %vm1895, %v2376, 0.0
        %2378 = vadd.xlane.f32.xlu0 %v2377
        %v2379 = vpop.xlane.xlu0 %2378
        %v2380 = vrcp.pop %v2379
        %v2381 = vmul.f32 %v2376, %v2380
        %v2383 = vsel %vm1895, %v2381, 0
        %2385 = vmatprep.subr.mxu0 0.0
        %2386 = vmatpush1.msra.mxu0 0.0
        %2387 = vmatprep.subr.mxu0 0.0
        %2388 = vmatpush1.msra.mxu0 0.0
        %2389 = vmatprep.subr.mxu0 0.0
        %2390 = vmatpush1.msra.mxu0 0.0
        %2391 = vmatprep.subr.mxu0 0.0
        %2392 = vmatpush1.msra.mxu0 0.0
        %2393 = vmatprep.subr.mxu0 0.0
        %2394 = vmatpush1.msra.mxu0 0.0
        %2395 = vmatprep.subr.mxu0 0.0
        %2396 = vmatpush1.msra.mxu0 0.0
        %2397 = vmatprep.subr.mxu0 0.0
        %2398 = vmatpush1.msra.mxu0 0.0
        %2399 = vmatprep.subr.mxu0 0.0
        %2400 = vmatpush1.msra.mxu0 0.0
        %2401 = vmatprep.subr.mxu0 0.0
        %2402 = vmatpush1.msra.mxu0 0.0
        %2403 = vmatprep.subr.mxu0 0.0
        %2404 = vmatpush1.msra.mxu0 0.0
        %2405 = vmatprep.subr.mxu0 0.0
        %2406 = vmatpush1.msra.mxu0 0.0
        %2407 = vmatprep.subr.mxu0 0.0
        %2408 = vmatpush1.msra.mxu0 0.0
        %2409 = vmatprep.subr.mxu0 0.0
        %2410 = vmatpush1.msra.mxu0 0.0
        %2411 = vmatprep.subr.mxu0 0.0
        %2412 = vmatpush1.msra.mxu0 0.0
        %2413 = vmatprep.subr.mxu0 0.0
        %2414 = vmatpush1.msra.mxu0 %v2282
        %2415 = vmatprep.subr.mxu0 0.0
        %2416 = vmatpush1.msra.mxu0 %v2277
        %2417 = vmatprep.subr.mxu0 0.0
        %2418 = vmatpush2.msra.mxu0 0.0
        %2419 = vmatprep.subr.mxu0 0.0
        %2420 = vmatpush2.msra.mxu0 0.0
        %2421 = vmatprep.subr.mxu0 0.0
        %2422 = vmatpush2.msra.mxu0 0.0
        %2423 = vmatprep.subr.mxu0 0.0
        %2424 = vmatpush2.msra.mxu0 0.0
        %2425 = vmatprep.subr.mxu0 0.0
        %2426 = vmatpush2.msra.mxu0 0.0
        %2427 = vmatprep.subr.mxu0 0.0
        %2428 = vmatpush2.msra.mxu0 0.0
        %2429 = vmatprep.subr.mxu0 0.0
        %2430 = vmatpush2.msra.mxu0 0.0
        %2431 = vmatprep.subr.mxu0 0.0
        %2432 = vmatpush2.msra.mxu0 0.0
        %2433 = vmatprep.subr.mxu0 0.0
        %2434 = vmatpush2.msra.mxu0 0.0
        %2435 = vmatprep.subr.mxu0 0.0
        %2436 = vmatpush2.msra.mxu0 0.0
        %2437 = vmatprep.subr.mxu0 0.0
        %2438 = vmatpush2.msra.mxu0 0.0
        %2439 = vmatprep.subr.mxu0 0.0
        %2440 = vmatpush2.msra.mxu0 0.0
        %2441 = vmatprep.subr.mxu0 0.0
        %2442 = vmatpush2.msra.mxu0 0.0
        %2443 = vmatprep.subr.mxu0 0.0
        %2444 = vmatpush2.msra.mxu0 0.0
        %2445 = vmatprep.subr.mxu0 0.0
        %2446 = vmatpush2.msra.mxu0 0.0
        %2447 = vmatprep.subr.mxu0 0.0
        %2448 = vmatpush2.msra.mxu0 0.0
        %2449 = vmatprep.mubr.f32.mxu0 0.0
        %2450 = vmatmul.mubr.f32.gmra.mxu0 %v2383
        %v2451 = vpop.f32.mrf.mxu0
        %v2452 = vadd.f32 0.0, %v2451
        %v2453 = vpop.f32.mrf.mxu0
        %2454 = vdwg.mxu0
        %2455 = vrot.lane.b32.xlu0 %v2285, 120
        %v2456 = vpop.permute.xlu0 %2455
        %2457 = vrot.lane.b32.xlu0 %v2185, 120
        %v2458 = vpop.permute.xlu0 %2457
        %2459 = vrot.lane.b32.xlu0 %v2190, 120
        %v2460 = vpop.permute.xlu0 %2459
        %v2461 = vsel %vm1226, %v2456, 0
        %v2463 = vsel %vm1226, %v2458, 0
        %v2465 = vsel %vm1226, %v2460, 0
        %2467 = vmatprep.subr.mxu0 0.0
        %2468 = vmatpush1.xpose.msra.mxu0 0.0
        %2469 = vmatprep.subr.mxu0 0.0
        %2470 = vmatpush1.xpose.msra.mxu0 0.0
        %2471 = vmatprep.subr.mxu0 0.0
        %2472 = vmatpush1.xpose.msra.mxu0 0.0
        %2473 = vmatprep.subr.mxu0 0.0
        %2474 = vmatpush1.xpose.msra.mxu0 0.0
        %2475 = vmatprep.subr.mxu0 0.0
        %2476 = vmatpush1.xpose.msra.mxu0 0.0
        %2477 = vmatprep.subr.mxu0 0.0
        %2478 = vmatpush1.xpose.msra.mxu0 0.0
        %2479 = vmatprep.subr.mxu0 0.0
        %2480 = vmatpush1.xpose.msra.mxu0 0.0
        %2481 = vmatprep.subr.mxu0 0.0
        %2482 = vmatpush1.xpose.msra.mxu0 0.0
        %2483 = vmatprep.subr.mxu0 0.0
        %2484 = vmatpush1.xpose.msra.mxu0 0.0
        %2485 = vmatprep.subr.mxu0 0.0
        %2486 = vmatpush1.xpose.msra.mxu0 0.0
        %2487 = vmatprep.subr.mxu0 0.0
        %2488 = vmatpush1.xpose.msra.mxu0 0.0
        %2489 = vmatprep.subr.mxu0 0.0
        %2490 = vmatpush1.xpose.msra.mxu0 0.0
        %2491 = vmatprep.subr.mxu0 0.0
        %2492 = vmatpush1.xpose.msra.mxu0 0.0
        %2493 = vmatprep.subr.mxu0 0.0
        %2494 = vmatpush1.xpose.msra.mxu0 0.0
        %2495 = vmatprep.subr.mxu0 0.0
        %2496 = vmatpush1.xpose.msra.mxu0 %v2465
        %2497 = vmatprep.subr.mxu0 0.0
        %2498 = vmatpush1.xpose.msra.mxu0 %v2463
        %2499 = vmatprep.subr.mxu0 0.0
        %2500 = vmatpush2.xpose.msra.mxu0 0.0
        %2501 = vmatprep.subr.mxu0 0.0
        %2502 = vmatpush2.xpose.msra.mxu0 0.0
        %2503 = vmatprep.subr.mxu0 0.0
        %2504 = vmatpush2.xpose.msra.mxu0 0.0
        %2505 = vmatprep.subr.mxu0 0.0
        %2506 = vmatpush2.xpose.msra.mxu0 0.0
        %2507 = vmatprep.subr.mxu0 0.0
        %2508 = vmatpush2.xpose.msra.mxu0 0.0
        %2509 = vmatprep.subr.mxu0 0.0
        %2510 = vmatpush2.xpose.msra.mxu0 0.0
        %2511 = vmatprep.subr.mxu0 0.0
        %2512 = vmatpush2.xpose.msra.mxu0 0.0
        %2513 = vmatprep.subr.mxu0 0.0
        %2514 = vmatpush2.xpose.msra.mxu0 0.0
        %2515 = vmatprep.subr.mxu0 0.0
        %2516 = vmatpush2.xpose.msra.mxu0 0.0
        %2517 = vmatprep.subr.mxu0 0.0
        %2518 = vmatpush2.xpose.msra.mxu0 0.0
        %2519 = vmatprep.subr.mxu0 0.0
        %2520 = vmatpush2.xpose.msra.mxu0 0.0
        %2521 = vmatprep.subr.mxu0 0.0
        %2522 = vmatpush2.xpose.msra.mxu0 0.0
        %2523 = vmatprep.subr.mxu0 0.0
        %2524 = vmatpush2.xpose.msra.mxu0 0.0
        %2525 = vmatprep.subr.mxu0 0.0
        %2526 = vmatpush2.xpose.msra.mxu0 0.0
        %2527 = vmatprep.subr.mxu0 0.0
        %2528 = vmatpush2.xpose.msra.mxu0 0.0
        %2529 = vmatprep.subr.mxu0 0.0
        %2530 = vmatpush2.xpose.msra.mxu0 0.0
        %2531 = vmatprep.mubr.f32.mxu0 0.0
        %2532 = vmatmul.mubr.f32.gmra.mxu0 %v2461
        %v2533 = vpop.f32.mrf.mxu0
        %v2534 = vadd.f32 %v2290, %v2533
        %v2535 = vpop.f32.mrf.mxu0
        %2536 = vdwg.mxu0
        %v2537 = vsel %vm1895, %v2534, -inf
        %2538 = vmax.xlane.f32.xlu0 %v2537
        %v2539 = vpop.xlane.xlu0 %2538
        %v2540 = vsub.f32 %v2534, %v2539
        %v2541 = vmul.f32 %v2540, 1.442695
        %v2542 = vpow.pop %v2541
        %v2543 = vsel %vm1895, %v2542, 0.0
        %2544 = vadd.xlane.f32.xlu0 %v2543
        %v2545 = vpop.xlane.xlu0 %2544
        %v2546 = vrcp.pop %v2545
        %v2547 = vmul.f32 %v2542, %v2546
        %2550 = vrot.lane.b32.xlu0 %v2277, 120
        %v2551 = vpop.permute.xlu0 %2550
        %2552 = vrot.lane.b32.xlu0 %v2282, 120
        %v2553 = vpop.permute.xlu0 %2552
        %v2557 = vsel %vm1895, %v2547, 0
        %2559 = vmatprep.subr.mxu0 0.0
        %2560 = vmatpush1.msra.mxu0 0.0
        %2561 = vmatprep.subr.mxu0 0.0
        %2562 = vmatpush1.msra.mxu0 0.0
        %2563 = vmatprep.subr.mxu0 0.0
        %2564 = vmatpush1.msra.mxu0 0.0
        %2565 = vmatprep.subr.mxu0 0.0
        %2566 = vmatpush1.msra.mxu0 0.0
        %2567 = vmatprep.subr.mxu0 0.0
        %2568 = vmatpush1.msra.mxu0 0.0
        %2569 = vmatprep.subr.mxu0 0.0
        %2570 = vmatpush1.msra.mxu0 0.0
        %2571 = vmatprep.subr.mxu0 0.0
        %2572 = vmatpush1.msra.mxu0 0.0
        %2573 = vmatprep.subr.mxu0 0.0
        %2574 = vmatpush1.msra.mxu0 0.0
        %2575 = vmatprep.subr.mxu0 0.0
        %2576 = vmatpush1.msra.mxu0 0.0
        %2577 = vmatprep.subr.mxu0 0.0
        %2578 = vmatpush1.msra.mxu0 0.0
        %2579 = vmatprep.subr.mxu0 0.0
        %2580 = vmatpush1.msra.mxu0 0.0
        %2581 = vmatprep.subr.mxu0 0.0
        %2582 = vmatpush1.msra.mxu0 0.0
        %2583 = vmatprep.subr.mxu0 0.0
        %2584 = vmatpush1.msra.mxu0 0.0
        %2585 = vmatprep.subr.mxu0 0.0
        %2586 = vmatpush1.msra.mxu0 0.0
        %2587 = vmatprep.subr.mxu0 0.0
        %2588 = vmatpush1.msra.mxu0 %v2553
        %2589 = vmatprep.subr.mxu0 0.0
        %2590 = vmatpush1.msra.mxu0 %v2551
        %2591 = vmatprep.subr.mxu0 0.0
        %2592 = vmatpush2.msra.mxu0 0.0
        %2593 = vmatprep.subr.mxu0 0.0
        %2594 = vmatpush2.msra.mxu0 0.0
        %2595 = vmatprep.subr.mxu0 0.0
        %2596 = vmatpush2.msra.mxu0 0.0
        %2597 = vmatprep.subr.mxu0 0.0
        %2598 = vmatpush2.msra.mxu0 0.0
        %2599 = vmatprep.subr.mxu0 0.0
        %2600 = vmatpush2.msra.mxu0 0.0
        %2601 = vmatprep.subr.mxu0 0.0
        %2602 = vmatpush2.msra.mxu0 0.0
        %2603 = vmatprep.subr.mxu0 0.0
        %2604 = vmatpush2.msra.mxu0 0.0
        %2605 = vmatprep.subr.mxu0 0.0
        %2606 = vmatpush2.msra.mxu0 0.0
        %2607 = vmatprep.subr.mxu0 0.0
        %2608 = vmatpush2.msra.mxu0 0.0
        %2609 = vmatprep.subr.mxu0 0.0
        %2610 = vmatpush2.msra.mxu0 0.0
        %2611 = vmatprep.subr.mxu0 0.0
        %2612 = vmatpush2.msra.mxu0 0.0
        %2613 = vmatprep.subr.mxu0 0.0
        %2614 = vmatpush2.msra.mxu0 0.0
        %2615 = vmatprep.subr.mxu0 0.0
        %2616 = vmatpush2.msra.mxu0 0.0
        %2617 = vmatprep.subr.mxu0 0.0
        %2618 = vmatpush2.msra.mxu0 0.0
        %2619 = vmatprep.subr.mxu0 0.0
        %2620 = vmatpush2.msra.mxu0 0.0
        %2621 = vmatprep.subr.mxu0 0.0
        %2622 = vmatpush2.msra.mxu0 0.0
        %2623 = vmatprep.mubr.f32.mxu0 0.0
        %2624 = vmatmul.mubr.f32.gmra.mxu0 %v2557
        %v2625 = vpop.f32.mrf.mxu0
        %v2626 = vadd.f32 0.0, %v2625
        %v2627 = vpop.f32.mrf.mxu0
        %2628 = vdwg.mxu0
        %2629 = vrot.lane.b32.xlu0 %v2285, 112
        %v2630 = vpop.permute.xlu0 %2629
        %2631 = vrot.lane.b32.xlu0 %v2185, 112
        %v2632 = vpop.permute.xlu0 %2631
        %2633 = vrot.lane.b32.xlu0 %v2190, 112
        %v2634 = vpop.permute.xlu0 %2633
        %v2635 = vsel %vm1226, %v2630, 0
        %v2637 = vsel %vm1226, %v2632, 0
        %v2639 = vsel %vm1226, %v2634, 0
        %2641 = vmatprep.subr.mxu0 0.0
        %2642 = vmatpush1.xpose.msra.mxu0 0.0
        %2643 = vmatprep.subr.mxu0 0.0
        %2644 = vmatpush1.xpose.msra.mxu0 0.0
        %2645 = vmatprep.subr.mxu0 0.0
        %2646 = vmatpush1.xpose.msra.mxu0 0.0
        %2647 = vmatprep.subr.mxu0 0.0
        %2648 = vmatpush1.xpose.msra.mxu0 0.0
        %2649 = vmatprep.subr.mxu0 0.0
        %2650 = vmatpush1.xpose.msra.mxu0 0.0
        %2651 = vmatprep.subr.mxu0 0.0
        %2652 = vmatpush1.xpose.msra.mxu0 0.0
        %2653 = vmatprep.subr.mxu0 0.0
        %2654 = vmatpush1.xpose.msra.mxu0 0.0
        %2655 = vmatprep.subr.mxu0 0.0
        %2656 = vmatpush1.xpose.msra.mxu0 0.0
        %2657 = vmatprep.subr.mxu0 0.0
        %2658 = vmatpush1.xpose.msra.mxu0 0.0
        %2659 = vmatprep.subr.mxu0 0.0
        %2660 = vmatpush1.xpose.msra.mxu0 0.0
        %2661 = vmatprep.subr.mxu0 0.0
        %2662 = vmatpush1.xpose.msra.mxu0 0.0
        %2663 = vmatprep.subr.mxu0 0.0
        %2664 = vmatpush1.xpose.msra.mxu0 0.0
        %2665 = vmatprep.subr.mxu0 0.0
        %2666 = vmatpush1.xpose.msra.mxu0 0.0
        %2667 = vmatprep.subr.mxu0 0.0
        %2668 = vmatpush1.xpose.msra.mxu0 0.0
        %2669 = vmatprep.subr.mxu0 0.0
        %2670 = vmatpush1.xpose.msra.mxu0 %v2639
        %2671 = vmatprep.subr.mxu0 0.0
        %2672 = vmatpush1.xpose.msra.mxu0 %v2637
        %2673 = vmatprep.subr.mxu0 0.0
        %2674 = vmatpush2.xpose.msra.mxu0 0.0
        %2675 = vmatprep.subr.mxu0 0.0
        %2676 = vmatpush2.xpose.msra.mxu0 0.0
        %2677 = vmatprep.subr.mxu0 0.0
        %2678 = vmatpush2.xpose.msra.mxu0 0.0
        %2679 = vmatprep.subr.mxu0 0.0
        %2680 = vmatpush2.xpose.msra.mxu0 0.0
        %2681 = vmatprep.subr.mxu0 0.0
        %2682 = vmatpush2.xpose.msra.mxu0 0.0
        %2683 = vmatprep.subr.mxu0 0.0
        %2684 = vmatpush2.xpose.msra.mxu0 0.0
        %2685 = vmatprep.subr.mxu0 0.0
        %2686 = vmatpush2.xpose.msra.mxu0 0.0
        %2687 = vmatprep.subr.mxu0 0.0
        %2688 = vmatpush2.xpose.msra.mxu0 0.0
        %2689 = vmatprep.subr.mxu0 0.0
        %2690 = vmatpush2.xpose.msra.mxu0 0.0
        %2691 = vmatprep.subr.mxu0 0.0
        %2692 = vmatpush2.xpose.msra.mxu0 0.0
        %2693 = vmatprep.subr.mxu0 0.0
        %2694 = vmatpush2.xpose.msra.mxu0 0.0
        %2695 = vmatprep.subr.mxu0 0.0
        %2696 = vmatpush2.xpose.msra.mxu0 0.0
        %2697 = vmatprep.subr.mxu0 0.0
        %2698 = vmatpush2.xpose.msra.mxu0 0.0
        %2699 = vmatprep.subr.mxu0 0.0
        %2700 = vmatpush2.xpose.msra.mxu0 0.0
        %2701 = vmatprep.subr.mxu0 0.0
        %2702 = vmatpush2.xpose.msra.mxu0 0.0
        %2703 = vmatprep.subr.mxu0 0.0
        %2704 = vmatpush2.xpose.msra.mxu0 0.0
        %2705 = vmatprep.mubr.f32.mxu0 0.0
        %2706 = vmatmul.mubr.f32.gmra.mxu0 %v2635
        %v2707 = vpop.f32.mrf.mxu0
        %v2708 = vadd.f32 %v2290, %v2707
        %v2709 = vpop.f32.mrf.mxu0
        %2710 = vdwg.mxu0
        %v2711 = vsel %vm1895, %v2708, -inf
        %2712 = vmax.xlane.f32.xlu0 %v2711
        %v2713 = vpop.xlane.xlu0 %2712
        %v2714 = vsub.f32 %v2708, %v2713
        %v2715 = vmul.f32 %v2714, 1.442695
        %v2716 = vpow.pop %v2715
        %v2717 = vsel %vm1895, %v2716, 0.0
        %2718 = vadd.xlane.f32.xlu0 %v2717
        %v2719 = vpop.xlane.xlu0 %2718
        %v2720 = vrcp.pop %v2719
        %v2721 = vmul.f32 %v2716, %v2720
        %2722 = vrot.lane.b32.xlu0 %v2277, 112
        %v2723 = vpop.permute.xlu0 %2722
        %2724 = vrot.lane.b32.xlu0 %v2282, 112
        %v2725 = vpop.permute.xlu0 %2724
        %v2729 = vsel %vm1895, %v2721, 0
        %2731 = vmatprep.subr.mxu0 0.0
        %2732 = vmatpush1.msra.mxu0 0.0
        %2733 = vmatprep.subr.mxu0 0.0
        %2734 = vmatpush1.msra.mxu0 0.0
        %2735 = vmatprep.subr.mxu0 0.0
        %2736 = vmatpush1.msra.mxu0 0.0
        %2737 = vmatprep.subr.mxu0 0.0
        %2738 = vmatpush1.msra.mxu0 0.0
        %2739 = vmatprep.subr.mxu0 0.0
        %2740 = vmatpush1.msra.mxu0 0.0
        %2741 = vmatprep.subr.mxu0 0.0
        %2742 = vmatpush1.msra.mxu0 0.0
        %2743 = vmatprep.subr.mxu0 0.0
        %2744 = vmatpush1.msra.mxu0 0.0
        %2745 = vmatprep.subr.mxu0 0.0
        %2746 = vmatpush1.msra.mxu0 0.0
        %2747 = vmatprep.subr.mxu0 0.0
        %2748 = vmatpush1.msra.mxu0 0.0
        %2749 = vmatprep.subr.mxu0 0.0
        %2750 = vmatpush1.msra.mxu0 0.0
        %2751 = vmatprep.subr.mxu0 0.0
        %2752 = vmatpush1.msra.mxu0 0.0
        %2753 = vmatprep.subr.mxu0 0.0
        %2754 = vmatpush1.msra.mxu0 0.0
        %2755 = vmatprep.subr.mxu0 0.0
        %2756 = vmatpush1.msra.mxu0 0.0
        %2757 = vmatprep.subr.mxu0 0.0
        %2758 = vmatpush1.msra.mxu0 0.0
        %2759 = vmatprep.subr.mxu0 0.0
        %2760 = vmatpush1.msra.mxu0 %v2725
        %2761 = vmatprep.subr.mxu0 0.0
        %2762 = vmatpush1.msra.mxu0 %v2723
        %2763 = vmatprep.subr.mxu0 0.0
        %2764 = vmatpush2.msra.mxu0 0.0
        %2765 = vmatprep.subr.mxu0 0.0
        %2766 = vmatpush2.msra.mxu0 0.0
        %2767 = vmatprep.subr.mxu0 0.0
        %2768 = vmatpush2.msra.mxu0 0.0
        %2769 = vmatprep.subr.mxu0 0.0
        %2770 = vmatpush2.msra.mxu0 0.0
        %2771 = vmatprep.subr.mxu0 0.0
        %2772 = vmatpush2.msra.mxu0 0.0
        %2773 = vmatprep.subr.mxu0 0.0
        %2774 = vmatpush2.msra.mxu0 0.0
        %2775 = vmatprep.subr.mxu0 0.0
        %2776 = vmatpush2.msra.mxu0 0.0
        %2777 = vmatprep.subr.mxu0 0.0
        %2778 = vmatpush2.msra.mxu0 0.0
        %2779 = vmatprep.subr.mxu0 0.0
        %2780 = vmatpush2.msra.mxu0 0.0
        %2781 = vmatprep.subr.mxu0 0.0
        %2782 = vmatpush2.msra.mxu0 0.0
        %2783 = vmatprep.subr.mxu0 0.0
        %2784 = vmatpush2.msra.mxu0 0.0
        %2785 = vmatprep.subr.mxu0 0.0
        %2786 = vmatpush2.msra.mxu0 0.0
        %2787 = vmatprep.subr.mxu0 0.0
        %2788 = vmatpush2.msra.mxu0 0.0
        %2789 = vmatprep.subr.mxu0 0.0
        %2790 = vmatpush2.msra.mxu0 0.0
        %2791 = vmatprep.subr.mxu0 0.0
        %2792 = vmatpush2.msra.mxu0 0.0
        %2793 = vmatprep.subr.mxu0 0.0
        %2794 = vmatpush2.msra.mxu0 0.0
        %2795 = vmatprep.mubr.f32.mxu0 0.0
        %2796 = vmatmul.mubr.f32.gmra.mxu0 %v2729
        %v2797 = vpop.f32.mrf.mxu0
        %v2798 = vadd.f32 0.0, %v2797
        %v2799 = vpop.f32.mrf.mxu0
        %2800 = vdwg.mxu0
        %2801 = vrot.lane.b32.xlu0 %v2285, 104
        %v2802 = vpop.permute.xlu0 %2801
        %2803 = vrot.lane.b32.xlu0 %v2185, 104
        %v2804 = vpop.permute.xlu0 %2803
        %2805 = vrot.lane.b32.xlu0 %v2190, 104
        %v2806 = vpop.permute.xlu0 %2805
        %v2807 = vsel %vm1226, %v2802, 0
        %v2809 = vsel %vm1226, %v2804, 0
        %v2811 = vsel %vm1226, %v2806, 0
        %2813 = vmatprep.subr.mxu0 0.0
        %2814 = vmatpush1.xpose.msra.mxu0 0.0
        %2815 = vmatprep.subr.mxu0 0.0
        %2816 = vmatpush1.xpose.msra.mxu0 0.0
        %2817 = vmatprep.subr.mxu0 0.0
        %2818 = vmatpush1.xpose.msra.mxu0 0.0
        %2819 = vmatprep.subr.mxu0 0.0
        %2820 = vmatpush1.xpose.msra.mxu0 0.0
        %2821 = vmatprep.subr.mxu0 0.0
        %2822 = vmatpush1.xpose.msra.mxu0 0.0
        %2823 = vmatprep.subr.mxu0 0.0
        %2824 = vmatpush1.xpose.msra.mxu0 0.0
        %2825 = vmatprep.subr.mxu0 0.0
        %2826 = vmatpush1.xpose.msra.mxu0 0.0
        %2827 = vmatprep.subr.mxu0 0.0
        %2828 = vmatpush1.xpose.msra.mxu0 0.0
        %2829 = vmatprep.subr.mxu0 0.0
        %2830 = vmatpush1.xpose.msra.mxu0 0.0
        %2831 = vmatprep.subr.mxu0 0.0
        %2832 = vmatpush1.xpose.msra.mxu0 0.0
        %2833 = vmatprep.subr.mxu0 0.0
        %2834 = vmatpush1.xpose.msra.mxu0 0.0
        %2835 = vmatprep.subr.mxu0 0.0
        %2836 = vmatpush1.xpose.msra.mxu0 0.0
        %2837 = vmatprep.subr.mxu0 0.0
        %2838 = vmatpush1.xpose.msra.mxu0 0.0
        %2839 = vmatprep.subr.mxu0 0.0
        %2840 = vmatpush1.xpose.msra.mxu0 0.0
        %2841 = vmatprep.subr.mxu0 0.0
        %2842 = vmatpush1.xpose.msra.mxu0 %v2811
        %2843 = vmatprep.subr.mxu0 0.0
        %2844 = vmatpush1.xpose.msra.mxu0 %v2809
        %2845 = vmatprep.subr.mxu0 0.0
        %2846 = vmatpush2.xpose.msra.mxu0 0.0
        %2847 = vmatprep.subr.mxu0 0.0
        %2848 = vmatpush2.xpose.msra.mxu0 0.0
        %2849 = vmatprep.subr.mxu0 0.0
        %2850 = vmatpush2.xpose.msra.mxu0 0.0
        %2851 = vmatprep.subr.mxu0 0.0
        %2852 = vmatpush2.xpose.msra.mxu0 0.0
        %2853 = vmatprep.subr.mxu0 0.0
        %2854 = vmatpush2.xpose.msra.mxu0 0.0
        %2855 = vmatprep.subr.mxu0 0.0
        %2856 = vmatpush2.xpose.msra.mxu0 0.0
        %2857 = vmatprep.subr.mxu0 0.0
        %2858 = vmatpush2.xpose.msra.mxu0 0.0
        %2859 = vmatprep.subr.mxu0 0.0
        %2860 = vmatpush2.xpose.msra.mxu0 0.0
        %2861 = vmatprep.subr.mxu0 0.0
        %2862 = vmatpush2.xpose.msra.mxu0 0.0
        %2863 = vmatprep.subr.mxu0 0.0
        %2864 = vmatpush2.xpose.msra.mxu0 0.0
        %2865 = vmatprep.subr.mxu0 0.0
        %2866 = vmatpush2.xpose.msra.mxu0 0.0
        %2867 = vmatprep.subr.mxu0 0.0
        %2868 = vmatpush2.xpose.msra.mxu0 0.0
        %2869 = vmatprep.subr.mxu0 0.0
        %2870 = vmatpush2.xpose.msra.mxu0 0.0
        %2871 = vmatprep.subr.mxu0 0.0
        %2872 = vmatpush2.xpose.msra.mxu0 0.0
        %2873 = vmatprep.subr.mxu0 0.0
        %2874 = vmatpush2.xpose.msra.mxu0 0.0
        %2875 = vmatprep.subr.mxu0 0.0
        %2876 = vmatpush2.xpose.msra.mxu0 0.0
        %2877 = vmatprep.mubr.f32.mxu0 0.0
        %2878 = vmatmul.mubr.f32.gmra.mxu0 %v2807
        %v2879 = vpop.f32.mrf.mxu0
        %v2880 = vadd.f32 %v2290, %v2879
        %v2881 = vpop.f32.mrf.mxu0
        %2882 = vdwg.mxu0
        %v2883 = vsel %vm1895, %v2880, -inf
        %2884 = vmax.xlane.f32.xlu0 %v2883
        %v2885 = vpop.xlane.xlu0 %2884
        %v2886 = vsub.f32 %v2880, %v2885
        %v2887 = vmul.f32 %v2886, 1.442695
        %v2888 = vpow.pop %v2887
        %v2889 = vsel %vm1895, %v2888, 0.0
        %2890 = vadd.xlane.f32.xlu0 %v2889
        %v2891 = vpop.xlane.xlu0 %2890
        %v2892 = vrcp.pop %v2891
        %v2893 = vmul.f32 %v2888, %v2892
        %2894 = vrot.lane.b32.xlu0 %v2277, 104
        %v2895 = vpop.permute.xlu0 %2894
        %2896 = vrot.lane.b32.xlu0 %v2282, 104
        %v2897 = vpop.permute.xlu0 %2896
        %v2901 = vsel %vm1895, %v2893, 0
        %2903 = vmatprep.subr.mxu0 0.0
        %2904 = vmatpush1.msra.mxu0 0.0
        %2905 = vmatprep.subr.mxu0 0.0
        %2906 = vmatpush1.msra.mxu0 0.0
        %2907 = vmatprep.subr.mxu0 0.0
        %2908 = vmatpush1.msra.mxu0 0.0
        %2909 = vmatprep.subr.mxu0 0.0
        %2910 = vmatpush1.msra.mxu0 0.0
        %2911 = vmatprep.subr.mxu0 0.0
        %2912 = vmatpush1.msra.mxu0 0.0
        %2913 = vmatprep.subr.mxu0 0.0
        %2914 = vmatpush1.msra.mxu0 0.0
        %2915 = vmatprep.subr.mxu0 0.0
        %2916 = vmatpush1.msra.mxu0 0.0
        %2917 = vmatprep.subr.mxu0 0.0
        %2918 = vmatpush1.msra.mxu0 0.0
        %2919 = vmatprep.subr.mxu0 0.0
        %2920 = vmatpush1.msra.mxu0 0.0
        %2921 = vmatprep.subr.mxu0 0.0
        %2922 = vmatpush1.msra.mxu0 0.0
        %2923 = vmatprep.subr.mxu0 0.0
        %2924 = vmatpush1.msra.mxu0 0.0
        %2925 = vmatprep.subr.mxu0 0.0
        %2926 = vmatpush1.msra.mxu0 0.0
        %2927 = vmatprep.subr.mxu0 0.0
        %2928 = vmatpush1.msra.mxu0 0.0
        %2929 = vmatprep.subr.mxu0 0.0
        %2930 = vmatpush1.msra.mxu0 0.0
        %2931 = vmatprep.subr.mxu0 0.0
        %2932 = vmatpush1.msra.mxu0 %v2897
        %2933 = vmatprep.subr.mxu0 0.0
        %2934 = vmatpush1.msra.mxu0 %v2895
        %2935 = vmatprep.subr.mxu0 0.0
        %2936 = vmatpush2.msra.mxu0 0.0
        %2937 = vmatprep.subr.mxu0 0.0
        %2938 = vmatpush2.msra.mxu0 0.0
        %2939 = vmatprep.subr.mxu0 0.0
        %2940 = vmatpush2.msra.mxu0 0.0
        %2941 = vmatprep.subr.mxu0 0.0
        %2942 = vmatpush2.msra.mxu0 0.0
        %2943 = vmatprep.subr.mxu0 0.0
        %2944 = vmatpush2.msra.mxu0 0.0
        %2945 = vmatprep.subr.mxu0 0.0
        %2946 = vmatpush2.msra.mxu0 0.0
        %2947 = vmatprep.subr.mxu0 0.0
        %2948 = vmatpush2.msra.mxu0 0.0
        %2949 = vmatprep.subr.mxu0 0.0
        %2950 = vmatpush2.msra.mxu0 0.0
        %2951 = vmatprep.subr.mxu0 0.0
        %2952 = vmatpush2.msra.mxu0 0.0
        %2953 = vmatprep.subr.mxu0 0.0
        %2954 = vmatpush2.msra.mxu0 0.0
        %2955 = vmatprep.subr.mxu0 0.0
        %2956 = vmatpush2.msra.mxu0 0.0
        %2957 = vmatprep.subr.mxu0 0.0
        %2958 = vmatpush2.msra.mxu0 0.0
        %2959 = vmatprep.subr.mxu0 0.0
        %2960 = vmatpush2.msra.mxu0 0.0
        %2961 = vmatprep.subr.mxu0 0.0
        %2962 = vmatpush2.msra.mxu0 0.0
        %2963 = vmatprep.subr.mxu0 0.0
        %2964 = vmatpush2.msra.mxu0 0.0
        %2965 = vmatprep.subr.mxu0 0.0
        %2966 = vmatpush2.msra.mxu0 0.0
        %2967 = vmatprep.mubr.f32.mxu0 0.0
        %2968 = vmatmul.mubr.f32.gmra.mxu0 %v2901
        %v2969 = vpop.f32.mrf.mxu0
        %v2970 = vadd.f32 0.0, %v2969
        %v2971 = vpop.f32.mrf.mxu0
        %2972 = vdwg.mxu0
        %2974 = vrot.lane.b32.xlu0 %v2626, 8
        %v2975 = vpop.permute.xlu0 %2974
        %2978 = vrot.lane.b32.xlu0 %v2798, 16
        %v2979 = vpop.permute.xlu0 %2978
        %2982 = vrot.lane.b32.xlu0 %v2970, 24
        %v2983 = vpop.permute.xlu0 %2982
        %v2985 = vsel %vm1226, %v2452, %v2975
        %v2986 = vsel %vm1895, %v2985, %v2979
        %v2987 = vsel %vm1897, %v2986, %v2983
        %v2988 = vld [vmem:[%s35] sm:$0xff]
        %v2989 = vld [vmem:[%s35 + $0x8] sm:$0xff]
        %v2990 = vld [vmem:[%s35 + $0x10] sm:$0xff]
        %v2991 = vld [vmem:[%s35 + $0x18] sm:$0xff]
        %v2992 = vld [vmem:[#allocation7] sm:$0x1]
        %v2994 = vlaneseq
        %v2995 = vshrl.u32 %v2994, 7
        %v2996 = vsub.s32 0, %v2995
        %v2997 = vrot.slane %v2992, %v2996
        %v3000 = vsel %vm1064, %v2987, 0
        %3002 = vmatprep.subr.mxu0 0.0
        %3003 = vmatpush1.msra.mxu0 0.0
        %3004 = vmatprep.subr.mxu0 0.0
        %3005 = vmatpush1.msra.mxu0 0.0
        %3006 = vmatprep.subr.mxu0 0.0
        %3007 = vmatpush1.msra.mxu0 0.0
        %3008 = vmatprep.subr.mxu0 0.0
        %3009 = vmatpush1.msra.mxu0 0.0
        %3010 = vmatprep.subr.mxu0 0.0
        %3011 = vmatpush1.msra.mxu0 0.0
        %3012 = vmatprep.subr.mxu0 0.0
        %3013 = vmatpush1.msra.mxu0 0.0
        %3014 = vmatprep.subr.mxu0 0.0
        %3015 = vmatpush1.msra.mxu0 0.0
        %3016 = vmatprep.subr.mxu0 0.0
        %3017 = vmatpush1.msra.mxu0 0.0
        %3018 = vmatprep.subr.mxu0 0.0
        %3019 = vmatpush1.msra.mxu0 0.0
        %3020 = vmatprep.subr.mxu0 0.0
        %3021 = vmatpush1.msra.mxu0 0.0
        %3022 = vmatprep.subr.mxu0 0.0
        %3023 = vmatpush1.msra.mxu0 0.0
        %3024 = vmatprep.subr.mxu0 0.0
        %3025 = vmatpush1.msra.mxu0 0.0
        %3026 = vmatprep.subr.mxu0 0.0
        %3027 = vmatpush1.msra.mxu0 %v2991
        %3028 = vmatprep.subr.mxu0 0.0
        %3029 = vmatpush1.msra.mxu0 %v2990
        %3030 = vmatprep.subr.mxu0 0.0
        %3031 = vmatpush1.msra.mxu0 %v2989
        %3032 = vmatprep.subr.mxu0 0.0
        %3033 = vmatpush1.msra.mxu0 %v2988
        %3034 = vmatprep.subr.mxu0 0.0
        %3035 = vmatpush2.msra.mxu0 0.0
        %3036 = vmatprep.subr.mxu0 0.0
        %3037 = vmatpush2.msra.mxu0 0.0
        %3038 = vmatprep.subr.mxu0 0.0
        %3039 = vmatpush2.msra.mxu0 0.0
        %3040 = vmatprep.subr.mxu0 0.0
        %3041 = vmatpush2.msra.mxu0 0.0
        %3042 = vmatprep.subr.mxu0 0.0
        %3043 = vmatpush2.msra.mxu0 0.0
        %3044 = vmatprep.subr.mxu0 0.0
        %3045 = vmatpush2.msra.mxu0 0.0
        %3046 = vmatprep.subr.mxu0 0.0
        %3047 = vmatpush2.msra.mxu0 0.0
        %3048 = vmatprep.subr.mxu0 0.0
        %3049 = vmatpush2.msra.mxu0 0.0
        %3050 = vmatprep.subr.mxu0 0.0
        %3051 = vmatpush2.msra.mxu0 0.0
        %3052 = vmatprep.subr.mxu0 0.0
        %3053 = vmatpush2.msra.mxu0 0.0
        %3054 = vmatprep.subr.mxu0 0.0
        %3055 = vmatpush2.msra.mxu0 0.0
        %3056 = vmatprep.subr.mxu0 0.0
        %3057 = vmatpush2.msra.mxu0 0.0
        %3058 = vmatprep.subr.mxu0 0.0
        %3059 = vmatpush2.msra.mxu0 0.0
        %3060 = vmatprep.subr.mxu0 0.0
        %3061 = vmatpush2.msra.mxu0 0.0
        %3062 = vmatprep.subr.mxu0 0.0
        %3063 = vmatpush2.msra.mxu0 0.0
        %3064 = vmatprep.subr.mxu0 0.0
        %3065 = vmatpush2.msra.mxu0 0.0
        %3066 = vmatprep.mubr.f32.mxu0 0.0
        %3067 = vmatmul.mubr.f32.gmra.mxu0 %v3000
        %v3068 = vpop.f32.mrf.mxu0
        %v3069 = vadd.f32 %v2997, %v3068
        %v3070 = vpop.f32.mrf.mxu0
        %3071 = vdwg.mxu0
        %v3072 = vld [vmem:[%s51] sm:$0x1]
        %v3073 = vld [vmem:[%s53] sm:$0x1]
        %v3074 = vadd.f32 %v2013, %v3069
        %v3075 = vsel %vm1064, %v3074, 0.0
        %3076 = vadd.xlane.f32.xlu0 %v3075
        %v3077 = vpop.xlane.xlu0 %3076
        %v3078 = vmul.f32 %v3077, %v1989
        %v3079 = vsub.f32 %v3074, %v3078
        %v3080 = vmul.f32 %v3079, %v3079
        %v3081 = vsel %vm1064, %v3080, 0.0
        %3082 = vadd.xlane.f32.xlu0 %v3081
        %v3083 = vpop.xlane.xlu0 %3082
        %v3084 = vmul.f32 %v3083, %v1989
        %v3085 = vadd.f32 %v3084, 1e-05
        %v3086 = vrsqrt.pop %v3085
        %v3087 = vmul.f32 %v3079, %v3086
        %v3089 = vlaneseq
        %v3090 = vshrl.u32 %v3089, 7
        %v3091 = vsub.s32 0, %v3090
        %v3092 = vrot.slane %v3072, %v3091
        %v3094 = vmul.f32 %v3087, %v3092
        %v3096 = vlaneseq
        %v3097 = vshrl.u32 %v3096, 7
        %v3098 = vsub.s32 0, %v3097
        %v3099 = vrot.slane %v3073, %v3098
        %v3101 = vadd.f32 %v3094, %v3099
        %v3102 = vld [vmem:[%s39] sm:$0xff]
        %v3103 = vld [vmem:[%s39 + $0x8] sm:$0xff]
        %v3104 = vld [vmem:[%s39 + $0x10] sm:$0xff]
        %v3105 = vld [vmem:[%s39 + $0x18] sm:$0xff]
        %v3106 = vld [vmem:[#allocation9] sm:$0x1]
        %v3108 = vlaneseq
        %v3109 = vshrl.u32 %v3108, 7
        %v3110 = vsub.s32 0, %v3109
        %v3111 = vrot.slane %v3106, %v3110
        %v3114 = vsel %vm1064, %v3101, 0
        %3116 = vmatprep.subr.mxu0 0.0
        %3117 = vmatpush1.msra.mxu0 0.0
        %3118 = vmatprep.subr.mxu0 0.0
        %3119 = vmatpush1.msra.mxu0 0.0
        %3120 = vmatprep.subr.mxu0 0.0
        %3121 = vmatpush1.msra.mxu0 0.0
        %3122 = vmatprep.subr.mxu0 0.0
        %3123 = vmatpush1.msra.mxu0 0.0
        %3124 = vmatprep.subr.mxu0 0.0
        %3125 = vmatpush1.msra.mxu0 0.0
        %3126 = vmatprep.subr.mxu0 0.0
        %3127 = vmatpush1.msra.mxu0 0.0
        %3128 = vmatprep.subr.mxu0 0.0
        %3129 = vmatpush1.msra.mxu0 0.0
        %3130 = vmatprep.subr.mxu0 0.0
        %3131 = vmatpush1.msra.mxu0 0.0
        %3132 = vmatprep.subr.mxu0 0.0
        %3133 = vmatpush1.msra.mxu0 0.0
        %3134 = vmatprep.subr.mxu0 0.0
        %3135 = vmatpush1.msra.mxu0 0.0
        %3136 = vmatprep.subr.mxu0 0.0
        %3137 = vmatpush1.msra.mxu0 0.0
        %3138 = vmatprep.subr.mxu0 0.0
        %3139 = vmatpush1.msra.mxu0 0.0
        %3140 = vmatprep.subr.mxu0 0.0
        %3141 = vmatpush1.msra.mxu0 %v3105
        %3142 = vmatprep.subr.mxu0 0.0
        %3143 = vmatpush1.msra.mxu0 %v3104
        %3144 = vmatprep.subr.mxu0 0.0
        %3145 = vmatpush1.msra.mxu0 %v3103
        %3146 = vmatprep.subr.mxu0 0.0
        %3147 = vmatpush1.msra.mxu0 %v3102
        %3148 = vmatprep.subr.mxu0 0.0
        %3149 = vmatpush2.msra.mxu0 0.0
        %3150 = vmatprep.subr.mxu0 0.0
        %3151 = vmatpush2.msra.mxu0 0.0
        %3152 = vmatprep.subr.mxu0 0.0
        %3153 = vmatpush2.msra.mxu0 0.0
        %3154 = vmatprep.subr.mxu0 0.0
        %3155 = vmatpush2.msra.mxu0 0.0
        %3156 = vmatprep.subr.mxu0 0.0
        %3157 = vmatpush2.msra.mxu0 0.0
        %3158 = vmatprep.subr.mxu0 0.0
        %3159 = vmatpush2.msra.mxu0 0.0
        %3160 = vmatprep.subr.mxu0 0.0
        %3161 = vmatpush2.msra.mxu0 0.0
        %3162 = vmatprep.subr.mxu0 0.0
        %3163 = vmatpush2.msra.mxu0 0.0
        %3164 = vmatprep.subr.mxu0 0.0
        %3165 = vmatpush2.msra.mxu0 0.0
        %3166 = vmatprep.subr.mxu0 0.0
        %3167 = vmatpush2.msra.mxu0 0.0
        %3168 = vmatprep.subr.mxu0 0.0
        %3169 = vmatpush2.msra.mxu0 0.0
        %3170 = vmatprep.subr.mxu0 0.0
        %3171 = vmatpush2.msra.mxu0 0.0
        %3172 = vmatprep.subr.mxu0 0.0
        %3173 = vmatpush2.msra.mxu0 0.0
        %3174 = vmatprep.subr.mxu0 0.0
        %3175 = vmatpush2.msra.mxu0 0.0
        %3176 = vmatprep.subr.mxu0 0.0
        %3177 = vmatpush2.msra.mxu0 0.0
        %3178 = vmatprep.subr.mxu0 0.0
        %3179 = vmatpush2.msra.mxu0 0.0
        %3180 = vmatprep.mubr.f32.mxu0 0.0
        %3181 = vmatmul.mubr.f32.gmra.mxu0 %v3114
        %v3182 = vpop.f32.mrf.mxu0
        %v3183 = vadd.f32 %v3111, %v3182
        %v3184 = vpop.f32.mrf.mxu0
        %3185 = vdwg.mxu0
        %v3186 = vmax.f32 %v3183, 0.0
        %v3187 = vld [vmem:[%s43] sm:$0xff]
        %v3188 = vld [vmem:[%s43 + $0x8] sm:$0xff]
        %v3189 = vld [vmem:[%s43 + $0x10] sm:$0xff]
        %v3190 = vld [vmem:[%s43 + $0x18] sm:$0xff]
        %v3191 = vld [vmem:[%s43 + $0x20] sm:$0xff]
        %v3192 = vld [vmem:[%s43 + $0x28] sm:$0xff]
        %v3193 = vld [vmem:[%s43 + $0x30] sm:$0xff]
        %v3194 = vld [vmem:[%s43 + $0x38] sm:$0xff]
        %v3195 = vld [vmem:[#allocation10] sm:$0x1]
        %v3197 = vlaneseq
        %v3198 = vshrl.u32 %v3197, 7
        %v3199 = vsub.s32 0, %v3198
        %v3200 = vrot.slane %v3195, %v3199
        %vm3202 = vcmask 523264
        %v3204 = vsel %vm3202, %v3186, 0
        %3206 = vmatprep.subr.mxu0 0.0
        %3207 = vmatpush1.msra.mxu0 0.0
        %3208 = vmatprep.subr.mxu0 0.0
        %3209 = vmatpush1.msra.mxu0 0.0
        %3210 = vmatprep.subr.mxu0 0.0
        %3211 = vmatpush1.msra.mxu0 0.0
        %3212 = vmatprep.subr.mxu0 0.0
        %3213 = vmatpush1.msra.mxu0 0.0
        %3214 = vmatprep.subr.mxu0 0.0
        %3215 = vmatpush1.msra.mxu0 0.0
        %3216 = vmatprep.subr.mxu0 0.0
        %3217 = vmatpush1.msra.mxu0 0.0
        %3218 = vmatprep.subr.mxu0 0.0
        %3219 = vmatpush1.msra.mxu0 0.0
        %3220 = vmatprep.subr.mxu0 0.0
        %3221 = vmatpush1.msra.mxu0 0.0
        %3222 = vmatprep.subr.mxu0 0.0
        %3223 = vmatpush1.msra.mxu0 %v3194
        %3224 = vmatprep.subr.mxu0 0.0
        %3225 = vmatpush1.msra.mxu0 %v3193
        %3226 = vmatprep.subr.mxu0 0.0
        %3227 = vmatpush1.msra.mxu0 %v3192
        %3228 = vmatprep.subr.mxu0 0.0
        %3229 = vmatpush1.msra.mxu0 %v3191
        %3230 = vmatprep.subr.mxu0 0.0
        %3231 = vmatpush1.msra.mxu0 %v3190
        %3232 = vmatprep.subr.mxu0 0.0
        %3233 = vmatpush1.msra.mxu0 %v3189
        %3234 = vmatprep.subr.mxu0 0.0
        %3235 = vmatpush1.msra.mxu0 %v3188
        %3236 = vmatprep.subr.mxu0 0.0
        %3237 = vmatpush1.msra.mxu0 %v3187
        %3238 = vmatprep.subr.mxu0 0.0
        %3239 = vmatpush2.msra.mxu0 0.0
        %3240 = vmatprep.subr.mxu0 0.0
        %3241 = vmatpush2.msra.mxu0 0.0
        %3242 = vmatprep.subr.mxu0 0.0
        %3243 = vmatpush2.msra.mxu0 0.0
        %3244 = vmatprep.subr.mxu0 0.0
        %3245 = vmatpush2.msra.mxu0 0.0
        %3246 = vmatprep.subr.mxu0 0.0
        %3247 = vmatpush2.msra.mxu0 0.0
        %3248 = vmatprep.subr.mxu0 0.0
        %3249 = vmatpush2.msra.mxu0 0.0
        %3250 = vmatprep.subr.mxu0 0.0
        %3251 = vmatpush2.msra.mxu0 0.0
        %3252 = vmatprep.subr.mxu0 0.0
        %3253 = vmatpush2.msra.mxu0 0.0
        %3254 = vmatprep.subr.mxu0 0.0
        %3255 = vmatpush2.msra.mxu0 0.0
        %3256 = vmatprep.subr.mxu0 0.0
        %3257 = vmatpush2.msra.mxu0 0.0
        %3258 = vmatprep.subr.mxu0 0.0
        %3259 = vmatpush2.msra.mxu0 0.0
        %3260 = vmatprep.subr.mxu0 0.0
        %3261 = vmatpush2.msra.mxu0 0.0
        %3262 = vmatprep.subr.mxu0 0.0
        %3263 = vmatpush2.msra.mxu0 0.0
        %3264 = vmatprep.subr.mxu0 0.0
        %3265 = vmatpush2.msra.mxu0 0.0
        %3266 = vmatprep.subr.mxu0 0.0
        %3267 = vmatpush2.msra.mxu0 0.0
        %3268 = vmatprep.subr.mxu0 0.0
        %3269 = vmatpush2.msra.mxu0 0.0
        %3270 = vmatprep.mubr.f32.mxu0 0.0
        %3271 = vmatmul.mubr.f32.gmra.mxu0 %v3204
        %v3272 = vpop.f32.mrf.mxu0
        %v3273 = vadd.f32 %v3200, %v3272
        %v3274 = vpop.f32.mrf.mxu0
        %3275 = vdwg.mxu0
        %v3276 = vld [vmem:[%s55] sm:$0x1]
        %v3277 = vld [vmem:[%s57] sm:$0x1]
        %v3278 = vadd.f32 %v3101, %v3273
        %v3279 = vsel %vm1064, %v3278, 0.0
        %3280 = vadd.xlane.f32.xlu0 %v3279
        %v3281 = vpop.xlane.xlu0 %3280
        %v3282 = vmul.f32 %v3281, %v1989
        %v3283 = vsub.f32 %v3278, %v3282
        %v3284 = vmul.f32 %v3283, %v3283
        %v3285 = vsel %vm1064, %v3284, 0.0
        %3286 = vadd.xlane.f32.xlu0 %v3285
        %v3287 = vpop.xlane.xlu0 %3286
        %v3288 = vmul.f32 %v3287, %v1989
        %v3289 = vadd.f32 %v3288, 1e-05
        %v3290 = vrsqrt.pop %v3289
        %v3291 = vmul.f32 %v3283, %v3290
        %v3293 = vlaneseq
        %v3294 = vshrl.u32 %v3293, 7
        %v3295 = vsub.s32 0, %v3294
        %v3296 = vrot.slane %v3276, %v3295
        %v3298 = vmul.f32 %v3291, %v3296
        %v3300 = vlaneseq
        %v3301 = vshrl.u32 %v3300, 7
        %v3302 = vsub.s32 0, %v3301
        %v3303 = vrot.slane %v3277, %v3302
        %v3305 = vadd.f32 %v3298, %v3303
        %3306 = vst.msk [vmem:[%s1044] sm:$0xff] %vm1064, %v3305
        %p3307 = scmp.lt.s32.totalorder %s74, 1
        %s3308 = scalar_select %p3307, %s74, 1
        %s3309 = smul.addr %s3308, 8
        %s3310 = scalar_lea.vmem %s59, %s3309
        // Predicated region
        $region161: #{transformer_decoder_layer.1} parent=135 // pred_check
          %p3311 = pneg %p726
        $region162: #{transformer_decoder_layer.1} parent=135 // pred_check_branch
          %3313 = sbr.rel (%p3311) target = $region164
        $region163: #{transformer_decoder_layer.1} parent=135 // pred_region
          _
        $region164: #{transformer_decoder_layer.1} parent=135 // pred_fallthru
          _
      $region136: #{transformer_decoder_layer.1} parent=5 // pred_fallthru
        _
      %p3314 = scmp.le.s32.totalorder 2, %s69
      // Predicated region
      $region165: #{transformer_decoder_layer.1} parent=5 // pred_check
        %p3315 = pneg %p3314
      $region166: #{transformer_decoder_layer.1} parent=5 // pred_check_branch
        %3317 = sbr.rel (%p3315) target = $region168
      $region167: #{transformer_decoder_layer.1} parent=5 // pred_region
        %s3318 = ssub.s32 %s69, 2
        // Predicated region
        $region169: #{transformer_decoder_layer.1} parent=167 // pred_check
          %p3319 = pneg %p732
        $region170: #{transformer_decoder_layer.1} parent=167 // pred_check_branch
          %3321 = sbr.rel (%p3319) target = $region172
        $region171: #{transformer_decoder_layer.1} parent=167 // pred_region
          %p3322 = scmp.lt.s32.totalorder %s75, 1
          %s3323 = scalar_select %p3322, %s75, 1
          %s3324 = smul.addr %s3323, 8
          %s3325 = scalar_lea.vmem %s59, %s3324
        $region172: #{transformer_decoder_layer.1} parent=167 // pred_fallthru
          _
      $region168: #{transformer_decoder_layer.1} parent=5 // pred_fallthru
        _
    $region6: #{transformer_decoder_layer.1} parent=1 // loop_footer
      %s73 = sadd.s32 1, %s69
    $region7: #{transformer_decoder_layer.1} parent=1 // loop_footer_branch
      %68 = sbr.rel target = $region3
    $region8: #{transformer_decoder_layer.1} parent=1 // loop_exit
      _
    %3326 = vsyncpa [#allocation3], 1
    %s3327 = scalar_lea.sflag [#allocation3], 1
    %3328 = vsyncpa %s3327, 1
    %3329 = vsyncpa [#allocation5], 1
    %3330 = vsyncpa [#allocation8], 1
    %3331 = vsyncpa [#allocation11], 1

</llo_original>
